<compile_context>
chip_gen: v5e
topology: v5e:2x2
jax: 0.10.0
libtpu: 0.0.40
codegen_flags: <defaults>
</compile_context>

<pallas_src>
import math

import jax
import jax.numpy as jnp
from jax.experimental import pallas as pl
from jax.experimental.pallas import tpu as pltpu

# ----------------------------- configuration -----------------------------
DEC_IN   = 1     # dec_in
C_OUT    = 2     # c_out
D_MODEL  = 32    # d_model (scaled down from 512)
N_HEADS  = 4     # n_heads
D_LAYERS = 2     # d_layers
D_FF     = 32    # d_ff
FACTOR   = 5
B        = 2
L_DEC    = 8     # decoder length (small enough that ProbAttention == causal attention)
S_ENC    = 16    # encoder output length (cross-attention keys/values)
LN_EPS   = 1e-5

# Finite large-negative mask (robust even if a row were fully masked; here every causal
# row keeps at least its diagonal, so this is numerically identical to -inf masking).
NEG_MASK = -1e30


# ------------------------------ in-kernel math ----------------------------
def _erf(x):
    # Abramowitz & Stegun 7.1.26, |err| < 1.5e-7 (float32-accurate)
    a1, a2, a3, a4, a5 = 0.254829592, -0.284496736, 1.421413741, -1.453152027, 1.061405429
    p = 0.3275911
    sgn = jnp.where(x < 0.0, -1.0, 1.0)
    ax = jnp.abs(x)
    t = 1.0 / (1.0 + p * ax)
    poly = ((((a5 * t + a4) * t + a3) * t + a2) * t + a1) * t
    return sgn * (1.0 - poly * jnp.exp(-ax * ax))


def _gelu_exact(x):
    return 0.5 * x * (1.0 + _erf(x * 0.7071067811865476))


def _layernorm(z, g, b):
    mu = jnp.mean(z, axis=-1, keepdims=True)
    d = z - mu
    var = jnp.mean(d * d, axis=-1, keepdims=True)
    return d * jax.lax.rsqrt(var + LN_EPS) * g + b


def _softmax_lastdim(s):
    m = jnp.max(s, axis=-1, keepdims=True)
    p = jnp.exp(s - m)
    return p * pl.reciprocal(jnp.sum(p, axis=-1, keepdims=True), approx=True)


# ------------------------------ fused kernel ------------------------------
def _decoder_fused_kernel(*refs):
    # refs = (cols_ref, enc_ref, *weight_refs, o_ref); one grid step == one batch element.
    cols_ref, enc_ref = refs[0], refs[1]
    o_ref = refs[-1]
    it = iter(refs[2:-1])

    L = cols_ref.shape[1]
    S = enc_ref.shape[1]
    D = D_MODEL
    H = N_HEADS
    Dh = D // H
    scale = 1.0 / math.sqrt(Dh)

    cols = cols_ref[0]        # (L, 3*DEC_IN)  im2col of the circular conv1d(k=3)
    enc = enc_ref[0]          # (S, D)         encoder output for this batch element

    # --- GazeEmbedding: circular conv1d(k=3) as a matmul; sinusoidal PE + conv bias
    #     pre-folded host-side into a single (L, D) additive constant.
    emb_w = next(it)[...]
    pe_bias = next(it)[...]
    x = jnp.dot(cols, emb_w, preferred_element_type=jnp.float32) + pe_bias   # (L, D)

    # Causal additive mask, computed once and reused by both layers / all heads.
    row = jax.lax.broadcasted_iota(jnp.int32, (L, L), 0)
    col = jax.lax.broadcasted_iota(jnp.int32, (L, L), 1)
    causal_bias = jnp.where(col > row, jnp.float32(NEG_MASK), jnp.float32(0.0))

    def heads(q2d, k2d, v2d, causal):
        # Per-head attention on 2-D slabs; head split is a static lane slice.
        ctx = []
        for h in range(H):
            qh = q2d[:, h * Dh:(h + 1) * Dh]            # (L, Dh)
            kh = k2d[:, h * Dh:(h + 1) * Dh]            # (S, Dh)
            vh = v2d[:, h * Dh:(h + 1) * Dh]            # (S, Dh)
            s = jax.lax.dot_general(qh, kh, (((1,), (1,)), ((), ())),
                                    preferred_element_type=jnp.float32) * scale
            if causal:
                s = s + causal_bias
            a = _softmax_lastdim(s)
            ctx.append(jnp.dot(a, vh, preferred_element_type=jnp.float32))   # (L, Dh)
        return ctx

    def merge_mix(ctx):
        # Informer mix=True quirk: reshape of head-major (H, L, Dh) into (L, H*Dh),
        # i.e. out.transpose(2,1).contiguous().view(B, L, -1).  Element mapping:
        # mix[l, hp*Dh+d] = ctx[(l*H+hp)//L][(l*H+hp)%L, d].
        blocks = []
        for hp in range(H):
            rows = []
            for l in range(L):
                j = l * H + hp
                rows.append(ctx[j // L][j % L:j % L + 1, :])
            blocks.append(jnp.concatenate(rows, axis=0))         # (L, Dh)
        return jnp.concatenate(blocks, axis=-1)                  # (L, H*Dh)

    def merge_std(ctx):
        # mix=False: standard head concat along channels.
        return jnp.concatenate(ctx, axis=-1)                     # (L, H*Dh)

    for _ in range(D_LAYERS):
        # ---- self attention (ProbAttention == full causal attention here), mix=True
        s_wqkv, s_bqkv, s_wo, s_bo, n1_g, n1_b = [next(it)[...] for _ in range(6)]
        qkv = jnp.dot(x, s_wqkv, preferred_element_type=jnp.float32) + s_bqkv   # (L, 3D)
        ctx = heads(qkv[:, 0:D], qkv[:, D:2 * D], qkv[:, 2 * D:3 * D], causal=True)
        sa = jnp.dot(merge_mix(ctx), s_wo, preferred_element_type=jnp.float32) + s_bo
        x = _layernorm(x + sa, n1_g, n1_b)

        # ---- cross attention (FullAttention, non-causal), mix=False
        c_wq, c_bq, c_wkv, c_bkv, c_wo, c_bo, n2_g, n2_b = [next(it)[...] for _ in range(8)]
        q = jnp.dot(x, c_wq, preferred_element_type=jnp.float32) + c_bq          # (L, D)
        kv = jnp.dot(enc, c_wkv, preferred_element_type=jnp.float32) + c_bkv     # (S, 2D)
        ctx = heads(q, kv[:, 0:D], kv[:, D:2 * D], causal=False)
        ca = jnp.dot(merge_std(ctx), c_wo, preferred_element_type=jnp.float32) + c_bo
        x = _layernorm(x + ca, n2_g, n2_b)

        # ---- FFN: conv1d(k=1) -> exact GELU -> conv1d(k=1), channels-last == matmuls
        w1, b1, w2, b2, n3_g, n3_b = [next(it)[...] for _ in range(6)]
        h1 = _gelu_exact(jnp.dot(x, w1, preferred_element_type=jnp.float32) + b1)
        y = jnp.dot(h1, w2, preferred_element_type=jnp.float32) + b2
        x = _layernorm(x + y, n3_g, n3_b)

    # ---- final decoder LayerNorm + projection
    norm_g, norm_b, proj_w, proj_b = [next(it)[...] for _ in range(4)]
    x = _layernorm(x, norm_g, norm_b)
    out = jnp.dot(x, proj_w, preferred_element_type=jnp.float32) + proj_b        # (L, C_OUT)
    o_ref[0] = out


# ------------------------------ model glue ---------------------------------
def positional_embedding(L, d_model):
    position = jnp.arange(L, dtype=jnp.float32)[:, None]
    div_term = jnp.exp(jnp.arange(0, d_model, 2, dtype=jnp.float32)
                       * (-math.log(10000.0) / d_model))
    pe = jnp.zeros((L, d_model), jnp.float32)
    pe = pe.at[:, 0::2].set(jnp.sin(position * div_term))
    pe = pe.at[:, 1::2].set(jnp.cos(position * div_term))
    return pe


def _flatten_weights(params, pe_bias):
    flat = [params["emb_w"], pe_bias]
    for lp in params["layers"]:
        flat += [lp["s_wqkv"], lp["s_bqkv"], lp["s_wo"], lp["s_bo"], lp["n1_g"], lp["n1_b"],
                 lp["c_wq"], lp["c_bq"], lp["c_wkv"], lp["c_bkv"], lp["c_wo"], lp["c_bo"],
                 lp["n2_g"], lp["n2_b"],
                 lp["w1"], lp["b1"], lp["w2"], lp["b2"], lp["n3_g"], lp["n3_b"]]
    flat += [params["norm_g"], params["norm_b"], params["proj_w"], params["proj_b"]]
    return flat


def informer_decoder_forward(params, enc_out, x_dec, pred_length=0):
    Bsz, L, _ = x_dec.shape
    S = enc_out.shape[1]
    D = D_MODEL

    # im2col for the circular-padded Conv1d(k=3) token embedding (tiny layout prep).
    x_prev = jnp.roll(x_dec, 1, axis=1)
    x_next = jnp.roll(x_dec, -1, axis=1)
    cols = jnp.stack([x_prev, x_dec, x_next], axis=-1).reshape(Bsz, L, DEC_IN * 3)

    # Sinusoidal PE + conv bias folded into one (L, D) constant (no tiled HBM input).
    pe_bias = positional_embedding(L, D) + params["emb_b"][None, :]

    weights = _flatten_weights(params, pe_bias)

    in_specs = [pl.BlockSpec((1, L, DEC_IN * 3), lambda b: (b, 0, 0)),
                pl.BlockSpec((1, S, D), lambda b: (b, 0, 0))]
    # Weights: full-array blocks with a constant index_map -> loaded once, kept in VMEM.
    in_specs += [pl.BlockSpec(w.shape, lambda b: (0, 0)) for w in weights]

    out = pl.pallas_call(
        _decoder_fused_kernel,
        out_shape=jax.ShapeDtypeStruct((Bsz, L, C_OUT), jnp.float32),
        grid=(Bsz,),
        in_specs=in_specs,
        out_specs=pl.BlockSpec((1, L, C_OUT), lambda b: (b, 0, 0)),
        compiler_params=pltpu.CompilerParams(
            dimension_semantics=("parallel",)),   # two TensorCores on v7x; loop elsewhere
    )(cols, enc_out, *weights)

    if pred_length:
        out = out[:, -pred_length:]
    return out


# ------------------------------ parameter init ------------------------------
def init_params(key):
    def dense(k, fan_in, fan_out, wscale=0.08):
        kw, kb = jax.random.split(k)
        w = jax.random.normal(kw, (fan_in, fan_out), jnp.float32) * wscale
        b = jax.random.normal(kb, (1, fan_out), jnp.float32) * 0.02
        return w, b

    keys = jax.random.split(key, 4 + D_LAYERS)
    params = {}

    # GazeEmbedding token conv: torch weight (D_MODEL, DEC_IN, 3) + bias
    kw, kb = jax.random.split(keys[0])
    conv_w = jax.random.normal(kw, (D_MODEL, DEC_IN, 3), jnp.float32) * 0.3
    params["emb_w"] = conv_w.reshape(D_MODEL, DEC_IN * 3).T          # (3*DEC_IN, D_MODEL)
    params["emb_b"] = jax.random.normal(kb, (D_MODEL,), jnp.float32) * 0.02

    # final decoder norm + projection
    params["norm_g"] = jnp.ones((1, D_MODEL), jnp.float32)
    params["norm_b"] = jnp.zeros((1, D_MODEL), jnp.float32)
    pw, pb = dense(keys[1], D_MODEL, C_OUT)
    params["proj_w"], params["proj_b"] = pw, pb

    layers = []
    for li in range(D_LAYERS):
        lk = jax.random.split(keys[4 + li], 12)
        wq, bq = dense(lk[0], D_MODEL, D_MODEL)
        wk, bk = dense(lk[1], D_MODEL, D_MODEL)
        wv, bv = dense(lk[2], D_MODEL, D_MODEL)
        wo, bo = dense(lk[3], D_MODEL, D_MODEL)
        cwq, cbq = dense(lk[4], D_MODEL, D_MODEL)
        cwk, cbk = dense(lk[5], D_MODEL, D_MODEL)
        cwv, cbv = dense(lk[6], D_MODEL, D_MODEL)
        cwo, cbo = dense(lk[7], D_MODEL, D_MODEL)
        w1, b1 = dense(lk[8], D_MODEL, D_FF)        # conv1 (k=1)
        w2, b2 = dense(lk[9], D_FF, D_MODEL)        # conv2 (k=1)
        ones = jnp.ones((1, D_MODEL), jnp.float32)
        zeros = jnp.zeros((1, D_MODEL), jnp.float32)
        layers.append({
            # fused QKV projection for self-attention
            "s_wqkv": jnp.concatenate([wq, wk, wv], axis=1),
            "s_bqkv": jnp.concatenate([bq, bk, bv], axis=1),
            "s_wo": wo, "s_bo": bo,
            "n1_g": ones, "n1_b": zeros,
            # cross attention: Q from decoder stream, fused K/V from encoder output
            "c_wq": cwq, "c_bq": cbq,
            "c_wkv": jnp.concatenate([cwk, cwv], axis=1),
            "c_bkv": jnp.concatenate([cbk, cbv], axis=1),
            "c_wo": cwo, "c_bo": cbo,
            "n2_g": ones, "n2_b": zeros,
            "w1": w1, "b1": b1, "w2": w2, "b2": b2,
            "n3_g": ones, "n3_b": zeros,
        })
    params["layers"] = layers
    return params


# ------------------------------------ main -----------------------------------
if __name__ == "__main__":
    root = jax.random.PRNGKey(0)
    k_p, k_enc, k_dec = jax.random.split(root, 3)

    params = init_params(k_p)
    enc_out = jax.random.normal(k_enc, (B, S_ENC, D_MODEL), jnp.float32)
    x_dec = jax.random.normal(k_dec, (B, L_DEC, DEC_IN), jnp.float32)

    fwd = jax.jit(informer_decoder_forward)
    out = jax.block_until_ready(fwd(params, enc_out, x_dec))
    assert out.shape == (B, L_DEC, C_OUT), out.shape
    assert bool(jnp.all(jnp.isfinite(out)))
    print("KERNEL_OK")
</pallas_src>

<mosaic_0001>
module attributes {stable_mosaic.version = 11 : i64} {
  func.func @_decoder_fused_kernel(%arg0: i32, %arg1: memref<1x8x3xf32, #tpu.memory_space<vmem>>, %arg2: memref<1x16x32xf32, #tpu.memory_space<vmem>>, %arg3: memref<3x32xf32, #tpu.memory_space<vmem>>, %arg4: memref<8x32xf32, #tpu.memory_space<vmem>>, %arg5: memref<32x96xf32, #tpu.memory_space<vmem>>, %arg6: memref<1x96xf32, #tpu.memory_space<vmem>>, %arg7: memref<32x32xf32, #tpu.memory_space<vmem>>, %arg8: memref<1x32xf32, #tpu.memory_space<vmem>>, %arg9: memref<1x32xf32, #tpu.memory_space<vmem>>, %arg10: memref<1x32xf32, #tpu.memory_space<vmem>>, %arg11: memref<32x32xf32, #tpu.memory_space<vmem>>, %arg12: memref<1x32xf32, #tpu.memory_space<vmem>>, %arg13: memref<32x64xf32, #tpu.memory_space<vmem>>, %arg14: memref<1x64xf32, #tpu.memory_space<vmem>>, %arg15: memref<32x32xf32, #tpu.memory_space<vmem>>, %arg16: memref<1x32xf32, #tpu.memory_space<vmem>>, %arg17: memref<1x32xf32, #tpu.memory_space<vmem>>, %arg18: memref<1x32xf32, #tpu.memory_space<vmem>>, %arg19: memref<32x32xf32, #tpu.memory_space<vmem>>, %arg20: memref<1x32xf32, #tpu.memory_space<vmem>>, %arg21: memref<32x32xf32, #tpu.memory_space<vmem>>, %arg22: memref<1x32xf32, #tpu.memory_space<vmem>>, %arg23: memref<1x32xf32, #tpu.memory_space<vmem>>, %arg24: memref<1x32xf32, #tpu.memory_space<vmem>>, %arg25: memref<32x96xf32, #tpu.memory_space<vmem>>, %arg26: memref<1x96xf32, #tpu.memory_space<vmem>>, %arg27: memref<32x32xf32, #tpu.memory_space<vmem>>, %arg28: memref<1x32xf32, #tpu.memory_space<vmem>>, %arg29: memref<1x32xf32, #tpu.memory_space<vmem>>, %arg30: memref<1x32xf32, #tpu.memory_space<vmem>>, %arg31: memref<32x32xf32, #tpu.memory_space<vmem>>, %arg32: memref<1x32xf32, #tpu.memory_space<vmem>>, %arg33: memref<32x64xf32, #tpu.memory_space<vmem>>, %arg34: memref<1x64xf32, #tpu.memory_space<vmem>>, %arg35: memref<32x32xf32, #tpu.memory_space<vmem>>, %arg36: memref<1x32xf32, #tpu.memory_space<vmem>>, %arg37: memref<1x32xf32, #tpu.memory_space<vmem>>, %arg38: memref<1x32xf32, #tpu.memory_space<vmem>>, %arg39: memref<32x32xf32, #tpu.memory_space<vmem>>, %arg40: memref<1x32xf32, #tpu.memory_space<vmem>>, %arg41: memref<32x32xf32, #tpu.memory_space<vmem>>, %arg42: memref<1x32xf32, #tpu.memory_space<vmem>>, %arg43: memref<1x32xf32, #tpu.memory_space<vmem>>, %arg44: memref<1x32xf32, #tpu.memory_space<vmem>>, %arg45: memref<1x32xf32, #tpu.memory_space<vmem>>, %arg46: memref<1x32xf32, #tpu.memory_space<vmem>>, %arg47: memref<32x2xf32, #tpu.memory_space<vmem>>, %arg48: memref<1x2xf32, #tpu.memory_space<vmem>>, %arg49: memref<1x8x2xf32, #tpu.memory_space<vmem>>) attributes {dimension_semantics = [#tpu.dimension_semantics<parallel>], iteration_bounds = array<i64: 2>, scalar_prefetch = 0 : i64, scratch_operands = 0 : i64, tpu.core_type = #tpu.core_type<tc>, window_params = [{transform_indices = @transform_0, window_bounds = array<i64: 1, 8, 3>}, {transform_indices = @transform_1, window_bounds = array<i64: 1, 16, 32>}, {pipeline_mode = #tpu.pipeline_mode<synchronous>, transform_indices = @transform_2, window_bounds = array<i64: 3, 32>}, {pipeline_mode = #tpu.pipeline_mode<synchronous>, transform_indices = @transform_3, window_bounds = array<i64: 8, 32>}, {pipeline_mode = #tpu.pipeline_mode<synchronous>, transform_indices = @transform_4, window_bounds = array<i64: 32, 96>}, {pipeline_mode = #tpu.pipeline_mode<synchronous>, transform_indices = @transform_5, window_bounds = array<i64: 1, 96>}, {pipeline_mode = #tpu.pipeline_mode<synchronous>, transform_indices = @transform_6, window_bounds = array<i64: 32, 32>}, {pipeline_mode = #tpu.pipeline_mode<synchronous>, transform_indices = @transform_7, window_bounds = array<i64: 1, 32>}, {pipeline_mode = #tpu.pipeline_mode<synchronous>, transform_indices = @transform_8, window_bounds = array<i64: 1, 32>}, {pipeline_mode = #tpu.pipeline_mode<synchronous>, transform_indices = @transform_9, window_bounds = array<i64: 1, 32>}, {pipeline_mode = #tpu.pipeline_mode<synchronous>, transform_indices = @transform_10, window_bounds = array<i64: 32, 32>}, {pipeline_mode = #tpu.pipeline_mode<synchronous>, transform_indices = @transform_11, window_bounds = array<i64: 1, 32>}, {pipeline_mode = #tpu.pipeline_mode<synchronous>, transform_indices = @transform_12, window_bounds = array<i64: 32, 64>}, {pipeline_mode = #tpu.pipeline_mode<synchronous>, transform_indices = @transform_13, window_bounds = array<i64: 1, 64>}, {pipeline_mode = #tpu.pipeline_mode<synchronous>, transform_indices = @transform_14, window_bounds = array<i64: 32, 32>}, {pipeline_mode = #tpu.pipeline_mode<synchronous>, transform_indices = @transform_15, window_bounds = array<i64: 1, 32>}, {pipeline_mode = #tpu.pipeline_mode<synchronous>, transform_indices = @transform_16, window_bounds = array<i64: 1, 32>}, {pipeline_mode = #tpu.pipeline_mode<synchronous>, transform_indices = @transform_17, window_bounds = array<i64: 1, 32>}, {pipeline_mode = #tpu.pipeline_mode<synchronous>, transform_indices = @transform_18, window_bounds = array<i64: 32, 32>}, {pipeline_mode = #tpu.pipeline_mode<synchronous>, transform_indices = @transform_19, window_bounds = array<i64: 1, 32>}, {pipeline_mode = #tpu.pipeline_mode<synchronous>, transform_indices = @transform_20, window_bounds = array<i64: 32, 32>}, {pipeline_mode = #tpu.pipeline_mode<synchronous>, transform_indices = @transform_21, window_bounds = array<i64: 1, 32>}, {pipeline_mode = #tpu.pipeline_mode<synchronous>, transform_indices = @transform_22, window_bounds = array<i64: 1, 32>}, {pipeline_mode = #tpu.pipeline_mode<synchronous>, transform_indices = @transform_23, window_bounds = array<i64: 1, 32>}, {pipeline_mode = #tpu.pipeline_mode<synchronous>, transform_indices = @transform_24, window_bounds = array<i64: 32, 96>}, {pipeline_mode = #tpu.pipeline_mode<synchronous>, transform_indices = @transform_25, window_bounds = array<i64: 1, 96>}, {pipeline_mode = #tpu.pipeline_mode<synchronous>, transform_indices = @transform_26, window_bounds = array<i64: 32, 32>}, {pipeline_mode = #tpu.pipeline_mode<synchronous>, transform_indices = @transform_27, window_bounds = array<i64: 1, 32>}, {pipeline_mode = #tpu.pipeline_mode<synchronous>, transform_indices = @transform_28, window_bounds = array<i64: 1, 32>}, {pipeline_mode = #tpu.pipeline_mode<synchronous>, transform_indices = @transform_29, window_bounds = array<i64: 1, 32>}, {pipeline_mode = #tpu.pipeline_mode<synchronous>, transform_indices = @transform_30, window_bounds = array<i64: 32, 32>}, {pipeline_mode = #tpu.pipeline_mode<synchronous>, transform_indices = @transform_31, window_bounds = array<i64: 1, 32>}, {pipeline_mode = #tpu.pipeline_mode<synchronous>, transform_indices = @transform_32, window_bounds = array<i64: 32, 64>}, {pipeline_mode = #tpu.pipeline_mode<synchronous>, transform_indices = @transform_33, window_bounds = array<i64: 1, 64>}, {pipeline_mode = #tpu.pipeline_mode<synchronous>, transform_indices = @transform_34, window_bounds = array<i64: 32, 32>}, {pipeline_mode = #tpu.pipeline_mode<synchronous>, transform_indices = @transform_35, window_bounds = array<i64: 1, 32>}, {pipeline_mode = #tpu.pipeline_mode<synchronous>, transform_indices = @transform_36, window_bounds = array<i64: 1, 32>}, {pipeline_mode = #tpu.pipeline_mode<synchronous>, transform_indices = @transform_37, window_bounds = array<i64: 1, 32>}, {pipeline_mode = #tpu.pipeline_mode<synchronous>, transform_indices = @transform_38, window_bounds = array<i64: 32, 32>}, {pipeline_mode = #tpu.pipeline_mode<synchronous>, transform_indices = @transform_39, window_bounds = array<i64: 1, 32>}, {pipeline_mode = #tpu.pipeline_mode<synchronous>, transform_indices = @transform_40, window_bounds = array<i64: 32, 32>}, {pipeline_mode = #tpu.pipeline_mode<synchronous>, transform_indices = @transform_41, window_bounds = array<i64: 1, 32>}, {pipeline_mode = #tpu.pipeline_mode<synchronous>, transform_indices = @transform_42, window_bounds = array<i64: 1, 32>}, {pipeline_mode = #tpu.pipeline_mode<synchronous>, transform_indices = @transform_43, window_bounds = array<i64: 1, 32>}, {pipeline_mode = #tpu.pipeline_mode<synchronous>, transform_indices = @transform_44, window_bounds = array<i64: 1, 32>}, {pipeline_mode = #tpu.pipeline_mode<synchronous>, transform_indices = @transform_45, window_bounds = array<i64: 1, 32>}, {pipeline_mode = #tpu.pipeline_mode<synchronous>, transform_indices = @transform_46, window_bounds = array<i64: 32, 2>}, {pipeline_mode = #tpu.pipeline_mode<synchronous>, transform_indices = @transform_47, window_bounds = array<i64: 1, 2>}, {transform_indices = @transform_48, window_bounds = array<i64: 1, 8, 2>}]} {
    %c0 = arith.constant 0 : index
    %c0_0 = arith.constant 0 : index
    %c0_1 = arith.constant 0 : index
    %0 = vector.load %arg1[%c0, %c0_0, %c0_1] : memref<1x8x3xf32, #tpu.memory_space<vmem>>, vector<1x8x3xf32>
    %1 = vector.shape_cast %0 : vector<1x8x3xf32> to vector<8x3xf32>
    %c0_2 = arith.constant 0 : index
    %c0_3 = arith.constant 0 : index
    %c0_4 = arith.constant 0 : index
    %2 = vector.load %arg2[%c0_2, %c0_3, %c0_4] : memref<1x16x32xf32, #tpu.memory_space<vmem>>, vector<1x16x32xf32>
    %3 = vector.shape_cast %2 : vector<1x16x32xf32> to vector<16x32xf32>
    %c0_5 = arith.constant 0 : index
    %c0_6 = arith.constant 0 : index
    %4 = vector.load %arg3[%c0_5, %c0_6] : memref<3x32xf32, #tpu.memory_space<vmem>>, vector<3x32xf32>
    %c0_7 = arith.constant 0 : index
    %c0_8 = arith.constant 0 : index
    %5 = vector.load %arg4[%c0_7, %c0_8] : memref<8x32xf32, #tpu.memory_space<vmem>>, vector<8x32xf32>
    %cst = arith.constant dense<0.000000e+00> : vector<8x32xf32>
    %6 = tpu.matmul %1, %4, %cst {dimension_numbers = #tpu.dot_dimension_numbers<[1], [0], [0], [1], [0, 0, 1, 1], [], []>} : vector<8x3xf32>, vector<3x32xf32>, vector<8x32xf32> -> vector<8x32xf32>
    %7 = arith.addf %6, %5 : vector<8x32xf32>
    %8 = tpu.iota {dimensions = array<i32: 0>} : vector<8x8xi32>
    %9 = tpu.iota {dimensions = array<i32: 1>} : vector<8x8xi32>
    %10 = arith.cmpi sgt, %9, %8 : vector<8x8xi32>
    %cst_9 = arith.constant -1.000000e+30 : f32
    %cst_10 = arith.constant 0.000000e+00 : f32
    %11 = vector.broadcast %cst_9 : f32 to vector<8x8xf32>
    %12 = vector.broadcast %cst_10 : f32 to vector<8x8xf32>
    %13 = arith.select %10, %11, %12 : vector<8x8xi1>, vector<8x8xf32>
    %c0_11 = arith.constant 0 : index
    %c0_12 = arith.constant 0 : index
    %14 = vector.load %arg5[%c0_11, %c0_12] : memref<32x96xf32, #tpu.memory_space<vmem>>, vector<32x96xf32>
    %c0_13 = arith.constant 0 : index
    %c0_14 = arith.constant 0 : index
    %15 = vector.load %arg6[%c0_13, %c0_14] : memref<1x96xf32, #tpu.memory_space<vmem>>, vector<1x96xf32>
    %c0_15 = arith.constant 0 : index
    %c0_16 = arith.constant 0 : index
    %16 = vector.load %arg7[%c0_15, %c0_16] : memref<32x32xf32, #tpu.memory_space<vmem>>, vector<32x32xf32>
    %c0_17 = arith.constant 0 : index
    %c0_18 = arith.constant 0 : index
    %17 = vector.load %arg8[%c0_17, %c0_18] : memref<1x32xf32, #tpu.memory_space<vmem>>, vector<1x32xf32>
    %c0_19 = arith.constant 0 : index
    %c0_20 = arith.constant 0 : index
    %18 = vector.load %arg9[%c0_19, %c0_20] : memref<1x32xf32, #tpu.memory_space<vmem>>, vector<1x32xf32>
    %c0_21 = arith.constant 0 : index
    %c0_22 = arith.constant 0 : index
    %19 = vector.load %arg10[%c0_21, %c0_22] : memref<1x32xf32, #tpu.memory_space<vmem>>, vector<1x32xf32>
    %cst_23 = arith.constant dense<0.000000e+00> : vector<8x96xf32>
    %20 = tpu.matmul %7, %14, %cst_23 {dimension_numbers = #tpu.dot_dimension_numbers<[1], [0], [0], [1], [0, 0, 1, 1], [], []>} : vector<8x32xf32>, vector<32x96xf32>, vector<8x96xf32> -> vector<8x96xf32>
    %21 = vector.broadcast %15 : vector<1x96xf32> to vector<8x96xf32>
    %22 = arith.addf %20, %21 : vector<8x96xf32>
    %23 = vector.extract_strided_slice %22 {offsets = [0, 0], sizes = [8, 32], strides = [1, 1]} : vector<8x96xf32> to vector<8x32xf32>
    %24 = vector.extract_strided_slice %22 {offsets = [0, 32], sizes = [8, 32], strides = [1, 1]} : vector<8x96xf32> to vector<8x32xf32>
    %25 = vector.extract_strided_slice %22 {offsets = [0, 64], sizes = [8, 32], strides = [1, 1]} : vector<8x96xf32> to vector<8x32xf32>
    %26 = vector.extract_strided_slice %23 {offsets = [0, 0], sizes = [8, 8], strides = [1, 1]} : vector<8x32xf32> to vector<8x8xf32>
    %27 = vector.extract_strided_slice %24 {offsets = [0, 0], sizes = [8, 8], strides = [1, 1]} : vector<8x32xf32> to vector<8x8xf32>
    %28 = vector.extract_strided_slice %25 {offsets = [0, 0], sizes = [8, 8], strides = [1, 1]} : vector<8x32xf32> to vector<8x8xf32>
    %cst_24 = arith.constant dense<0.000000e+00> : vector<8x8xf32>
    %29 = tpu.matmul %26, %27, %cst_24 {dimension_numbers = #tpu.dot_dimension_numbers<[1], [1], [0], [0], [0, 0, 1, 0], [], []>} : vector<8x8xf32>, vector<8x8xf32>, vector<8x8xf32> -> vector<8x8xf32>
    %cst_25 = arith.constant 0.353553385 : f32
    %30 = vector.broadcast %cst_25 : f32 to vector<8x8xf32>
    %31 = arith.mulf %29, %30 : vector<8x8xf32>
    %32 = arith.addf %31, %13 : vector<8x8xf32>
    %cst_26 = arith.constant dense<0xFF800000> : vector<8xf32>
    %33 = vector.multi_reduction <maximumf>, %32, %cst_26 [1] : vector<8x8xf32> to vector<8xf32>
    %34 = vector.shape_cast %33 : vector<8xf32> to vector<8x1xf32>
    %35 = vector.broadcast %34 : vector<8x1xf32> to vector<8x8xf32>
    %36 = arith.subf %32, %35 : vector<8x8xf32>
    %37 = math.exp %36 : vector<8x8xf32>
    %cst_27 = arith.constant dense<0.000000e+00> : vector<8xf32>
    %38 = vector.multi_reduction <add>, %37, %cst_27 [1] : vector<8x8xf32> to vector<8xf32>
    %39 = vector.shape_cast %38 : vector<8xf32> to vector<8x1xf32>
    %40 = tpu.reciprocal %39 {approx = true} : vector<8x1xf32> -> vector<8x1xf32>
    %41 = vector.broadcast %40 : vector<8x1xf32> to vector<8x8xf32>
    %42 = arith.mulf %37, %41 : vector<8x8xf32>
    %cst_28 = arith.constant dense<0.000000e+00> : vector<8x8xf32>
    %43 = tpu.matmul %42, %28, %cst_28 {dimension_numbers = #tpu.dot_dimension_numbers<[1], [0], [0], [1], [0, 0, 1, 1], [], []>} : vector<8x8xf32>, vector<8x8xf32>, vector<8x8xf32> -> vector<8x8xf32>
    %44 = vector.extract_strided_slice %23 {offsets = [0, 8], sizes = [8, 8], strides = [1, 1]} : vector<8x32xf32> to vector<8x8xf32>
    %45 = vector.extract_strided_slice %24 {offsets = [0, 8], sizes = [8, 8], strides = [1, 1]} : vector<8x32xf32> to vector<8x8xf32>
    %46 = vector.extract_strided_slice %25 {offsets = [0, 8], sizes = [8, 8], strides = [1, 1]} : vector<8x32xf32> to vector<8x8xf32>
    %cst_29 = arith.constant dense<0.000000e+00> : vector<8x8xf32>
    %47 = tpu.matmul %44, %45, %cst_29 {dimension_numbers = #tpu.dot_dimension_numbers<[1], [1], [0], [0], [0, 0, 1, 0], [], []>} : vector<8x8xf32>, vector<8x8xf32>, vector<8x8xf32> -> vector<8x8xf32>
    %cst_30 = arith.constant 0.353553385 : f32
    %48 = vector.broadcast %cst_30 : f32 to vector<8x8xf32>
    %49 = arith.mulf %47, %48 : vector<8x8xf32>
    %50 = arith.addf %49, %13 : vector<8x8xf32>
    %cst_31 = arith.constant dense<0xFF800000> : vector<8xf32>
    %51 = vector.multi_reduction <maximumf>, %50, %cst_31 [1] : vector<8x8xf32> to vector<8xf32>
    %52 = vector.shape_cast %51 : vector<8xf32> to vector<8x1xf32>
    %53 = vector.broadcast %52 : vector<8x1xf32> to vector<8x8xf32>
    %54 = arith.subf %50, %53 : vector<8x8xf32>
    %55 = math.exp %54 : vector<8x8xf32>
    %cst_32 = arith.constant dense<0.000000e+00> : vector<8xf32>
    %56 = vector.multi_reduction <add>, %55, %cst_32 [1] : vector<8x8xf32> to vector<8xf32>
    %57 = vector.shape_cast %56 : vector<8xf32> to vector<8x1xf32>
    %58 = tpu.reciprocal %57 {approx = true} : vector<8x1xf32> -> vector<8x1xf32>
    %59 = vector.broadcast %58 : vector<8x1xf32> to vector<8x8xf32>
    %60 = arith.mulf %55, %59 : vector<8x8xf32>
    %cst_33 = arith.constant dense<0.000000e+00> : vector<8x8xf32>
    %61 = tpu.matmul %60, %46, %cst_33 {dimension_numbers = #tpu.dot_dimension_numbers<[1], [0], [0], [1], [0, 0, 1, 1], [], []>} : vector<8x8xf32>, vector<8x8xf32>, vector<8x8xf32> -> vector<8x8xf32>
    %62 = vector.extract_strided_slice %23 {offsets = [0, 16], sizes = [8, 8], strides = [1, 1]} : vector<8x32xf32> to vector<8x8xf32>
    %63 = vector.extract_strided_slice %24 {offsets = [0, 16], sizes = [8, 8], strides = [1, 1]} : vector<8x32xf32> to vector<8x8xf32>
    %64 = vector.extract_strided_slice %25 {offsets = [0, 16], sizes = [8, 8], strides = [1, 1]} : vector<8x32xf32> to vector<8x8xf32>
    %cst_34 = arith.constant dense<0.000000e+00> : vector<8x8xf32>
    %65 = tpu.matmul %62, %63, %cst_34 {dimension_numbers = #tpu.dot_dimension_numbers<[1], [1], [0], [0], [0, 0, 1, 0], [], []>} : vector<8x8xf32>, vector<8x8xf32>, vector<8x8xf32> -> vector<8x8xf32>
    %cst_35 = arith.constant 0.353553385 : f32
    %66 = vector.broadcast %cst_35 : f32 to vector<8x8xf32>
    %67 = arith.mulf %65, %66 : vector<8x8xf32>
    %68 = arith.addf %67, %13 : vector<8x8xf32>
    %cst_36 = arith.constant dense<0xFF800000> : vector<8xf32>
    %69 = vector.multi_reduction <maximumf>, %68, %cst_36 [1] : vector<8x8xf32> to vector<8xf32>
    %70 = vector.shape_cast %69 : vector<8xf32> to vector<8x1xf32>
    %71 = vector.broadcast %70 : vector<8x1xf32> to vector<8x8xf32>
    %72 = arith.subf %68, %71 : vector<8x8xf32>
    %73 = math.exp %72 : vector<8x8xf32>
    %cst_37 = arith.constant dense<0.000000e+00> : vector<8xf32>
    %74 = vector.multi_reduction <add>, %73, %cst_37 [1] : vector<8x8xf32> to vector<8xf32>
    %75 = vector.shape_cast %74 : vector<8xf32> to vector<8x1xf32>
    %76 = tpu.reciprocal %75 {approx = true} : vector<8x1xf32> -> vector<8x1xf32>
    %77 = vector.broadcast %76 : vector<8x1xf32> to vector<8x8xf32>
    %78 = arith.mulf %73, %77 : vector<8x8xf32>
    %cst_38 = arith.constant dense<0.000000e+00> : vector<8x8xf32>
    %79 = tpu.matmul %78, %64, %cst_38 {dimension_numbers = #tpu.dot_dimension_numbers<[1], [0], [0], [1], [0, 0, 1, 1], [], []>} : vector<8x8xf32>, vector<8x8xf32>, vector<8x8xf32> -> vector<8x8xf32>
    %80 = vector.extract_strided_slice %23 {offsets = [0, 24], sizes = [8, 8], strides = [1, 1]} : vector<8x32xf32> to vector<8x8xf32>
    %81 = vector.extract_strided_slice %24 {offsets = [0, 24], sizes = [8, 8], strides = [1, 1]} : vector<8x32xf32> to vector<8x8xf32>
    %82 = vector.extract_strided_slice %25 {offsets = [0, 24], sizes = [8, 8], strides = [1, 1]} : vector<8x32xf32> to vector<8x8xf32>
    %cst_39 = arith.constant dense<0.000000e+00> : vector<8x8xf32>
    %83 = tpu.matmul %80, %81, %cst_39 {dimension_numbers = #tpu.dot_dimension_numbers<[1], [1], [0], [0], [0, 0, 1, 0], [], []>} : vector<8x8xf32>, vector<8x8xf32>, vector<8x8xf32> -> vector<8x8xf32>
    %cst_40 = arith.constant 0.353553385 : f32
    %84 = vector.broadcast %cst_40 : f32 to vector<8x8xf32>
    %85 = arith.mulf %83, %84 : vector<8x8xf32>
    %86 = arith.addf %85, %13 : vector<8x8xf32>
    %cst_41 = arith.constant dense<0xFF800000> : vector<8xf32>
    %87 = vector.multi_reduction <maximumf>, %86, %cst_41 [1] : vector<8x8xf32> to vector<8xf32>
    %88 = vector.shape_cast %87 : vector<8xf32> to vector<8x1xf32>
    %89 = vector.broadcast %88 : vector<8x1xf32> to vector<8x8xf32>
    %90 = arith.subf %86, %89 : vector<8x8xf32>
    %91 = math.exp %90 : vector<8x8xf32>
    %cst_42 = arith.constant dense<0.000000e+00> : vector<8xf32>
    %92 = vector.multi_reduction <add>, %91, %cst_42 [1] : vector<8x8xf32> to vector<8xf32>
    %93 = vector.shape_cast %92 : vector<8xf32> to vector<8x1xf32>
    %94 = tpu.reciprocal %93 {approx = true} : vector<8x1xf32> -> vector<8x1xf32>
    %95 = vector.broadcast %94 : vector<8x1xf32> to vector<8x8xf32>
    %96 = arith.mulf %91, %95 : vector<8x8xf32>
    %cst_43 = arith.constant dense<0.000000e+00> : vector<8x8xf32>
    %97 = tpu.matmul %96, %82, %cst_43 {dimension_numbers = #tpu.dot_dimension_numbers<[1], [0], [0], [1], [0, 0, 1, 1], [], []>} : vector<8x8xf32>, vector<8x8xf32>, vector<8x8xf32> -> vector<8x8xf32>
    %98 = vector.extract_strided_slice %43 {offsets = [0, 0], sizes = [1, 8], strides = [1, 1]} : vector<8x8xf32> to vector<1x8xf32>
    %99 = vector.extract_strided_slice %43 {offsets = [4, 0], sizes = [1, 8], strides = [1, 1]} : vector<8x8xf32> to vector<1x8xf32>
    %100 = vector.extract_strided_slice %61 {offsets = [0, 0], sizes = [1, 8], strides = [1, 1]} : vector<8x8xf32> to vector<1x8xf32>
    %101 = vector.extract_strided_slice %61 {offsets = [4, 0], sizes = [1, 8], strides = [1, 1]} : vector<8x8xf32> to vector<1x8xf32>
    %102 = vector.extract_strided_slice %79 {offsets = [0, 0], sizes = [1, 8], strides = [1, 1]} : vector<8x8xf32> to vector<1x8xf32>
    %103 = vector.extract_strided_slice %79 {offsets = [4, 0], sizes = [1, 8], strides = [1, 1]} : vector<8x8xf32> to vector<1x8xf32>
    %104 = vector.extract_strided_slice %97 {offsets = [0, 0], sizes = [1, 8], strides = [1, 1]} : vector<8x8xf32> to vector<1x8xf32>
    %105 = vector.extract_strided_slice %97 {offsets = [4, 0], sizes = [1, 8], strides = [1, 1]} : vector<8x8xf32> to vector<1x8xf32>
    %106 = tpu.concatenate %98, %99, %100, %101, %102, %103, %104, %105 in 0 : vector<1x8xf32>, vector<1x8xf32>, vector<1x8xf32>, vector<1x8xf32>, vector<1x8xf32>, vector<1x8xf32>, vector<1x8xf32>, vector<1x8xf32> -> vector<8x8xf32>
    %107 = vector.extract_strided_slice %43 {offsets = [1, 0], sizes = [1, 8], strides = [1, 1]} : vector<8x8xf32> to vector<1x8xf32>
    %108 = vector.extract_strided_slice %43 {offsets = [5, 0], sizes = [1, 8], strides = [1, 1]} : vector<8x8xf32> to vector<1x8xf32>
    %109 = vector.extract_strided_slice %61 {offsets = [1, 0], sizes = [1, 8], strides = [1, 1]} : vector<8x8xf32> to vector<1x8xf32>
    %110 = vector.extract_strided_slice %61 {offsets = [5, 0], sizes = [1, 8], strides = [1, 1]} : vector<8x8xf32> to vector<1x8xf32>
    %111 = vector.extract_strided_slice %79 {offsets = [1, 0], sizes = [1, 8], strides = [1, 1]} : vector<8x8xf32> to vector<1x8xf32>
    %112 = vector.extract_strided_slice %79 {offsets = [5, 0], sizes = [1, 8], strides = [1, 1]} : vector<8x8xf32> to vector<1x8xf32>
    %113 = vector.extract_strided_slice %97 {offsets = [1, 0], sizes = [1, 8], strides = [1, 1]} : vector<8x8xf32> to vector<1x8xf32>
    %114 = vector.extract_strided_slice %97 {offsets = [5, 0], sizes = [1, 8], strides = [1, 1]} : vector<8x8xf32> to vector<1x8xf32>
    %115 = tpu.concatenate %107, %108, %109, %110, %111, %112, %113, %114 in 0 : vector<1x8xf32>, vector<1x8xf32>, vector<1x8xf32>, vector<1x8xf32>, vector<1x8xf32>, vector<1x8xf32>, vector<1x8xf32>, vector<1x8xf32> -> vector<8x8xf32>
    %116 = vector.extract_strided_slice %43 {offsets = [2, 0], sizes = [1, 8], strides = [1, 1]} : vector<8x8xf32> to vector<1x8xf32>
    %117 = vector.extract_strided_slice %43 {offsets = [6, 0], sizes = [1, 8], strides = [1, 1]} : vector<8x8xf32> to vector<1x8xf32>
    %118 = vector.extract_strided_slice %61 {offsets = [2, 0], sizes = [1, 8], strides = [1, 1]} : vector<8x8xf32> to vector<1x8xf32>
    %119 = vector.extract_strided_slice %61 {offsets = [6, 0], sizes = [1, 8], strides = [1, 1]} : vector<8x8xf32> to vector<1x8xf32>
    %120 = vector.extract_strided_slice %79 {offsets = [2, 0], sizes = [1, 8], strides = [1, 1]} : vector<8x8xf32> to vector<1x8xf32>
    %121 = vector.extract_strided_slice %79 {offsets = [6, 0], sizes = [1, 8], strides = [1, 1]} : vector<8x8xf32> to vector<1x8xf32>
    %122 = vector.extract_strided_slice %97 {offsets = [2, 0], sizes = [1, 8], strides = [1, 1]} : vector<8x8xf32> to vector<1x8xf32>
    %123 = vector.extract_strided_slice %97 {offsets = [6, 0], sizes = [1, 8], strides = [1, 1]} : vector<8x8xf32> to vector<1x8xf32>
    %124 = tpu.concatenate %116, %117, %118, %119, %120, %121, %122, %123 in 0 : vector<1x8xf32>, vector<1x8xf32>, vector<1x8xf32>, vector<1x8xf32>, vector<1x8xf32>, vector<1x8xf32>, vector<1x8xf32>, vector<1x8xf32> -> vector<8x8xf32>
    %125 = vector.extract_strided_slice %43 {offsets = [3, 0], sizes = [1, 8], strides = [1, 1]} : vector<8x8xf32> to vector<1x8xf32>
    %126 = vector.extract_strided_slice %43 {offsets = [7, 0], sizes = [1, 8], strides = [1, 1]} : vector<8x8xf32> to vector<1x8xf32>
    %127 = vector.extract_strided_slice %61 {offsets = [3, 0], sizes = [1, 8], strides = [1, 1]} : vector<8x8xf32> to vector<1x8xf32>
    %128 = vector.extract_strided_slice %61 {offsets = [7, 0], sizes = [1, 8], strides = [1, 1]} : vector<8x8xf32> to vector<1x8xf32>
    %129 = vector.extract_strided_slice %79 {offsets = [3, 0], sizes = [1, 8], strides = [1, 1]} : vector<8x8xf32> to vector<1x8xf32>
    %130 = vector.extract_strided_slice %79 {offsets = [7, 0], sizes = [1, 8], strides = [1, 1]} : vector<8x8xf32> to vector<1x8xf32>
    %131 = vector.extract_strided_slice %97 {offsets = [3, 0], sizes = [1, 8], strides = [1, 1]} : vector<8x8xf32> to vector<1x8xf32>
    %132 = vector.extract_strided_slice %97 {offsets = [7, 0], sizes = [1, 8], strides = [1, 1]} : vector<8x8xf32> to vector<1x8xf32>
    %133 = tpu.concatenate %125, %126, %127, %128, %129, %130, %131, %132 in 0 : vector<1x8xf32>, vector<1x8xf32>, vector<1x8xf32>, vector<1x8xf32>, vector<1x8xf32>, vector<1x8xf32>, vector<1x8xf32>, vector<1x8xf32> -> vector<8x8xf32>
    %134 = tpu.concatenate %106, %115, %124, %133 in 1 : vector<8x8xf32>, vector<8x8xf32>, vector<8x8xf32>, vector<8x8xf32> -> vector<8x32xf32>
    %cst_44 = arith.constant dense<0.000000e+00> : vector<8x32xf32>
    %135 = tpu.matmul %134, %16, %cst_44 {dimension_numbers = #tpu.dot_dimension_numbers<[1], [0], [0], [1], [0, 0, 1, 1], [], []>} : vector<8x32xf32>, vector<32x32xf32>, vector<8x32xf32> -> vector<8x32xf32>
    %136 = vector.broadcast %17 : vector<1x32xf32> to vector<8x32xf32>
    %137 = arith.addf %135, %136 : vector<8x32xf32>
    %138 = arith.addf %7, %137 : vector<8x32xf32>
    %cst_45 = arith.constant dense<0.000000e+00> : vector<8xf32>
    %139 = vector.multi_reduction <add>, %138, %cst_45 [1] : vector<8x32xf32> to vector<8xf32>
    %140 = vector.shape_cast %139 : vector<8xf32> to vector<8x1xf32>
    %cst_46 = arith.constant 3.200000e+01 : f32
    %141 = vector.broadcast %cst_46 : f32 to vector<8x1xf32>
    %142 = arith.divf %140, %141 : vector<8x1xf32>
    %143 = vector.broadcast %142 : vector<8x1xf32> to vector<8x32xf32>
    %144 = arith.subf %138, %143 : vector<8x32xf32>
    %145 = arith.mulf %144, %144 : vector<8x32xf32>
    %cst_47 = arith.constant dense<0.000000e+00> : vector<8xf32>
    %146 = vector.multi_reduction <add>, %145, %cst_47 [1] : vector<8x32xf32> to vector<8xf32>
    %147 = vector.shape_cast %146 : vector<8xf32> to vector<8x1xf32>
    %cst_48 = arith.constant 3.200000e+01 : f32
    %148 = vector.broadcast %cst_48 : f32 to vector<8x1xf32>
    %149 = arith.divf %147, %148 : vector<8x1xf32>
    %cst_49 = arith.constant 9.99999974E-6 : f32
    %150 = vector.broadcast %cst_49 : f32 to vector<8x1xf32>
    %151 = arith.addf %149, %150 : vector<8x1xf32>
    %152 = math.rsqrt %151 : vector<8x1xf32>
    %153 = vector.broadcast %152 : vector<8x1xf32> to vector<8x32xf32>
    %154 = arith.mulf %144, %153 : vector<8x32xf32>
    %155 = vector.broadcast %18 : vector<1x32xf32> to vector<8x32xf32>
    %156 = arith.mulf %154, %155 : vector<8x32xf32>
    %157 = vector.broadcast %19 : vector<1x32xf32> to vector<8x32xf32>
    %158 = arith.addf %156, %157 : vector<8x32xf32>
    %c0_50 = arith.constant 0 : index
    %c0_51 = arith.constant 0 : index
    %159 = vector.load %arg11[%c0_50, %c0_51] : memref<32x32xf32, #tpu.memory_space<vmem>>, vector<32x32xf32>
    %c0_52 = arith.constant 0 : index
    %c0_53 = arith.constant 0 : index
    %160 = vector.load %arg12[%c0_52, %c0_53] : memref<1x32xf32, #tpu.memory_space<vmem>>, vector<1x32xf32>
    %c0_54 = arith.constant 0 : index
    %c0_55 = arith.constant 0 : index
    %161 = vector.load %arg13[%c0_54, %c0_55] : memref<32x64xf32, #tpu.memory_space<vmem>>, vector<32x64xf32>
    %c0_56 = arith.constant 0 : index
    %c0_57 = arith.constant 0 : index
    %162 = vector.load %arg14[%c0_56, %c0_57] : memref<1x64xf32, #tpu.memory_space<vmem>>, vector<1x64xf32>
    %c0_58 = arith.constant 0 : index
    %c0_59 = arith.constant 0 : index
    %163 = vector.load %arg15[%c0_58, %c0_59] : memref<32x32xf32, #tpu.memory_space<vmem>>, vector<32x32xf32>
    %c0_60 = arith.constant 0 : index
    %c0_61 = arith.constant 0 : index
    %164 = vector.load %arg16[%c0_60, %c0_61] : memref<1x32xf32, #tpu.memory_space<vmem>>, vector<1x32xf32>
    %c0_62 = arith.constant 0 : index
    %c0_63 = arith.constant 0 : index
    %165 = vector.load %arg17[%c0_62, %c0_63] : memref<1x32xf32, #tpu.memory_space<vmem>>, vector<1x32xf32>
    %c0_64 = arith.constant 0 : index
    %c0_65 = arith.constant 0 : index
    %166 = vector.load %arg18[%c0_64, %c0_65] : memref<1x32xf32, #tpu.memory_space<vmem>>, vector<1x32xf32>
    %cst_66 = arith.constant dense<0.000000e+00> : vector<8x32xf32>
    %167 = tpu.matmul %158, %159, %cst_66 {dimension_numbers = #tpu.dot_dimension_numbers<[1], [0], [0], [1], [0, 0, 1, 1], [], []>} : vector<8x32xf32>, vector<32x32xf32>, vector<8x32xf32> -> vector<8x32xf32>
    %168 = vector.broadcast %160 : vector<1x32xf32> to vector<8x32xf32>
    %169 = arith.addf %167, %168 : vector<8x32xf32>
    %cst_67 = arith.constant dense<0.000000e+00> : vector<16x64xf32>
    %170 = tpu.matmul %3, %161, %cst_67 {dimension_numbers = #tpu.dot_dimension_numbers<[1], [0], [0], [1], [0, 0, 1, 1], [], []>} : vector<16x32xf32>, vector<32x64xf32>, vector<16x64xf32> -> vector<16x64xf32>
    %171 = vector.broadcast %162 : vector<1x64xf32> to vector<16x64xf32>
    %172 = arith.addf %170, %171 : vector<16x64xf32>
    %173 = vector.extract_strided_slice %172 {offsets = [0, 0], sizes = [16, 32], strides = [1, 1]} : vector<16x64xf32> to vector<16x32xf32>
    %174 = vector.extract_strided_slice %172 {offsets = [0, 32], sizes = [16, 32], strides = [1, 1]} : vector<16x64xf32> to vector<16x32xf32>
    %175 = vector.extract_strided_slice %169 {offsets = [0, 0], sizes = [8, 8], strides = [1, 1]} : vector<8x32xf32> to vector<8x8xf32>
    %176 = vector.extract_strided_slice %173 {offsets = [0, 0], sizes = [16, 8], strides = [1, 1]} : vector<16x32xf32> to vector<16x8xf32>
    %177 = vector.extract_strided_slice %174 {offsets = [0, 0], sizes = [16, 8], strides = [1, 1]} : vector<16x32xf32> to vector<16x8xf32>
    %cst_68 = arith.constant dense<0.000000e+00> : vector<8x16xf32>
    %178 = tpu.matmul %175, %176, %cst_68 {dimension_numbers = #tpu.dot_dimension_numbers<[1], [1], [0], [0], [0, 0, 1, 0], [], []>} : vector<8x8xf32>, vector<16x8xf32>, vector<8x16xf32> -> vector<8x16xf32>
    %cst_69 = arith.constant 0.353553385 : f32
    %179 = vector.broadcast %cst_69 : f32 to vector<8x16xf32>
    %180 = arith.mulf %178, %179 : vector<8x16xf32>
    %cst_70 = arith.constant dense<0xFF800000> : vector<8xf32>
    %181 = vector.multi_reduction <maximumf>, %180, %cst_70 [1] : vector<8x16xf32> to vector<8xf32>
    %182 = vector.shape_cast %181 : vector<8xf32> to vector<8x1xf32>
    %183 = vector.broadcast %182 : vector<8x1xf32> to vector<8x16xf32>
    %184 = arith.subf %180, %183 : vector<8x16xf32>
    %185 = math.exp %184 : vector<8x16xf32>
    %cst_71 = arith.constant dense<0.000000e+00> : vector<8xf32>
    %186 = vector.multi_reduction <add>, %185, %cst_71 [1] : vector<8x16xf32> to vector<8xf32>
    %187 = vector.shape_cast %186 : vector<8xf32> to vector<8x1xf32>
    %188 = tpu.reciprocal %187 {approx = true} : vector<8x1xf32> -> vector<8x1xf32>
    %189 = vector.broadcast %188 : vector<8x1xf32> to vector<8x16xf32>
    %190 = arith.mulf %185, %189 : vector<8x16xf32>
    %cst_72 = arith.constant dense<0.000000e+00> : vector<8x8xf32>
    %191 = tpu.matmul %190, %177, %cst_72 {dimension_numbers = #tpu.dot_dimension_numbers<[1], [0], [0], [1], [0, 0, 1, 1], [], []>} : vector<8x16xf32>, vector<16x8xf32>, vector<8x8xf32> -> vector<8x8xf32>
    %192 = vector.extract_strided_slice %169 {offsets = [0, 8], sizes = [8, 8], strides = [1, 1]} : vector<8x32xf32> to vector<8x8xf32>
    %193 = vector.extract_strided_slice %173 {offsets = [0, 8], sizes = [16, 8], strides = [1, 1]} : vector<16x32xf32> to vector<16x8xf32>
    %194 = vector.extract_strided_slice %174 {offsets = [0, 8], sizes = [16, 8], strides = [1, 1]} : vector<16x32xf32> to vector<16x8xf32>
    %cst_73 = arith.constant dense<0.000000e+00> : vector<8x16xf32>
    %195 = tpu.matmul %192, %193, %cst_73 {dimension_numbers = #tpu.dot_dimension_numbers<[1], [1], [0], [0], [0, 0, 1, 0], [], []>} : vector<8x8xf32>, vector<16x8xf32>, vector<8x16xf32> -> vector<8x16xf32>
    %cst_74 = arith.constant 0.353553385 : f32
    %196 = vector.broadcast %cst_74 : f32 to vector<8x16xf32>
    %197 = arith.mulf %195, %196 : vector<8x16xf32>
    %cst_75 = arith.constant dense<0xFF800000> : vector<8xf32>
    %198 = vector.multi_reduction <maximumf>, %197, %cst_75 [1] : vector<8x16xf32> to vector<8xf32>
    %199 = vector.shape_cast %198 : vector<8xf32> to vector<8x1xf32>
    %200 = vector.broadcast %199 : vector<8x1xf32> to vector<8x16xf32>
    %201 = arith.subf %197, %200 : vector<8x16xf32>
    %202 = math.exp %201 : vector<8x16xf32>
    %cst_76 = arith.constant dense<0.000000e+00> : vector<8xf32>
    %203 = vector.multi_reduction <add>, %202, %cst_76 [1] : vector<8x16xf32> to vector<8xf32>
    %204 = vector.shape_cast %203 : vector<8xf32> to vector<8x1xf32>
    %205 = tpu.reciprocal %204 {approx = true} : vector<8x1xf32> -> vector<8x1xf32>
    %206 = vector.broadcast %205 : vector<8x1xf32> to vector<8x16xf32>
    %207 = arith.mulf %202, %206 : vector<8x16xf32>
    %cst_77 = arith.constant dense<0.000000e+00> : vector<8x8xf32>
    %208 = tpu.matmul %207, %194, %cst_77 {dimension_numbers = #tpu.dot_dimension_numbers<[1], [0], [0], [1], [0, 0, 1, 1], [], []>} : vector<8x16xf32>, vector<16x8xf32>, vector<8x8xf32> -> vector<8x8xf32>
    %209 = vector.extract_strided_slice %169 {offsets = [0, 16], sizes = [8, 8], strides = [1, 1]} : vector<8x32xf32> to vector<8x8xf32>
    %210 = vector.extract_strided_slice %173 {offsets = [0, 16], sizes = [16, 8], strides = [1, 1]} : vector<16x32xf32> to vector<16x8xf32>
    %211 = vector.extract_strided_slice %174 {offsets = [0, 16], sizes = [16, 8], strides = [1, 1]} : vector<16x32xf32> to vector<16x8xf32>
    %cst_78 = arith.constant dense<0.000000e+00> : vector<8x16xf32>
    %212 = tpu.matmul %209, %210, %cst_78 {dimension_numbers = #tpu.dot_dimension_numbers<[1], [1], [0], [0], [0, 0, 1, 0], [], []>} : vector<8x8xf32>, vector<16x8xf32>, vector<8x16xf32> -> vector<8x16xf32>
    %cst_79 = arith.constant 0.353553385 : f32
    %213 = vector.broadcast %cst_79 : f32 to vector<8x16xf32>
    %214 = arith.mulf %212, %213 : vector<8x16xf32>
    %cst_80 = arith.constant dense<0xFF800000> : vector<8xf32>
    %215 = vector.multi_reduction <maximumf>, %214, %cst_80 [1] : vector<8x16xf32> to vector<8xf32>
    %216 = vector.shape_cast %215 : vector<8xf32> to vector<8x1xf32>
    %217 = vector.broadcast %216 : vector<8x1xf32> to vector<8x16xf32>
    %218 = arith.subf %214, %217 : vector<8x16xf32>
    %219 = math.exp %218 : vector<8x16xf32>
    %cst_81 = arith.constant dense<0.000000e+00> : vector<8xf32>
    %220 = vector.multi_reduction <add>, %219, %cst_81 [1] : vector<8x16xf32> to vector<8xf32>
    %221 = vector.shape_cast %220 : vector<8xf32> to vector<8x1xf32>
    %222 = tpu.reciprocal %221 {approx = true} : vector<8x1xf32> -> vector<8x1xf32>
    %223 = vector.broadcast %222 : vector<8x1xf32> to vector<8x16xf32>
    %224 = arith.mulf %219, %223 : vector<8x16xf32>
    %cst_82 = arith.constant dense<0.000000e+00> : vector<8x8xf32>
    %225 = tpu.matmul %224, %211, %cst_82 {dimension_numbers = #tpu.dot_dimension_numbers<[1], [0], [0], [1], [0, 0, 1, 1], [], []>} : vector<8x16xf32>, vector<16x8xf32>, vector<8x8xf32> -> vector<8x8xf32>
    %226 = vector.extract_strided_slice %169 {offsets = [0, 24], sizes = [8, 8], strides = [1, 1]} : vector<8x32xf32> to vector<8x8xf32>
    %227 = vector.extract_strided_slice %173 {offsets = [0, 24], sizes = [16, 8], strides = [1, 1]} : vector<16x32xf32> to vector<16x8xf32>
    %228 = vector.extract_strided_slice %174 {offsets = [0, 24], sizes = [16, 8], strides = [1, 1]} : vector<16x32xf32> to vector<16x8xf32>
    %cst_83 = arith.constant dense<0.000000e+00> : vector<8x16xf32>
    %229 = tpu.matmul %226, %227, %cst_83 {dimension_numbers = #tpu.dot_dimension_numbers<[1], [1], [0], [0], [0, 0, 1, 0], [], []>} : vector<8x8xf32>, vector<16x8xf32>, vector<8x16xf32> -> vector<8x16xf32>
    %cst_84 = arith.constant 0.353553385 : f32
    %230 = vector.broadcast %cst_84 : f32 to vector<8x16xf32>
    %231 = arith.mulf %229, %230 : vector<8x16xf32>
    %cst_85 = arith.constant dense<0xFF800000> : vector<8xf32>
    %232 = vector.multi_reduction <maximumf>, %231, %cst_85 [1] : vector<8x16xf32> to vector<8xf32>
    %233 = vector.shape_cast %232 : vector<8xf32> to vector<8x1xf32>
    %234 = vector.broadcast %233 : vector<8x1xf32> to vector<8x16xf32>
    %235 = arith.subf %231, %234 : vector<8x16xf32>
    %236 = math.exp %235 : vector<8x16xf32>
    %cst_86 = arith.constant dense<0.000000e+00> : vector<8xf32>
    %237 = vector.multi_reduction <add>, %236, %cst_86 [1] : vector<8x16xf32> to vector<8xf32>
    %238 = vector.shape_cast %237 : vector<8xf32> to vector<8x1xf32>
    %239 = tpu.reciprocal %238 {approx = true} : vector<8x1xf32> -> vector<8x1xf32>
    %240 = vector.broadcast %239 : vector<8x1xf32> to vector<8x16xf32>
    %241 = arith.mulf %236, %240 : vector<8x16xf32>
    %cst_87 = arith.constant dense<0.000000e+00> : vector<8x8xf32>
    %242 = tpu.matmul %241, %228, %cst_87 {dimension_numbers = #tpu.dot_dimension_numbers<[1], [0], [0], [1], [0, 0, 1, 1], [], []>} : vector<8x16xf32>, vector<16x8xf32>, vector<8x8xf32> -> vector<8x8xf32>
    %243 = tpu.concatenate %191, %208, %225, %242 in 1 : vector<8x8xf32>, vector<8x8xf32>, vector<8x8xf32>, vector<8x8xf32> -> vector<8x32xf32>
    %cst_88 = arith.constant dense<0.000000e+00> : vector<8x32xf32>
    %244 = tpu.matmul %243, %163, %cst_88 {dimension_numbers = #tpu.dot_dimension_numbers<[1], [0], [0], [1], [0, 0, 1, 1], [], []>} : vector<8x32xf32>, vector<32x32xf32>, vector<8x32xf32> -> vector<8x32xf32>
    %245 = vector.broadcast %164 : vector<1x32xf32> to vector<8x32xf32>
    %246 = arith.addf %244, %245 : vector<8x32xf32>
    %247 = arith.addf %158, %246 : vector<8x32xf32>
    %cst_89 = arith.constant dense<0.000000e+00> : vector<8xf32>
    %248 = vector.multi_reduction <add>, %247, %cst_89 [1] : vector<8x32xf32> to vector<8xf32>
    %249 = vector.shape_cast %248 : vector<8xf32> to vector<8x1xf32>
    %cst_90 = arith.constant 3.200000e+01 : f32
    %250 = vector.broadcast %cst_90 : f32 to vector<8x1xf32>
    %251 = arith.divf %249, %250 : vector<8x1xf32>
    %252 = vector.broadcast %251 : vector<8x1xf32> to vector<8x32xf32>
    %253 = arith.subf %247, %252 : vector<8x32xf32>
    %254 = arith.mulf %253, %253 : vector<8x32xf32>
    %cst_91 = arith.constant dense<0.000000e+00> : vector<8xf32>
    %255 = vector.multi_reduction <add>, %254, %cst_91 [1] : vector<8x32xf32> to vector<8xf32>
    %256 = vector.shape_cast %255 : vector<8xf32> to vector<8x1xf32>
    %cst_92 = arith.constant 3.200000e+01 : f32
    %257 = vector.broadcast %cst_92 : f32 to vector<8x1xf32>
    %258 = arith.divf %256, %257 : vector<8x1xf32>
    %cst_93 = arith.constant 9.99999974E-6 : f32
    %259 = vector.broadcast %cst_93 : f32 to vector<8x1xf32>
    %260 = arith.addf %258, %259 : vector<8x1xf32>
    %261 = math.rsqrt %260 : vector<8x1xf32>
    %262 = vector.broadcast %261 : vector<8x1xf32> to vector<8x32xf32>
    %263 = arith.mulf %253, %262 : vector<8x32xf32>
    %264 = vector.broadcast %165 : vector<1x32xf32> to vector<8x32xf32>
    %265 = arith.mulf %263, %264 : vector<8x32xf32>
    %266 = vector.broadcast %166 : vector<1x32xf32> to vector<8x32xf32>
    %267 = arith.addf %265, %266 : vector<8x32xf32>
    %c0_94 = arith.constant 0 : index
    %c0_95 = arith.constant 0 : index
    %268 = vector.load %arg19[%c0_94, %c0_95] : memref<32x32xf32, #tpu.memory_space<vmem>>, vector<32x32xf32>
    %c0_96 = arith.constant 0 : index
    %c0_97 = arith.constant 0 : index
    %269 = vector.load %arg20[%c0_96, %c0_97] : memref<1x32xf32, #tpu.memory_space<vmem>>, vector<1x32xf32>
    %c0_98 = arith.constant 0 : index
    %c0_99 = arith.constant 0 : index
    %270 = vector.load %arg21[%c0_98, %c0_99] : memref<32x32xf32, #tpu.memory_space<vmem>>, vector<32x32xf32>
    %c0_100 = arith.constant 0 : index
    %c0_101 = arith.constant 0 : index
    %271 = vector.load %arg22[%c0_100, %c0_101] : memref<1x32xf32, #tpu.memory_space<vmem>>, vector<1x32xf32>
    %c0_102 = arith.constant 0 : index
    %c0_103 = arith.constant 0 : index
    %272 = vector.load %arg23[%c0_102, %c0_103] : memref<1x32xf32, #tpu.memory_space<vmem>>, vector<1x32xf32>
    %c0_104 = arith.constant 0 : index
    %c0_105 = arith.constant 0 : index
    %273 = vector.load %arg24[%c0_104, %c0_105] : memref<1x32xf32, #tpu.memory_space<vmem>>, vector<1x32xf32>
    %cst_106 = arith.constant dense<0.000000e+00> : vector<8x32xf32>
    %274 = tpu.matmul %267, %268, %cst_106 {dimension_numbers = #tpu.dot_dimension_numbers<[1], [0], [0], [1], [0, 0, 1, 1], [], []>} : vector<8x32xf32>, vector<32x32xf32>, vector<8x32xf32> -> vector<8x32xf32>
    %275 = vector.broadcast %269 : vector<1x32xf32> to vector<8x32xf32>
    %276 = arith.addf %274, %275 : vector<8x32xf32>
    %cst_107 = arith.constant 5.000000e-01 : f32
    %277 = vector.broadcast %cst_107 : f32 to vector<8x32xf32>
    %278 = arith.mulf %277, %276 : vector<8x32xf32>
    %cst_108 = arith.constant 0.707106769 : f32
    %279 = vector.broadcast %cst_108 : f32 to vector<8x32xf32>
    %280 = arith.mulf %276, %279 : vector<8x32xf32>
    %cst_109 = arith.constant 0.000000e+00 : f32
    %281 = vector.broadcast %cst_109 : f32 to vector<8x32xf32>
    %282 = arith.cmpf olt, %280, %281 : vector<8x32xf32>
    %cst_110 = arith.constant -1.000000e+00 : f32
    %cst_111 = arith.constant 1.000000e+00 : f32
    %283 = vector.broadcast %cst_110 : f32 to vector<8x32xf32>
    %284 = vector.broadcast %cst_111 : f32 to vector<8x32xf32>
    %285 = arith.select %282, %283, %284 : vector<8x32xi1>, vector<8x32xf32>
    %286 = math.absf %280 : vector<8x32xf32>
    %cst_112 = arith.constant 0.327591091 : f32
    %287 = vector.broadcast %cst_112 : f32 to vector<8x32xf32>
    %288 = arith.mulf %287, %286 : vector<8x32xf32>
    %cst_113 = arith.constant 1.000000e+00 : f32
    %289 = vector.broadcast %cst_113 : f32 to vector<8x32xf32>
    %290 = arith.addf %289, %288 : vector<8x32xf32>
    %cst_114 = arith.constant 1.000000e+00 : f32
    %291 = vector.broadcast %cst_114 : f32 to vector<8x32xf32>
    %292 = arith.divf %291, %290 : vector<8x32xf32>
    %cst_115 = arith.constant 1.06140542 : f32
    %293 = vector.broadcast %cst_115 : f32 to vector<8x32xf32>
    %294 = arith.mulf %293, %292 : vector<8x32xf32>
    %cst_116 = arith.constant -1.45315206 : f32
    %295 = vector.broadcast %cst_116 : f32 to vector<8x32xf32>
    %296 = arith.addf %294, %295 : vector<8x32xf32>
    %297 = arith.mulf %296, %292 : vector<8x32xf32>
    %cst_117 = arith.constant 1.42141378 : f32
    %298 = vector.broadcast %cst_117 : f32 to vector<8x32xf32>
    %299 = arith.addf %297, %298 : vector<8x32xf32>
    %300 = arith.mulf %299, %292 : vector<8x32xf32>
    %cst_118 = arith.constant -0.284496725 : f32
    %301 = vector.broadcast %cst_118 : f32 to vector<8x32xf32>
    %302 = arith.addf %300, %301 : vector<8x32xf32>
    %303 = arith.mulf %302, %292 : vector<8x32xf32>
    %cst_119 = arith.constant 0.254829586 : f32
    %304 = vector.broadcast %cst_119 : f32 to vector<8x32xf32>
    %305 = arith.addf %303, %304 : vector<8x32xf32>
    %306 = arith.mulf %305, %292 : vector<8x32xf32>
    %cst_120 = arith.constant 0.000000e+00 : f32
    %307 = vector.broadcast %cst_120 : f32 to vector<8x32xf32>
    %308 = arith.subf %307, %286 : vector<8x32xf32>
    %309 = arith.mulf %308, %286 : vector<8x32xf32>
    %310 = math.exp %309 : vector<8x32xf32>
    %311 = arith.mulf %306, %310 : vector<8x32xf32>
    %cst_121 = arith.constant 1.000000e+00 : f32
    %312 = vector.broadcast %cst_121 : f32 to vector<8x32xf32>
    %313 = arith.subf %312, %311 : vector<8x32xf32>
    %314 = arith.mulf %285, %313 : vector<8x32xf32>
    %cst_122 = arith.constant 1.000000e+00 : f32
    %315 = vector.broadcast %cst_122 : f32 to vector<8x32xf32>
    %316 = arith.addf %315, %314 : vector<8x32xf32>
    %317 = arith.mulf %278, %316 : vector<8x32xf32>
    %cst_123 = arith.constant dense<0.000000e+00> : vector<8x32xf32>
    %318 = tpu.matmul %317, %270, %cst_123 {dimension_numbers = #tpu.dot_dimension_numbers<[1], [0], [0], [1], [0, 0, 1, 1], [], []>} : vector<8x32xf32>, vector<32x32xf32>, vector<8x32xf32> -> vector<8x32xf32>
    %319 = vector.broadcast %271 : vector<1x32xf32> to vector<8x32xf32>
    %320 = arith.addf %318, %319 : vector<8x32xf32>
    %321 = arith.addf %267, %320 : vector<8x32xf32>
    %cst_124 = arith.constant dense<0.000000e+00> : vector<8xf32>
    %322 = vector.multi_reduction <add>, %321, %cst_124 [1] : vector<8x32xf32> to vector<8xf32>
    %323 = vector.shape_cast %322 : vector<8xf32> to vector<8x1xf32>
    %cst_125 = arith.constant 3.200000e+01 : f32
    %324 = vector.broadcast %cst_125 : f32 to vector<8x1xf32>
    %325 = arith.divf %323, %324 : vector<8x1xf32>
    %326 = vector.broadcast %325 : vector<8x1xf32> to vector<8x32xf32>
    %327 = arith.subf %321, %326 : vector<8x32xf32>
    %328 = arith.mulf %327, %327 : vector<8x32xf32>
    %cst_126 = arith.constant dense<0.000000e+00> : vector<8xf32>
    %329 = vector.multi_reduction <add>, %328, %cst_126 [1] : vector<8x32xf32> to vector<8xf32>
    %330 = vector.shape_cast %329 : vector<8xf32> to vector<8x1xf32>
    %cst_127 = arith.constant 3.200000e+01 : f32
    %331 = vector.broadcast %cst_127 : f32 to vector<8x1xf32>
    %332 = arith.divf %330, %331 : vector<8x1xf32>
    %cst_128 = arith.constant 9.99999974E-6 : f32
    %333 = vector.broadcast %cst_128 : f32 to vector<8x1xf32>
    %334 = arith.addf %332, %333 : vector<8x1xf32>
    %335 = math.rsqrt %334 : vector<8x1xf32>
    %336 = vector.broadcast %335 : vector<8x1xf32> to vector<8x32xf32>
    %337 = arith.mulf %327, %336 : vector<8x32xf32>
    %338 = vector.broadcast %272 : vector<1x32xf32> to vector<8x32xf32>
    %339 = arith.mulf %337, %338 : vector<8x32xf32>
    %340 = vector.broadcast %273 : vector<1x32xf32> to vector<8x32xf32>
    %341 = arith.addf %339, %340 : vector<8x32xf32>
    %c0_129 = arith.constant 0 : index
    %c0_130 = arith.constant 0 : index
    %342 = vector.load %arg25[%c0_129, %c0_130] : memref<32x96xf32, #tpu.memory_space<vmem>>, vector<32x96xf32>
    %c0_131 = arith.constant 0 : index
    %c0_132 = arith.constant 0 : index
    %343 = vector.load %arg26[%c0_131, %c0_132] : memref<1x96xf32, #tpu.memory_space<vmem>>, vector<1x96xf32>
    %c0_133 = arith.constant 0 : index
    %c0_134 = arith.constant 0 : index
    %344 = vector.load %arg27[%c0_133, %c0_134] : memref<32x32xf32, #tpu.memory_space<vmem>>, vector<32x32xf32>
    %c0_135 = arith.constant 0 : index
    %c0_136 = arith.constant 0 : index
    %345 = vector.load %arg28[%c0_135, %c0_136] : memref<1x32xf32, #tpu.memory_space<vmem>>, vector<1x32xf32>
    %c0_137 = arith.constant 0 : index
    %c0_138 = arith.constant 0 : index
    %346 = vector.load %arg29[%c0_137, %c0_138] : memref<1x32xf32, #tpu.memory_space<vmem>>, vector<1x32xf32>
    %c0_139 = arith.constant 0 : index
    %c0_140 = arith.constant 0 : index
    %347 = vector.load %arg30[%c0_139, %c0_140] : memref<1x32xf32, #tpu.memory_space<vmem>>, vector<1x32xf32>
    %cst_141 = arith.constant dense<0.000000e+00> : vector<8x96xf32>
    %348 = tpu.matmul %341, %342, %cst_141 {dimension_numbers = #tpu.dot_dimension_numbers<[1], [0], [0], [1], [0, 0, 1, 1], [], []>} : vector<8x32xf32>, vector<32x96xf32>, vector<8x96xf32> -> vector<8x96xf32>
    %349 = vector.broadcast %343 : vector<1x96xf32> to vector<8x96xf32>
    %350 = arith.addf %348, %349 : vector<8x96xf32>
    %351 = vector.extract_strided_slice %350 {offsets = [0, 0], sizes = [8, 32], strides = [1, 1]} : vector<8x96xf32> to vector<8x32xf32>
    %352 = vector.extract_strided_slice %350 {offsets = [0, 32], sizes = [8, 32], strides = [1, 1]} : vector<8x96xf32> to vector<8x32xf32>
    %353 = vector.extract_strided_slice %350 {offsets = [0, 64], sizes = [8, 32], strides = [1, 1]} : vector<8x96xf32> to vector<8x32xf32>
    %354 = vector.extract_strided_slice %351 {offsets = [0, 0], sizes = [8, 8], strides = [1, 1]} : vector<8x32xf32> to vector<8x8xf32>
    %355 = vector.extract_strided_slice %352 {offsets = [0, 0], sizes = [8, 8], strides = [1, 1]} : vector<8x32xf32> to vector<8x8xf32>
    %356 = vector.extract_strided_slice %353 {offsets = [0, 0], sizes = [8, 8], strides = [1, 1]} : vector<8x32xf32> to vector<8x8xf32>
    %cst_142 = arith.constant dense<0.000000e+00> : vector<8x8xf32>
    %357 = tpu.matmul %354, %355, %cst_142 {dimension_numbers = #tpu.dot_dimension_numbers<[1], [1], [0], [0], [0, 0, 1, 0], [], []>} : vector<8x8xf32>, vector<8x8xf32>, vector<8x8xf32> -> vector<8x8xf32>
    %cst_143 = arith.constant 0.353553385 : f32
    %358 = vector.broadcast %cst_143 : f32 to vector<8x8xf32>
    %359 = arith.mulf %357, %358 : vector<8x8xf32>
    %360 = arith.addf %359, %13 : vector<8x8xf32>
    %cst_144 = arith.constant dense<0xFF800000> : vector<8xf32>
    %361 = vector.multi_reduction <maximumf>, %360, %cst_144 [1] : vector<8x8xf32> to vector<8xf32>
    %362 = vector.shape_cast %361 : vector<8xf32> to vector<8x1xf32>
    %363 = vector.broadcast %362 : vector<8x1xf32> to vector<8x8xf32>
    %364 = arith.subf %360, %363 : vector<8x8xf32>
    %365 = math.exp %364 : vector<8x8xf32>
    %cst_145 = arith.constant dense<0.000000e+00> : vector<8xf32>
    %366 = vector.multi_reduction <add>, %365, %cst_145 [1] : vector<8x8xf32> to vector<8xf32>
    %367 = vector.shape_cast %366 : vector<8xf32> to vector<8x1xf32>
    %368 = tpu.reciprocal %367 {approx = true} : vector<8x1xf32> -> vector<8x1xf32>
    %369 = vector.broadcast %368 : vector<8x1xf32> to vector<8x8xf32>
    %370 = arith.mulf %365, %369 : vector<8x8xf32>
    %cst_146 = arith.constant dense<0.000000e+00> : vector<8x8xf32>
    %371 = tpu.matmul %370, %356, %cst_146 {dimension_numbers = #tpu.dot_dimension_numbers<[1], [0], [0], [1], [0, 0, 1, 1], [], []>} : vector<8x8xf32>, vector<8x8xf32>, vector<8x8xf32> -> vector<8x8xf32>
    %372 = vector.extract_strided_slice %351 {offsets = [0, 8], sizes = [8, 8], strides = [1, 1]} : vector<8x32xf32> to vector<8x8xf32>
    %373 = vector.extract_strided_slice %352 {offsets = [0, 8], sizes = [8, 8], strides = [1, 1]} : vector<8x32xf32> to vector<8x8xf32>
    %374 = vector.extract_strided_slice %353 {offsets = [0, 8], sizes = [8, 8], strides = [1, 1]} : vector<8x32xf32> to vector<8x8xf32>
    %cst_147 = arith.constant dense<0.000000e+00> : vector<8x8xf32>
    %375 = tpu.matmul %372, %373, %cst_147 {dimension_numbers = #tpu.dot_dimension_numbers<[1], [1], [0], [0], [0, 0, 1, 0], [], []>} : vector<8x8xf32>, vector<8x8xf32>, vector<8x8xf32> -> vector<8x8xf32>
    %cst_148 = arith.constant 0.353553385 : f32
    %376 = vector.broadcast %cst_148 : f32 to vector<8x8xf32>
    %377 = arith.mulf %375, %376 : vector<8x8xf32>
    %378 = arith.addf %377, %13 : vector<8x8xf32>
    %cst_149 = arith.constant dense<0xFF800000> : vector<8xf32>
    %379 = vector.multi_reduction <maximumf>, %378, %cst_149 [1] : vector<8x8xf32> to vector<8xf32>
    %380 = vector.shape_cast %379 : vector<8xf32> to vector<8x1xf32>
    %381 = vector.broadcast %380 : vector<8x1xf32> to vector<8x8xf32>
    %382 = arith.subf %378, %381 : vector<8x8xf32>
    %383 = math.exp %382 : vector<8x8xf32>
    %cst_150 = arith.constant dense<0.000000e+00> : vector<8xf32>
    %384 = vector.multi_reduction <add>, %383, %cst_150 [1] : vector<8x8xf32> to vector<8xf32>
    %385 = vector.shape_cast %384 : vector<8xf32> to vector<8x1xf32>
    %386 = tpu.reciprocal %385 {approx = true} : vector<8x1xf32> -> vector<8x1xf32>
    %387 = vector.broadcast %386 : vector<8x1xf32> to vector<8x8xf32>
    %388 = arith.mulf %383, %387 : vector<8x8xf32>
    %cst_151 = arith.constant dense<0.000000e+00> : vector<8x8xf32>
    %389 = tpu.matmul %388, %374, %cst_151 {dimension_numbers = #tpu.dot_dimension_numbers<[1], [0], [0], [1], [0, 0, 1, 1], [], []>} : vector<8x8xf32>, vector<8x8xf32>, vector<8x8xf32> -> vector<8x8xf32>
    %390 = vector.extract_strided_slice %351 {offsets = [0, 16], sizes = [8, 8], strides = [1, 1]} : vector<8x32xf32> to vector<8x8xf32>
    %391 = vector.extract_strided_slice %352 {offsets = [0, 16], sizes = [8, 8], strides = [1, 1]} : vector<8x32xf32> to vector<8x8xf32>
    %392 = vector.extract_strided_slice %353 {offsets = [0, 16], sizes = [8, 8], strides = [1, 1]} : vector<8x32xf32> to vector<8x8xf32>
    %cst_152 = arith.constant dense<0.000000e+00> : vector<8x8xf32>
    %393 = tpu.matmul %390, %391, %cst_152 {dimension_numbers = #tpu.dot_dimension_numbers<[1], [1], [0], [0], [0, 0, 1, 0], [], []>} : vector<8x8xf32>, vector<8x8xf32>, vector<8x8xf32> -> vector<8x8xf32>
    %cst_153 = arith.constant 0.353553385 : f32
    %394 = vector.broadcast %cst_153 : f32 to vector<8x8xf32>
    %395 = arith.mulf %393, %394 : vector<8x8xf32>
    %396 = arith.addf %395, %13 : vector<8x8xf32>
    %cst_154 = arith.constant dense<0xFF800000> : vector<8xf32>
    %397 = vector.multi_reduction <maximumf>, %396, %cst_154 [1] : vector<8x8xf32> to vector<8xf32>
    %398 = vector.shape_cast %397 : vector<8xf32> to vector<8x1xf32>
    %399 = vector.broadcast %398 : vector<8x1xf32> to vector<8x8xf32>
    %400 = arith.subf %396, %399 : vector<8x8xf32>
    %401 = math.exp %400 : vector<8x8xf32>
    %cst_155 = arith.constant dense<0.000000e+00> : vector<8xf32>
    %402 = vector.multi_reduction <add>, %401, %cst_155 [1] : vector<8x8xf32> to vector<8xf32>
    %403 = vector.shape_cast %402 : vector<8xf32> to vector<8x1xf32>
    %404 = tpu.reciprocal %403 {approx = true} : vector<8x1xf32> -> vector<8x1xf32>
    %405 = vector.broadcast %404 : vector<8x1xf32> to vector<8x8xf32>
    %406 = arith.mulf %401, %405 : vector<8x8xf32>
    %cst_156 = arith.constant dense<0.000000e+00> : vector<8x8xf32>
    %407 = tpu.matmul %406, %392, %cst_156 {dimension_numbers = #tpu.dot_dimension_numbers<[1], [0], [0], [1], [0, 0, 1, 1], [], []>} : vector<8x8xf32>, vector<8x8xf32>, vector<8x8xf32> -> vector<8x8xf32>
    %408 = vector.extract_strided_slice %351 {offsets = [0, 24], sizes = [8, 8], strides = [1, 1]} : vector<8x32xf32> to vector<8x8xf32>
    %409 = vector.extract_strided_slice %352 {offsets = [0, 24], sizes = [8, 8], strides = [1, 1]} : vector<8x32xf32> to vector<8x8xf32>
    %410 = vector.extract_strided_slice %353 {offsets = [0, 24], sizes = [8, 8], strides = [1, 1]} : vector<8x32xf32> to vector<8x8xf32>
    %cst_157 = arith.constant dense<0.000000e+00> : vector<8x8xf32>
    %411 = tpu.matmul %408, %409, %cst_157 {dimension_numbers = #tpu.dot_dimension_numbers<[1], [1], [0], [0], [0, 0, 1, 0], [], []>} : vector<8x8xf32>, vector<8x8xf32>, vector<8x8xf32> -> vector<8x8xf32>
    %cst_158 = arith.constant 0.353553385 : f32
    %412 = vector.broadcast %cst_158 : f32 to vector<8x8xf32>
    %413 = arith.mulf %411, %412 : vector<8x8xf32>
    %414 = arith.addf %413, %13 : vector<8x8xf32>
    %cst_159 = arith.constant dense<0xFF800000> : vector<8xf32>
    %415 = vector.multi_reduction <maximumf>, %414, %cst_159 [1] : vector<8x8xf32> to vector<8xf32>
    %416 = vector.shape_cast %415 : vector<8xf32> to vector<8x1xf32>
    %417 = vector.broadcast %416 : vector<8x1xf32> to vector<8x8xf32>
    %418 = arith.subf %414, %417 : vector<8x8xf32>
    %419 = math.exp %418 : vector<8x8xf32>
    %cst_160 = arith.constant dense<0.000000e+00> : vector<8xf32>
    %420 = vector.multi_reduction <add>, %419, %cst_160 [1] : vector<8x8xf32> to vector<8xf32>
    %421 = vector.shape_cast %420 : vector<8xf32> to vector<8x1xf32>
    %422 = tpu.reciprocal %421 {approx = true} : vector<8x1xf32> -> vector<8x1xf32>
    %423 = vector.broadcast %422 : vector<8x1xf32> to vector<8x8xf32>
    %424 = arith.mulf %419, %423 : vector<8x8xf32>
    %cst_161 = arith.constant dense<0.000000e+00> : vector<8x8xf32>
    %425 = tpu.matmul %424, %410, %cst_161 {dimension_numbers = #tpu.dot_dimension_numbers<[1], [0], [0], [1], [0, 0, 1, 1], [], []>} : vector<8x8xf32>, vector<8x8xf32>, vector<8x8xf32> -> vector<8x8xf32>
    %426 = vector.extract_strided_slice %371 {offsets = [0, 0], sizes = [1, 8], strides = [1, 1]} : vector<8x8xf32> to vector<1x8xf32>
    %427 = vector.extract_strided_slice %371 {offsets = [4, 0], sizes = [1, 8], strides = [1, 1]} : vector<8x8xf32> to vector<1x8xf32>
    %428 = vector.extract_strided_slice %389 {offsets = [0, 0], sizes = [1, 8], strides = [1, 1]} : vector<8x8xf32> to vector<1x8xf32>
    %429 = vector.extract_strided_slice %389 {offsets = [4, 0], sizes = [1, 8], strides = [1, 1]} : vector<8x8xf32> to vector<1x8xf32>
    %430 = vector.extract_strided_slice %407 {offsets = [0, 0], sizes = [1, 8], strides = [1, 1]} : vector<8x8xf32> to vector<1x8xf32>
    %431 = vector.extract_strided_slice %407 {offsets = [4, 0], sizes = [1, 8], strides = [1, 1]} : vector<8x8xf32> to vector<1x8xf32>
    %432 = vector.extract_strided_slice %425 {offsets = [0, 0], sizes = [1, 8], strides = [1, 1]} : vector<8x8xf32> to vector<1x8xf32>
    %433 = vector.extract_strided_slice %425 {offsets = [4, 0], sizes = [1, 8], strides = [1, 1]} : vector<8x8xf32> to vector<1x8xf32>
    %434 = tpu.concatenate %426, %427, %428, %429, %430, %431, %432, %433 in 0 : vector<1x8xf32>, vector<1x8xf32>, vector<1x8xf32>, vector<1x8xf32>, vector<1x8xf32>, vector<1x8xf32>, vector<1x8xf32>, vector<1x8xf32> -> vector<8x8xf32>
    %435 = vector.extract_strided_slice %371 {offsets = [1, 0], sizes = [1, 8], strides = [1, 1]} : vector<8x8xf32> to vector<1x8xf32>
    %436 = vector.extract_strided_slice %371 {offsets = [5, 0], sizes = [1, 8], strides = [1, 1]} : vector<8x8xf32> to vector<1x8xf32>
    %437 = vector.extract_strided_slice %389 {offsets = [1, 0], sizes = [1, 8], strides = [1, 1]} : vector<8x8xf32> to vector<1x8xf32>
    %438 = vector.extract_strided_slice %389 {offsets = [5, 0], sizes = [1, 8], strides = [1, 1]} : vector<8x8xf32> to vector<1x8xf32>
    %439 = vector.extract_strided_slice %407 {offsets = [1, 0], sizes = [1, 8], strides = [1, 1]} : vector<8x8xf32> to vector<1x8xf32>
    %440 = vector.extract_strided_slice %407 {offsets = [5, 0], sizes = [1, 8], strides = [1, 1]} : vector<8x8xf32> to vector<1x8xf32>
    %441 = vector.extract_strided_slice %425 {offsets = [1, 0], sizes = [1, 8], strides = [1, 1]} : vector<8x8xf32> to vector<1x8xf32>
    %442 = vector.extract_strided_slice %425 {offsets = [5, 0], sizes = [1, 8], strides = [1, 1]} : vector<8x8xf32> to vector<1x8xf32>
    %443 = tpu.concatenate %435, %436, %437, %438, %439, %440, %441, %442 in 0 : vector<1x8xf32>, vector<1x8xf32>, vector<1x8xf32>, vector<1x8xf32>, vector<1x8xf32>, vector<1x8xf32>, vector<1x8xf32>, vector<1x8xf32> -> vector<8x8xf32>
    %444 = vector.extract_strided_slice %371 {offsets = [2, 0], sizes = [1, 8], strides = [1, 1]} : vector<8x8xf32> to vector<1x8xf32>
    %445 = vector.extract_strided_slice %371 {offsets = [6, 0], sizes = [1, 8], strides = [1, 1]} : vector<8x8xf32> to vector<1x8xf32>
    %446 = vector.extract_strided_slice %389 {offsets = [2, 0], sizes = [1, 8], strides = [1, 1]} : vector<8x8xf32> to vector<1x8xf32>
    %447 = vector.extract_strided_slice %389 {offsets = [6, 0], sizes = [1, 8], strides = [1, 1]} : vector<8x8xf32> to vector<1x8xf32>
    %448 = vector.extract_strided_slice %407 {offsets = [2, 0], sizes = [1, 8], strides = [1, 1]} : vector<8x8xf32> to vector<1x8xf32>
    %449 = vector.extract_strided_slice %407 {offsets = [6, 0], sizes = [1, 8], strides = [1, 1]} : vector<8x8xf32> to vector<1x8xf32>
    %450 = vector.extract_strided_slice %425 {offsets = [2, 0], sizes = [1, 8], strides = [1, 1]} : vector<8x8xf32> to vector<1x8xf32>
    %451 = vector.extract_strided_slice %425 {offsets = [6, 0], sizes = [1, 8], strides = [1, 1]} : vector<8x8xf32> to vector<1x8xf32>
    %452 = tpu.concatenate %444, %445, %446, %447, %448, %449, %450, %451 in 0 : vector<1x8xf32>, vector<1x8xf32>, vector<1x8xf32>, vector<1x8xf32>, vector<1x8xf32>, vector<1x8xf32>, vector<1x8xf32>, vector<1x8xf32> -> vector<8x8xf32>
    %453 = vector.extract_strided_slice %371 {offsets = [3, 0], sizes = [1, 8], strides = [1, 1]} : vector<8x8xf32> to vector<1x8xf32>
    %454 = vector.extract_strided_slice %371 {offsets = [7, 0], sizes = [1, 8], strides = [1, 1]} : vector<8x8xf32> to vector<1x8xf32>
    %455 = vector.extract_strided_slice %389 {offsets = [3, 0], sizes = [1, 8], strides = [1, 1]} : vector<8x8xf32> to vector<1x8xf32>
    %456 = vector.extract_strided_slice %389 {offsets = [7, 0], sizes = [1, 8], strides = [1, 1]} : vector<8x8xf32> to vector<1x8xf32>
    %457 = vector.extract_strided_slice %407 {offsets = [3, 0], sizes = [1, 8], strides = [1, 1]} : vector<8x8xf32> to vector<1x8xf32>
    %458 = vector.extract_strided_slice %407 {offsets = [7, 0], sizes = [1, 8], strides = [1, 1]} : vector<8x8xf32> to vector<1x8xf32>
    %459 = vector.extract_strided_slice %425 {offsets = [3, 0], sizes = [1, 8], strides = [1, 1]} : vector<8x8xf32> to vector<1x8xf32>
    %460 = vector.extract_strided_slice %425 {offsets = [7, 0], sizes = [1, 8], strides = [1, 1]} : vector<8x8xf32> to vector<1x8xf32>
    %461 = tpu.concatenate %453, %454, %455, %456, %457, %458, %459, %460 in 0 : vector<1x8xf32>, vector<1x8xf32>, vector<1x8xf32>, vector<1x8xf32>, vector<1x8xf32>, vector<1x8xf32>, vector<1x8xf32>, vector<1x8xf32> -> vector<8x8xf32>
    %462 = tpu.concatenate %434, %443, %452, %461 in 1 : vector<8x8xf32>, vector<8x8xf32>, vector<8x8xf32>, vector<8x8xf32> -> vector<8x32xf32>
    %cst_162 = arith.constant dense<0.000000e+00> : vector<8x32xf32>
    %463 = tpu.matmul %462, %344, %cst_162 {dimension_numbers = #tpu.dot_dimension_numbers<[1], [0], [0], [1], [0, 0, 1, 1], [], []>} : vector<8x32xf32>, vector<32x32xf32>, vector<8x32xf32> -> vector<8x32xf32>
    %464 = vector.broadcast %345 : vector<1x32xf32> to vector<8x32xf32>
    %465 = arith.addf %463, %464 : vector<8x32xf32>
    %466 = arith.addf %341, %465 : vector<8x32xf32>
    %cst_163 = arith.constant dense<0.000000e+00> : vector<8xf32>
    %467 = vector.multi_reduction <add>, %466, %cst_163 [1] : vector<8x32xf32> to vector<8xf32>
    %468 = vector.shape_cast %467 : vector<8xf32> to vector<8x1xf32>
    %cst_164 = arith.constant 3.200000e+01 : f32
    %469 = vector.broadcast %cst_164 : f32 to vector<8x1xf32>
    %470 = arith.divf %468, %469 : vector<8x1xf32>
    %471 = vector.broadcast %470 : vector<8x1xf32> to vector<8x32xf32>
    %472 = arith.subf %466, %471 : vector<8x32xf32>
    %473 = arith.mulf %472, %472 : vector<8x32xf32>
    %cst_165 = arith.constant dense<0.000000e+00> : vector<8xf32>
    %474 = vector.multi_reduction <add>, %473, %cst_165 [1] : vector<8x32xf32> to vector<8xf32>
    %475 = vector.shape_cast %474 : vector<8xf32> to vector<8x1xf32>
    %cst_166 = arith.constant 3.200000e+01 : f32
    %476 = vector.broadcast %cst_166 : f32 to vector<8x1xf32>
    %477 = arith.divf %475, %476 : vector<8x1xf32>
    %cst_167 = arith.constant 9.99999974E-6 : f32
    %478 = vector.broadcast %cst_167 : f32 to vector<8x1xf32>
    %479 = arith.addf %477, %478 : vector<8x1xf32>
    %480 = math.rsqrt %479 : vector<8x1xf32>
    %481 = vector.broadcast %480 : vector<8x1xf32> to vector<8x32xf32>
    %482 = arith.mulf %472, %481 : vector<8x32xf32>
    %483 = vector.broadcast %346 : vector<1x32xf32> to vector<8x32xf32>
    %484 = arith.mulf %482, %483 : vector<8x32xf32>
    %485 = vector.broadcast %347 : vector<1x32xf32> to vector<8x32xf32>
    %486 = arith.addf %484, %485 : vector<8x32xf32>
    %c0_168 = arith.constant 0 : index
    %c0_169 = arith.constant 0 : index
    %487 = vector.load %arg31[%c0_168, %c0_169] : memref<32x32xf32, #tpu.memory_space<vmem>>, vector<32x32xf32>
    %c0_170 = arith.constant 0 : index
    %c0_171 = arith.constant 0 : index
    %488 = vector.load %arg32[%c0_170, %c0_171] : memref<1x32xf32, #tpu.memory_space<vmem>>, vector<1x32xf32>
    %c0_172 = arith.constant 0 : index
    %c0_173 = arith.constant 0 : index
    %489 = vector.load %arg33[%c0_172, %c0_173] : memref<32x64xf32, #tpu.memory_space<vmem>>, vector<32x64xf32>
    %c0_174 = arith.constant 0 : index
    %c0_175 = arith.constant 0 : index
    %490 = vector.load %arg34[%c0_174, %c0_175] : memref<1x64xf32, #tpu.memory_space<vmem>>, vector<1x64xf32>
    %c0_176 = arith.constant 0 : index
    %c0_177 = arith.constant 0 : index
    %491 = vector.load %arg35[%c0_176, %c0_177] : memref<32x32xf32, #tpu.memory_space<vmem>>, vector<32x32xf32>
    %c0_178 = arith.constant 0 : index
    %c0_179 = arith.constant 0 : index
    %492 = vector.load %arg36[%c0_178, %c0_179] : memref<1x32xf32, #tpu.memory_space<vmem>>, vector<1x32xf32>
    %c0_180 = arith.constant 0 : index
    %c0_181 = arith.constant 0 : index
    %493 = vector.load %arg37[%c0_180, %c0_181] : memref<1x32xf32, #tpu.memory_space<vmem>>, vector<1x32xf32>
    %c0_182 = arith.constant 0 : index
    %c0_183 = arith.constant 0 : index
    %494 = vector.load %arg38[%c0_182, %c0_183] : memref<1x32xf32, #tpu.memory_space<vmem>>, vector<1x32xf32>
    %cst_184 = arith.constant dense<0.000000e+00> : vector<8x32xf32>
    %495 = tpu.matmul %486, %487, %cst_184 {dimension_numbers = #tpu.dot_dimension_numbers<[1], [0], [0], [1], [0, 0, 1, 1], [], []>} : vector<8x32xf32>, vector<32x32xf32>, vector<8x32xf32> -> vector<8x32xf32>
    %496 = vector.broadcast %488 : vector<1x32xf32> to vector<8x32xf32>
    %497 = arith.addf %495, %496 : vector<8x32xf32>
    %cst_185 = arith.constant dense<0.000000e+00> : vector<16x64xf32>
    %498 = tpu.matmul %3, %489, %cst_185 {dimension_numbers = #tpu.dot_dimension_numbers<[1], [0], [0], [1], [0, 0, 1, 1], [], []>} : vector<16x32xf32>, vector<32x64xf32>, vector<16x64xf32> -> vector<16x64xf32>
    %499 = vector.broadcast %490 : vector<1x64xf32> to vector<16x64xf32>
    %500 = arith.addf %498, %499 : vector<16x64xf32>
    %501 = vector.extract_strided_slice %500 {offsets = [0, 0], sizes = [16, 32], strides = [1, 1]} : vector<16x64xf32> to vector<16x32xf32>
    %502 = vector.extract_strided_slice %500 {offsets = [0, 32], sizes = [16, 32], strides = [1, 1]} : vector<16x64xf32> to vector<16x32xf32>
    %503 = vector.extract_strided_slice %497 {offsets = [0, 0], sizes = [8, 8], strides = [1, 1]} : vector<8x32xf32> to vector<8x8xf32>
    %504 = vector.extract_strided_slice %501 {offsets = [0, 0], sizes = [16, 8], strides = [1, 1]} : vector<16x32xf32> to vector<16x8xf32>
    %505 = vector.extract_strided_slice %502 {offsets = [0, 0], sizes = [16, 8], strides = [1, 1]} : vector<16x32xf32> to vector<16x8xf32>
    %cst_186 = arith.constant dense<0.000000e+00> : vector<8x16xf32>
    %506 = tpu.matmul %503, %504, %cst_186 {dimension_numbers = #tpu.dot_dimension_numbers<[1], [1], [0], [0], [0, 0, 1, 0], [], []>} : vector<8x8xf32>, vector<16x8xf32>, vector<8x16xf32> -> vector<8x16xf32>
    %cst_187 = arith.constant 0.353553385 : f32
    %507 = vector.broadcast %cst_187 : f32 to vector<8x16xf32>
    %508 = arith.mulf %506, %507 : vector<8x16xf32>
    %cst_188 = arith.constant dense<0xFF800000> : vector<8xf32>
    %509 = vector.multi_reduction <maximumf>, %508, %cst_188 [1] : vector<8x16xf32> to vector<8xf32>
    %510 = vector.shape_cast %509 : vector<8xf32> to vector<8x1xf32>
    %511 = vector.broadcast %510 : vector<8x1xf32> to vector<8x16xf32>
    %512 = arith.subf %508, %511 : vector<8x16xf32>
    %513 = math.exp %512 : vector<8x16xf32>
    %cst_189 = arith.constant dense<0.000000e+00> : vector<8xf32>
    %514 = vector.multi_reduction <add>, %513, %cst_189 [1] : vector<8x16xf32> to vector<8xf32>
    %515 = vector.shape_cast %514 : vector<8xf32> to vector<8x1xf32>
    %516 = tpu.reciprocal %515 {approx = true} : vector<8x1xf32> -> vector<8x1xf32>
    %517 = vector.broadcast %516 : vector<8x1xf32> to vector<8x16xf32>
    %518 = arith.mulf %513, %517 : vector<8x16xf32>
    %cst_190 = arith.constant dense<0.000000e+00> : vector<8x8xf32>
    %519 = tpu.matmul %518, %505, %cst_190 {dimension_numbers = #tpu.dot_dimension_numbers<[1], [0], [0], [1], [0, 0, 1, 1], [], []>} : vector<8x16xf32>, vector<16x8xf32>, vector<8x8xf32> -> vector<8x8xf32>
    %520 = vector.extract_strided_slice %497 {offsets = [0, 8], sizes = [8, 8], strides = [1, 1]} : vector<8x32xf32> to vector<8x8xf32>
    %521 = vector.extract_strided_slice %501 {offsets = [0, 8], sizes = [16, 8], strides = [1, 1]} : vector<16x32xf32> to vector<16x8xf32>
    %522 = vector.extract_strided_slice %502 {offsets = [0, 8], sizes = [16, 8], strides = [1, 1]} : vector<16x32xf32> to vector<16x8xf32>
    %cst_191 = arith.constant dense<0.000000e+00> : vector<8x16xf32>
    %523 = tpu.matmul %520, %521, %cst_191 {dimension_numbers = #tpu.dot_dimension_numbers<[1], [1], [0], [0], [0, 0, 1, 0], [], []>} : vector<8x8xf32>, vector<16x8xf32>, vector<8x16xf32> -> vector<8x16xf32>
    %cst_192 = arith.constant 0.353553385 : f32
    %524 = vector.broadcast %cst_192 : f32 to vector<8x16xf32>
    %525 = arith.mulf %523, %524 : vector<8x16xf32>
    %cst_193 = arith.constant dense<0xFF800000> : vector<8xf32>
    %526 = vector.multi_reduction <maximumf>, %525, %cst_193 [1] : vector<8x16xf32> to vector<8xf32>
    %527 = vector.shape_cast %526 : vector<8xf32> to vector<8x1xf32>
    %528 = vector.broadcast %527 : vector<8x1xf32> to vector<8x16xf32>
    %529 = arith.subf %525, %528 : vector<8x16xf32>
    %530 = math.exp %529 : vector<8x16xf32>
    %cst_194 = arith.constant dense<0.000000e+00> : vector<8xf32>
    %531 = vector.multi_reduction <add>, %530, %cst_194 [1] : vector<8x16xf32> to vector<8xf32>
    %532 = vector.shape_cast %531 : vector<8xf32> to vector<8x1xf32>
    %533 = tpu.reciprocal %532 {approx = true} : vector<8x1xf32> -> vector<8x1xf32>
    %534 = vector.broadcast %533 : vector<8x1xf32> to vector<8x16xf32>
    %535 = arith.mulf %530, %534 : vector<8x16xf32>
    %cst_195 = arith.constant dense<0.000000e+00> : vector<8x8xf32>
    %536 = tpu.matmul %535, %522, %cst_195 {dimension_numbers = #tpu.dot_dimension_numbers<[1], [0], [0], [1], [0, 0, 1, 1], [], []>} : vector<8x16xf32>, vector<16x8xf32>, vector<8x8xf32> -> vector<8x8xf32>
    %537 = vector.extract_strided_slice %497 {offsets = [0, 16], sizes = [8, 8], strides = [1, 1]} : vector<8x32xf32> to vector<8x8xf32>
    %538 = vector.extract_strided_slice %501 {offsets = [0, 16], sizes = [16, 8], strides = [1, 1]} : vector<16x32xf32> to vector<16x8xf32>
    %539 = vector.extract_strided_slice %502 {offsets = [0, 16], sizes = [16, 8], strides = [1, 1]} : vector<16x32xf32> to vector<16x8xf32>
    %cst_196 = arith.constant dense<0.000000e+00> : vector<8x16xf32>
    %540 = tpu.matmul %537, %538, %cst_196 {dimension_numbers = #tpu.dot_dimension_numbers<[1], [1], [0], [0], [0, 0, 1, 0], [], []>} : vector<8x8xf32>, vector<16x8xf32>, vector<8x16xf32> -> vector<8x16xf32>
    %cst_197 = arith.constant 0.353553385 : f32
    %541 = vector.broadcast %cst_197 : f32 to vector<8x16xf32>
    %542 = arith.mulf %540, %541 : vector<8x16xf32>
    %cst_198 = arith.constant dense<0xFF800000> : vector<8xf32>
    %543 = vector.multi_reduction <maximumf>, %542, %cst_198 [1] : vector<8x16xf32> to vector<8xf32>
    %544 = vector.shape_cast %543 : vector<8xf32> to vector<8x1xf32>
    %545 = vector.broadcast %544 : vector<8x1xf32> to vector<8x16xf32>
    %546 = arith.subf %542, %545 : vector<8x16xf32>
    %547 = math.exp %546 : vector<8x16xf32>
    %cst_199 = arith.constant dense<0.000000e+00> : vector<8xf32>
    %548 = vector.multi_reduction <add>, %547, %cst_199 [1] : vector<8x16xf32> to vector<8xf32>
    %549 = vector.shape_cast %548 : vector<8xf32> to vector<8x1xf32>
    %550 = tpu.reciprocal %549 {approx = true} : vector<8x1xf32> -> vector<8x1xf32>
    %551 = vector.broadcast %550 : vector<8x1xf32> to vector<8x16xf32>
    %552 = arith.mulf %547, %551 : vector<8x16xf32>
    %cst_200 = arith.constant dense<0.000000e+00> : vector<8x8xf32>
    %553 = tpu.matmul %552, %539, %cst_200 {dimension_numbers = #tpu.dot_dimension_numbers<[1], [0], [0], [1], [0, 0, 1, 1], [], []>} : vector<8x16xf32>, vector<16x8xf32>, vector<8x8xf32> -> vector<8x8xf32>
    %554 = vector.extract_strided_slice %497 {offsets = [0, 24], sizes = [8, 8], strides = [1, 1]} : vector<8x32xf32> to vector<8x8xf32>
    %555 = vector.extract_strided_slice %501 {offsets = [0, 24], sizes = [16, 8], strides = [1, 1]} : vector<16x32xf32> to vector<16x8xf32>
    %556 = vector.extract_strided_slice %502 {offsets = [0, 24], sizes = [16, 8], strides = [1, 1]} : vector<16x32xf32> to vector<16x8xf32>
    %cst_201 = arith.constant dense<0.000000e+00> : vector<8x16xf32>
    %557 = tpu.matmul %554, %555, %cst_201 {dimension_numbers = #tpu.dot_dimension_numbers<[1], [1], [0], [0], [0, 0, 1, 0], [], []>} : vector<8x8xf32>, vector<16x8xf32>, vector<8x16xf32> -> vector<8x16xf32>
    %cst_202 = arith.constant 0.353553385 : f32
    %558 = vector.broadcast %cst_202 : f32 to vector<8x16xf32>
    %559 = arith.mulf %557, %558 : vector<8x16xf32>
    %cst_203 = arith.constant dense<0xFF800000> : vector<8xf32>
    %560 = vector.multi_reduction <maximumf>, %559, %cst_203 [1] : vector<8x16xf32> to vector<8xf32>
    %561 = vector.shape_cast %560 : vector<8xf32> to vector<8x1xf32>
    %562 = vector.broadcast %561 : vector<8x1xf32> to vector<8x16xf32>
    %563 = arith.subf %559, %562 : vector<8x16xf32>
    %564 = math.exp %563 : vector<8x16xf32>
    %cst_204 = arith.constant dense<0.000000e+00> : vector<8xf32>
    %565 = vector.multi_reduction <add>, %564, %cst_204 [1] : vector<8x16xf32> to vector<8xf32>
    %566 = vector.shape_cast %565 : vector<8xf32> to vector<8x1xf32>
    %567 = tpu.reciprocal %566 {approx = true} : vector<8x1xf32> -> vector<8x1xf32>
    %568 = vector.broadcast %567 : vector<8x1xf32> to vector<8x16xf32>
    %569 = arith.mulf %564, %568 : vector<8x16xf32>
    %cst_205 = arith.constant dense<0.000000e+00> : vector<8x8xf32>
    %570 = tpu.matmul %569, %556, %cst_205 {dimension_numbers = #tpu.dot_dimension_numbers<[1], [0], [0], [1], [0, 0, 1, 1], [], []>} : vector<8x16xf32>, vector<16x8xf32>, vector<8x8xf32> -> vector<8x8xf32>
    %571 = tpu.concatenate %519, %536, %553, %570 in 1 : vector<8x8xf32>, vector<8x8xf32>, vector<8x8xf32>, vector<8x8xf32> -> vector<8x32xf32>
    %cst_206 = arith.constant dense<0.000000e+00> : vector<8x32xf32>
    %572 = tpu.matmul %571, %491, %cst_206 {dimension_numbers = #tpu.dot_dimension_numbers<[1], [0], [0], [1], [0, 0, 1, 1], [], []>} : vector<8x32xf32>, vector<32x32xf32>, vector<8x32xf32> -> vector<8x32xf32>
    %573 = vector.broadcast %492 : vector<1x32xf32> to vector<8x32xf32>
    %574 = arith.addf %572, %573 : vector<8x32xf32>
    %575 = arith.addf %486, %574 : vector<8x32xf32>
    %cst_207 = arith.constant dense<0.000000e+00> : vector<8xf32>
    %576 = vector.multi_reduction <add>, %575, %cst_207 [1] : vector<8x32xf32> to vector<8xf32>
    %577 = vector.shape_cast %576 : vector<8xf32> to vector<8x1xf32>
    %cst_208 = arith.constant 3.200000e+01 : f32
    %578 = vector.broadcast %cst_208 : f32 to vector<8x1xf32>
    %579 = arith.divf %577, %578 : vector<8x1xf32>
    %580 = vector.broadcast %579 : vector<8x1xf32> to vector<8x32xf32>
    %581 = arith.subf %575, %580 : vector<8x32xf32>
    %582 = arith.mulf %581, %581 : vector<8x32xf32>
    %cst_209 = arith.constant dense<0.000000e+00> : vector<8xf32>
    %583 = vector.multi_reduction <add>, %582, %cst_209 [1] : vector<8x32xf32> to vector<8xf32>
    %584 = vector.shape_cast %583 : vector<8xf32> to vector<8x1xf32>
    %cst_210 = arith.constant 3.200000e+01 : f32
    %585 = vector.broadcast %cst_210 : f32 to vector<8x1xf32>
    %586 = arith.divf %584, %585 : vector<8x1xf32>
    %cst_211 = arith.constant 9.99999974E-6 : f32
    %587 = vector.broadcast %cst_211 : f32 to vector<8x1xf32>
    %588 = arith.addf %586, %587 : vector<8x1xf32>
    %589 = math.rsqrt %588 : vector<8x1xf32>
    %590 = vector.broadcast %589 : vector<8x1xf32> to vector<8x32xf32>
    %591 = arith.mulf %581, %590 : vector<8x32xf32>
    %592 = vector.broadcast %493 : vector<1x32xf32> to vector<8x32xf32>
    %593 = arith.mulf %591, %592 : vector<8x32xf32>
    %594 = vector.broadcast %494 : vector<1x32xf32> to vector<8x32xf32>
    %595 = arith.addf %593, %594 : vector<8x32xf32>
    %c0_212 = arith.constant 0 : index
    %c0_213 = arith.constant 0 : index
    %596 = vector.load %arg39[%c0_212, %c0_213] : memref<32x32xf32, #tpu.memory_space<vmem>>, vector<32x32xf32>
    %c0_214 = arith.constant 0 : index
    %c0_215 = arith.constant 0 : index
    %597 = vector.load %arg40[%c0_214, %c0_215] : memref<1x32xf32, #tpu.memory_space<vmem>>, vector<1x32xf32>
    %c0_216 = arith.constant 0 : index
    %c0_217 = arith.constant 0 : index
    %598 = vector.load %arg41[%c0_216, %c0_217] : memref<32x32xf32, #tpu.memory_space<vmem>>, vector<32x32xf32>
    %c0_218 = arith.constant 0 : index
    %c0_219 = arith.constant 0 : index
    %599 = vector.load %arg42[%c0_218, %c0_219] : memref<1x32xf32, #tpu.memory_space<vmem>>, vector<1x32xf32>
    %c0_220 = arith.constant 0 : index
    %c0_221 = arith.constant 0 : index
    %600 = vector.load %arg43[%c0_220, %c0_221] : memref<1x32xf32, #tpu.memory_space<vmem>>, vector<1x32xf32>
    %c0_222 = arith.constant 0 : index
    %c0_223 = arith.constant 0 : index
    %601 = vector.load %arg44[%c0_222, %c0_223] : memref<1x32xf32, #tpu.memory_space<vmem>>, vector<1x32xf32>
    %cst_224 = arith.constant dense<0.000000e+00> : vector<8x32xf32>
    %602 = tpu.matmul %595, %596, %cst_224 {dimension_numbers = #tpu.dot_dimension_numbers<[1], [0], [0], [1], [0, 0, 1, 1], [], []>} : vector<8x32xf32>, vector<32x32xf32>, vector<8x32xf32> -> vector<8x32xf32>
    %603 = vector.broadcast %597 : vector<1x32xf32> to vector<8x32xf32>
    %604 = arith.addf %602, %603 : vector<8x32xf32>
    %cst_225 = arith.constant 5.000000e-01 : f32
    %605 = vector.broadcast %cst_225 : f32 to vector<8x32xf32>
    %606 = arith.mulf %605, %604 : vector<8x32xf32>
    %cst_226 = arith.constant 0.707106769 : f32
    %607 = vector.broadcast %cst_226 : f32 to vector<8x32xf32>
    %608 = arith.mulf %604, %607 : vector<8x32xf32>
    %cst_227 = arith.constant 0.000000e+00 : f32
    %609 = vector.broadcast %cst_227 : f32 to vector<8x32xf32>
    %610 = arith.cmpf olt, %608, %609 : vector<8x32xf32>
    %cst_228 = arith.constant -1.000000e+00 : f32
    %cst_229 = arith.constant 1.000000e+00 : f32
    %611 = vector.broadcast %cst_228 : f32 to vector<8x32xf32>
    %612 = vector.broadcast %cst_229 : f32 to vector<8x32xf32>
    %613 = arith.select %610, %611, %612 : vector<8x32xi1>, vector<8x32xf32>
    %614 = math.absf %608 : vector<8x32xf32>
    %cst_230 = arith.constant 0.327591091 : f32
    %615 = vector.broadcast %cst_230 : f32 to vector<8x32xf32>
    %616 = arith.mulf %615, %614 : vector<8x32xf32>
    %cst_231 = arith.constant 1.000000e+00 : f32
    %617 = vector.broadcast %cst_231 : f32 to vector<8x32xf32>
    %618 = arith.addf %617, %616 : vector<8x32xf32>
    %cst_232 = arith.constant 1.000000e+00 : f32
    %619 = vector.broadcast %cst_232 : f32 to vector<8x32xf32>
    %620 = arith.divf %619, %618 : vector<8x32xf32>
    %cst_233 = arith.constant 1.06140542 : f32
    %621 = vector.broadcast %cst_233 : f32 to vector<8x32xf32>
    %622 = arith.mulf %621, %620 : vector<8x32xf32>
    %cst_234 = arith.constant -1.45315206 : f32
    %623 = vector.broadcast %cst_234 : f32 to vector<8x32xf32>
    %624 = arith.addf %622, %623 : vector<8x32xf32>
    %625 = arith.mulf %624, %620 : vector<8x32xf32>
    %cst_235 = arith.constant 1.42141378 : f32
    %626 = vector.broadcast %cst_235 : f32 to vector<8x32xf32>
    %627 = arith.addf %625, %626 : vector<8x32xf32>
    %628 = arith.mulf %627, %620 : vector<8x32xf32>
    %cst_236 = arith.constant -0.284496725 : f32
    %629 = vector.broadcast %cst_236 : f32 to vector<8x32xf32>
    %630 = arith.addf %628, %629 : vector<8x32xf32>
    %631 = arith.mulf %630, %620 : vector<8x32xf32>
    %cst_237 = arith.constant 0.254829586 : f32
    %632 = vector.broadcast %cst_237 : f32 to vector<8x32xf32>
    %633 = arith.addf %631, %632 : vector<8x32xf32>
    %634 = arith.mulf %633, %620 : vector<8x32xf32>
    %cst_238 = arith.constant 0.000000e+00 : f32
    %635 = vector.broadcast %cst_238 : f32 to vector<8x32xf32>
    %636 = arith.subf %635, %614 : vector<8x32xf32>
    %637 = arith.mulf %636, %614 : vector<8x32xf32>
    %638 = math.exp %637 : vector<8x32xf32>
    %639 = arith.mulf %634, %638 : vector<8x32xf32>
    %cst_239 = arith.constant 1.000000e+00 : f32
    %640 = vector.broadcast %cst_239 : f32 to vector<8x32xf32>
    %641 = arith.subf %640, %639 : vector<8x32xf32>
    %642 = arith.mulf %613, %641 : vector<8x32xf32>
    %cst_240 = arith.constant 1.000000e+00 : f32
    %643 = vector.broadcast %cst_240 : f32 to vector<8x32xf32>
    %644 = arith.addf %643, %642 : vector<8x32xf32>
    %645 = arith.mulf %606, %644 : vector<8x32xf32>
    %cst_241 = arith.constant dense<0.000000e+00> : vector<8x32xf32>
    %646 = tpu.matmul %645, %598, %cst_241 {dimension_numbers = #tpu.dot_dimension_numbers<[1], [0], [0], [1], [0, 0, 1, 1], [], []>} : vector<8x32xf32>, vector<32x32xf32>, vector<8x32xf32> -> vector<8x32xf32>
    %647 = vector.broadcast %599 : vector<1x32xf32> to vector<8x32xf32>
    %648 = arith.addf %646, %647 : vector<8x32xf32>
    %649 = arith.addf %595, %648 : vector<8x32xf32>
    %cst_242 = arith.constant dense<0.000000e+00> : vector<8xf32>
    %650 = vector.multi_reduction <add>, %649, %cst_242 [1] : vector<8x32xf32> to vector<8xf32>
    %651 = vector.shape_cast %650 : vector<8xf32> to vector<8x1xf32>
    %cst_243 = arith.constant 3.200000e+01 : f32
    %652 = vector.broadcast %cst_243 : f32 to vector<8x1xf32>
    %653 = arith.divf %651, %652 : vector<8x1xf32>
    %654 = vector.broadcast %653 : vector<8x1xf32> to vector<8x32xf32>
    %655 = arith.subf %649, %654 : vector<8x32xf32>
    %656 = arith.mulf %655, %655 : vector<8x32xf32>
    %cst_244 = arith.constant dense<0.000000e+00> : vector<8xf32>
    %657 = vector.multi_reduction <add>, %656, %cst_244 [1] : vector<8x32xf32> to vector<8xf32>
    %658 = vector.shape_cast %657 : vector<8xf32> to vector<8x1xf32>
    %cst_245 = arith.constant 3.200000e+01 : f32
    %659 = vector.broadcast %cst_245 : f32 to vector<8x1xf32>
    %660 = arith.divf %658, %659 : vector<8x1xf32>
    %cst_246 = arith.constant 9.99999974E-6 : f32
    %661 = vector.broadcast %cst_246 : f32 to vector<8x1xf32>
    %662 = arith.addf %660, %661 : vector<8x1xf32>
    %663 = math.rsqrt %662 : vector<8x1xf32>
    %664 = vector.broadcast %663 : vector<8x1xf32> to vector<8x32xf32>
    %665 = arith.mulf %655, %664 : vector<8x32xf32>
    %666 = vector.broadcast %600 : vector<1x32xf32> to vector<8x32xf32>
    %667 = arith.mulf %665, %666 : vector<8x32xf32>
    %668 = vector.broadcast %601 : vector<1x32xf32> to vector<8x32xf32>
    %669 = arith.addf %667, %668 : vector<8x32xf32>
    %c0_247 = arith.constant 0 : index
    %c0_248 = arith.constant 0 : index
    %670 = vector.load %arg45[%c0_247, %c0_248] : memref<1x32xf32, #tpu.memory_space<vmem>>, vector<1x32xf32>
    %c0_249 = arith.constant 0 : index
    %c0_250 = arith.constant 0 : index
    %671 = vector.load %arg46[%c0_249, %c0_250] : memref<1x32xf32, #tpu.memory_space<vmem>>, vector<1x32xf32>
    %c0_251 = arith.constant 0 : index
    %c0_252 = arith.constant 0 : index
    %672 = vector.load %arg47[%c0_251, %c0_252] : memref<32x2xf32, #tpu.memory_space<vmem>>, vector<32x2xf32>
    %c0_253 = arith.constant 0 : index
    %c0_254 = arith.constant 0 : index
    %673 = vector.load %arg48[%c0_253, %c0_254] : memref<1x2xf32, #tpu.memory_space<vmem>>, vector<1x2xf32>
    %cst_255 = arith.constant dense<0.000000e+00> : vector<8xf32>
    %674 = vector.multi_reduction <add>, %669, %cst_255 [1] : vector<8x32xf32> to vector<8xf32>
    %675 = vector.shape_cast %674 : vector<8xf32> to vector<8x1xf32>
    %cst_256 = arith.constant 3.200000e+01 : f32
    %676 = vector.broadcast %cst_256 : f32 to vector<8x1xf32>
    %677 = arith.divf %675, %676 : vector<8x1xf32>
    %678 = vector.broadcast %677 : vector<8x1xf32> to vector<8x32xf32>
    %679 = arith.subf %669, %678 : vector<8x32xf32>
    %680 = arith.mulf %679, %679 : vector<8x32xf32>
    %cst_257 = arith.constant dense<0.000000e+00> : vector<8xf32>
    %681 = vector.multi_reduction <add>, %680, %cst_257 [1] : vector<8x32xf32> to vector<8xf32>
    %682 = vector.shape_cast %681 : vector<8xf32> to vector<8x1xf32>
    %cst_258 = arith.constant 3.200000e+01 : f32
    %683 = vector.broadcast %cst_258 : f32 to vector<8x1xf32>
    %684 = arith.divf %682, %683 : vector<8x1xf32>
    %cst_259 = arith.constant 9.99999974E-6 : f32
    %685 = vector.broadcast %cst_259 : f32 to vector<8x1xf32>
    %686 = arith.addf %684, %685 : vector<8x1xf32>
    %687 = math.rsqrt %686 : vector<8x1xf32>
    %688 = vector.broadcast %687 : vector<8x1xf32> to vector<8x32xf32>
    %689 = arith.mulf %679, %688 : vector<8x32xf32>
    %690 = vector.broadcast %670 : vector<1x32xf32> to vector<8x32xf32>
    %691 = arith.mulf %689, %690 : vector<8x32xf32>
    %692 = vector.broadcast %671 : vector<1x32xf32> to vector<8x32xf32>
    %693 = arith.addf %691, %692 : vector<8x32xf32>
    %cst_260 = arith.constant dense<0.000000e+00> : vector<8x2xf32>
    %694 = tpu.matmul %693, %672, %cst_260 {dimension_numbers = #tpu.dot_dimension_numbers<[1], [0], [0], [1], [0, 0, 1, 1], [], []>} : vector<8x32xf32>, vector<32x2xf32>, vector<8x2xf32> -> vector<8x2xf32>
    %695 = vector.broadcast %673 : vector<1x2xf32> to vector<8x2xf32>
    %696 = arith.addf %694, %695 : vector<8x2xf32>
    %c0_261 = arith.constant 0 : index
    %c0_262 = arith.constant 0 : index
    %c0_263 = arith.constant 0 : index
    %697 = vector.load %arg49[%c0_261, %c0_262, %c0_263] : memref<1x8x2xf32, #tpu.memory_space<vmem>>, vector<1x8x2xf32>
    %698 = vector.shape_cast %697 : vector<1x8x2xf32> to vector<8x2xf32>
    %699 = vector.shape_cast %696 : vector<8x2xf32> to vector<1x8x2xf32>
    tpu.vector_store %arg49[%c0_261, %c0_262, %c0_263], %699 {strides = array<i32>} : memref<1x8x2xf32, #tpu.memory_space<vmem>>, vector<1x8x2xf32>,
    return
  }
  func.func @transform_0(%arg0: i32) -> (i32, i32, i32) {
    %c0_i32 = arith.constant 0 : i32
    %c0_i32_0 = arith.constant 0 : i32
    %c0_i32_1 = arith.constant 0 : i32
    return %arg0, %c0_i32, %c0_i32_0 : i32, i32, i32
  }
  func.func @transform_1(%arg0: i32) -> (i32, i32, i32) {
    %c0_i32 = arith.constant 0 : i32
    %c0_i32_0 = arith.constant 0 : i32
    %c0_i32_1 = arith.constant 0 : i32
    return %arg0, %c0_i32, %c0_i32_0 : i32, i32, i32
  }
  func.func @transform_2(%arg0: i32) -> (i32, i32) {
    %c0_i32 = arith.constant 0 : i32
    %c0_i32_0 = arith.constant 0 : i32
    %c0_i32_1 = arith.constant 0 : i32
    return %c0_i32, %c0_i32_0 : i32, i32
  }
  func.func @transform_3(%arg0: i32) -> (i32, i32) {
    %c0_i32 = arith.constant 0 : i32
    %c0_i32_0 = arith.constant 0 : i32
    %c0_i32_1 = arith.constant 0 : i32
    return %c0_i32, %c0_i32_0 : i32, i32
  }
  func.func @transform_4(%arg0: i32) -> (i32, i32) {
    %c0_i32 = arith.constant 0 : i32
    %c0_i32_0 = arith.constant 0 : i32
    %c0_i32_1 = arith.constant 0 : i32
    return %c0_i32, %c0_i32_0 : i32, i32
  }
  func.func @transform_5(%arg0: i32) -> (i32, i32) {
    %c0_i32 = arith.constant 0 : i32
    %c0_i32_0 = arith.constant 0 : i32
    %c0_i32_1 = arith.constant 0 : i32
    return %c0_i32, %c0_i32_0 : i32, i32
  }
  func.func @transform_6(%arg0: i32) -> (i32, i32) {
    %c0_i32 = arith.constant 0 : i32
    %c0_i32_0 = arith.constant 0 : i32
    %c0_i32_1 = arith.constant 0 : i32
    return %c0_i32, %c0_i32_0 : i32, i32
  }
  func.func @transform_7(%arg0: i32) -> (i32, i32) {
    %c0_i32 = arith.constant 0 : i32
    %c0_i32_0 = arith.constant 0 : i32
    %c0_i32_1 = arith.constant 0 : i32
    return %c0_i32, %c0_i32_0 : i32, i32
  }
  func.func @transform_8(%arg0: i32) -> (i32, i32) {
    %c0_i32 = arith.constant 0 : i32
    %c0_i32_0 = arith.constant 0 : i32
    %c0_i32_1 = arith.constant 0 : i32
    return %c0_i32, %c0_i32_0 : i32, i32
  }
  func.func @transform_9(%arg0: i32) -> (i32, i32) {
    %c0_i32 = arith.constant 0 : i32
    %c0_i32_0 = arith.constant 0 : i32
    %c0_i32_1 = arith.constant 0 : i32
    return %c0_i32, %c0_i32_0 : i32, i32
  }
  func.func @transform_10(%arg0: i32) -> (i32, i32) {
    %c0_i32 = arith.constant 0 : i32
    %c0_i32_0 = arith.constant 0 : i32
    %c0_i32_1 = arith.constant 0 : i32
    return %c0_i32, %c0_i32_0 : i32, i32
  }
  func.func @transform_11(%arg0: i32) -> (i32, i32) {
    %c0_i32 = arith.constant 0 : i32
    %c0_i32_0 = arith.constant 0 : i32
    %c0_i32_1 = arith.constant 0 : i32
    return %c0_i32, %c0_i32_0 : i32, i32
  }
  func.func @transform_12(%arg0: i32) -> (i32, i32) {
    %c0_i32 = arith.constant 0 : i32
    %c0_i32_0 = arith.constant 0 : i32
    %c0_i32_1 = arith.constant 0 : i32
    return %c0_i32, %c0_i32_0 : i32, i32
  }
  func.func @transform_13(%arg0: i32) -> (i32, i32) {
    %c0_i32 = arith.constant 0 : i32
    %c0_i32_0 = arith.constant 0 : i32
    %c0_i32_1 = arith.constant 0 : i32
    return %c0_i32, %c0_i32_0 : i32, i32
  }
  func.func @transform_14(%arg0: i32) -> (i32, i32) {
    %c0_i32 = arith.constant 0 : i32
    %c0_i32_0 = arith.constant 0 : i32
    %c0_i32_1 = arith.constant 0 : i32
    return %c0_i32, %c0_i32_0 : i32, i32
  }
  func.func @transform_15(%arg0: i32) -> (i32, i32) {
    %c0_i32 = arith.constant 0 : i32
    %c0_i32_0 = arith.constant 0 : i32
    %c0_i32_1 = arith.constant 0 : i32
    return %c0_i32, %c0_i32_0 : i32, i32
  }
  func.func @transform_16(%arg0: i32) -> (i32, i32) {
    %c0_i32 = arith.constant 0 : i32
    %c0_i32_0 = arith.constant 0 : i32
    %c0_i32_1 = arith.constant 0 : i32
    return %c0_i32, %c0_i32_0 : i32, i32
  }
  func.func @transform_17(%arg0: i32) -> (i32, i32) {
    %c0_i32 = arith.constant 0 : i32
    %c0_i32_0 = arith.constant 0 : i32
    %c0_i32_1 = arith.constant 0 : i32
    return %c0_i32, %c0_i32_0 : i32, i32
  }
  func.func @transform_18(%arg0: i32) -> (i32, i32) {
    %c0_i32 = arith.constant 0 : i32
    %c0_i32_0 = arith.constant 0 : i32
    %c0_i32_1 = arith.constant 0 : i32
    return %c0_i32, %c0_i32_0 : i32, i32
  }
  func.func @transform_19(%arg0: i32) -> (i32, i32) {
    %c0_i32 = arith.constant 0 : i32
    %c0_i32_0 = arith.constant 0 : i32
    %c0_i32_1 = arith.constant 0 : i32
    return %c0_i32, %c0_i32_0 : i32, i32
  }
  func.func @transform_20(%arg0: i32) -> (i32, i32) {
    %c0_i32 = arith.constant 0 : i32
    %c0_i32_0 = arith.constant 0 : i32
    %c0_i32_1 = arith.constant 0 : i32
    return %c0_i32, %c0_i32_0 : i32, i32
  }
  func.func @transform_21(%arg0: i32) -> (i32, i32) {
    %c0_i32 = arith.constant 0 : i32
    %c0_i32_0 = arith.constant 0 : i32
    %c0_i32_1 = arith.constant 0 : i32
    return %c0_i32, %c0_i32_0 : i32, i32
  }
  func.func @transform_22(%arg0: i32) -> (i32, i32) {
    %c0_i32 = arith.constant 0 : i32
    %c0_i32_0 = arith.constant 0 : i32
    %c0_i32_1 = arith.constant 0 : i32
    return %c0_i32, %c0_i32_0 : i32, i32
  }
  func.func @transform_23(%arg0: i32) -> (i32, i32) {
    %c0_i32 = arith.constant 0 : i32
    %c0_i32_0 = arith.constant 0 : i32
    %c0_i32_1 = arith.constant 0 : i32
    return %c0_i32, %c0_i32_0 : i32, i32
  }
  func.func @transform_24(%arg0: i32) -> (i32, i32) {
    %c0_i32 = arith.constant 0 : i32
    %c0_i32_0 = arith.constant 0 : i32
    %c0_i32_1 = arith.constant 0 : i32
    return %c0_i32, %c0_i32_0 : i32, i32
  }
  func.func @transform_25(%arg0: i32) -> (i32, i32) {
    %c0_i32 = arith.constant 0 : i32
    %c0_i32_0 = arith.constant 0 : i32
    %c0_i32_1 = arith.constant 0 : i32
    return %c0_i32, %c0_i32_0 : i32, i32
  }
  func.func @transform_26(%arg0: i32) -> (i32, i32) {
    %c0_i32 = arith.constant 0 : i32
    %c0_i32_0 = arith.constant 0 : i32
    %c0_i32_1 = arith.constant 0 : i32
    return %c0_i32, %c0_i32_0 : i32, i32
  }
  func.func @transform_27(%arg0: i32) -> (i32, i32) {
    %c0_i32 = arith.constant 0 : i32
    %c0_i32_0 = arith.constant 0 : i32
    %c0_i32_1 = arith.constant 0 : i32
    return %c0_i32, %c0_i32_0 : i32, i32
  }
  func.func @transform_28(%arg0: i32) -> (i32, i32) {
    %c0_i32 = arith.constant 0 : i32
    %c0_i32_0 = arith.constant 0 : i32
    %c0_i32_1 = arith.constant 0 : i32
    return %c0_i32, %c0_i32_0 : i32, i32
  }
  func.func @transform_29(%arg0: i32) -> (i32, i32) {
    %c0_i32 = arith.constant 0 : i32
    %c0_i32_0 = arith.constant 0 : i32
    %c0_i32_1 = arith.constant 0 : i32
    return %c0_i32, %c0_i32_0 : i32, i32
  }
  func.func @transform_30(%arg0: i32) -> (i32, i32) {
    %c0_i32 = arith.constant 0 : i32
    %c0_i32_0 = arith.constant 0 : i32
    %c0_i32_1 = arith.constant 0 : i32
    return %c0_i32, %c0_i32_0 : i32, i32
  }
  func.func @transform_31(%arg0: i32) -> (i32, i32) {
    %c0_i32 = arith.constant 0 : i32
    %c0_i32_0 = arith.constant 0 : i32
    %c0_i32_1 = arith.constant 0 : i32
    return %c0_i32, %c0_i32_0 : i32, i32
  }
  func.func @transform_32(%arg0: i32) -> (i32, i32) {
    %c0_i32 = arith.constant 0 : i32
    %c0_i32_0 = arith.constant 0 : i32
    %c0_i32_1 = arith.constant 0 : i32
    return %c0_i32, %c0_i32_0 : i32, i32
  }
  func.func @transform_33(%arg0: i32) -> (i32, i32) {
    %c0_i32 = arith.constant 0 : i32
    %c0_i32_0 = arith.constant 0 : i32
    %c0_i32_1 = arith.constant 0 : i32
    return %c0_i32, %c0_i32_0 : i32, i32
  }
  func.func @transform_34(%arg0: i32) -> (i32, i32) {
    %c0_i32 = arith.constant 0 : i32
    %c0_i32_0 = arith.constant 0 : i32
    %c0_i32_1 = arith.constant 0 : i32
    return %c0_i32, %c0_i32_0 : i32, i32
  }
  func.func @transform_35(%arg0: i32) -> (i32, i32) {
    %c0_i32 = arith.constant 0 : i32
    %c0_i32_0 = arith.constant 0 : i32
    %c0_i32_1 = arith.constant 0 : i32
    return %c0_i32, %c0_i32_0 : i32, i32
  }
  func.func @transform_36(%arg0: i32) -> (i32, i32) {
    %c0_i32 = arith.constant 0 : i32
    %c0_i32_0 = arith.constant 0 : i32
    %c0_i32_1 = arith.constant 0 : i32
    return %c0_i32, %c0_i32_0 : i32, i32
  }
  func.func @transform_37(%arg0: i32) -> (i32, i32) {
    %c0_i32 = arith.constant 0 : i32
    %c0_i32_0 = arith.constant 0 : i32
    %c0_i32_1 = arith.constant 0 : i32
    return %c0_i32, %c0_i32_0 : i32, i32
  }
  func.func @transform_38(%arg0: i32) -> (i32, i32) {
    %c0_i32 = arith.constant 0 : i32
    %c0_i32_0 = arith.constant 0 : i32
    %c0_i32_1 = arith.constant 0 : i32
    return %c0_i32, %c0_i32_0 : i32, i32
  }
  func.func @transform_39(%arg0: i32) -> (i32, i32) {
    %c0_i32 = arith.constant 0 : i32
    %c0_i32_0 = arith.constant 0 : i32
    %c0_i32_1 = arith.constant 0 : i32
    return %c0_i32, %c0_i32_0 : i32, i32
  }
  func.func @transform_40(%arg0: i32) -> (i32, i32) {
    %c0_i32 = arith.constant 0 : i32
    %c0_i32_0 = arith.constant 0 : i32
    %c0_i32_1 = arith.constant 0 : i32
    return %c0_i32, %c0_i32_0 : i32, i32
  }
  func.func @transform_41(%arg0: i32) -> (i32, i32) {
    %c0_i32 = arith.constant 0 : i32
    %c0_i32_0 = arith.constant 0 : i32
    %c0_i32_1 = arith.constant 0 : i32
    return %c0_i32, %c0_i32_0 : i32, i32
  }
  func.func @transform_42(%arg0: i32) -> (i32, i32) {
    %c0_i32 = arith.constant 0 : i32
    %c0_i32_0 = arith.constant 0 : i32
    %c0_i32_1 = arith.constant 0 : i32
    return %c0_i32, %c0_i32_0 : i32, i32
  }
  func.func @transform_43(%arg0: i32) -> (i32, i32) {
    %c0_i32 = arith.constant 0 : i32
    %c0_i32_0 = arith.constant 0 : i32
    %c0_i32_1 = arith.constant 0 : i32
    return %c0_i32, %c0_i32_0 : i32, i32
  }
  func.func @transform_44(%arg0: i32) -> (i32, i32) {
    %c0_i32 = arith.constant 0 : i32
    %c0_i32_0 = arith.constant 0 : i32
    %c0_i32_1 = arith.constant 0 : i32
    return %c0_i32, %c0_i32_0 : i32, i32
  }
  func.func @transform_45(%arg0: i32) -> (i32, i32) {
    %c0_i32 = arith.constant 0 : i32
    %c0_i32_0 = arith.constant 0 : i32
    %c0_i32_1 = arith.constant 0 : i32
    return %c0_i32, %c0_i32_0 : i32, i32
  }
  func.func @transform_46(%arg0: i32) -> (i32, i32) {
    %c0_i32 = arith.constant 0 : i32
    %c0_i32_0 = arith.constant 0 : i32
    %c0_i32_1 = arith.constant 0 : i32
    return %c0_i32, %c0_i32_0 : i32, i32
  }
  func.func @transform_47(%arg0: i32) -> (i32, i32) {
    %c0_i32 = arith.constant 0 : i32
    %c0_i32_0 = arith.constant 0 : i32
    %c0_i32_1 = arith.constant 0 : i32
    return %c0_i32, %c0_i32_0 : i32, i32
  }
  func.func @transform_48(%arg0: i32) -> (i32, i32, i32) {
    %c0_i32 = arith.constant 0 : i32
    %c0_i32_0 = arith.constant 0 : i32
    %c0_i32_1 = arith.constant 0 : i32
    return %arg0, %c0_i32, %c0_i32_0 : i32, i32, i32
  }
}

</mosaic_0001>

<llo_original>
// kernel: informer_decoder_forward.1
$region0: #{informer_decoder_forward.1}
  #allocation0 [shape = 'u32[]', space=smem, size = 0x4, offset = 0x4, fixed_abs, tag = 'smem constant byte address 0x4 - core index']
  #allocation1 [shape = 'u32[72,128]{1,0:T(1,128)}', space=vmem, size = 0x9000, scoped, tag = 'internal scratch']
  %s0 = inlined_call_operand.smem [shape: u32[49], index: -1, kind: input, shape index: {}]
  %s1 = sld [smem:[%s0]]
  %s2 = scalar_lea.smem %s0, 1
  %s3 = sld [smem:[%s2]]
  %s4 = scalar_lea.smem %s0, 2
  %s5 = sld [smem:[%s4]]
  %s6 = scalar_lea.smem %s0, 3
  %s7 = sld [smem:[%s6]]
  %s8 = scalar_lea.smem %s0, 4
  %s9 = sld [smem:[%s8]]
  %s10 = scalar_lea.smem %s0, 5
  %s11 = sld [smem:[%s10]]
  %s12 = scalar_lea.smem %s0, 6
  %s13 = sld [smem:[%s12]]
  %s14 = scalar_lea.smem %s0, 7
  %s15 = sld [smem:[%s14]]
  %s16 = scalar_lea.smem %s0, 8
  %s17 = sld [smem:[%s16]]
  %s18 = scalar_lea.smem %s0, 9
  %s19 = sld [smem:[%s18]]
  %s20 = scalar_lea.smem %s0, 10
  %s21 = sld [smem:[%s20]]
  %s22 = scalar_lea.smem %s0, 11
  %s23 = sld [smem:[%s22]]
  %s24 = scalar_lea.smem %s0, 12
  %s25 = sld [smem:[%s24]]
  %s26 = scalar_lea.smem %s0, 13
  %s27 = sld [smem:[%s26]]
  %s28 = scalar_lea.smem %s0, 14
  %s29 = sld [smem:[%s28]]
  %s30 = scalar_lea.smem %s0, 15
  %s31 = sld [smem:[%s30]]
  %s32 = scalar_lea.smem %s0, 16
  %s33 = sld [smem:[%s32]]
  %s34 = scalar_lea.smem %s0, 17
  %s35 = sld [smem:[%s34]]
  %s36 = scalar_lea.smem %s0, 18
  %s37 = sld [smem:[%s36]]
  %s38 = scalar_lea.smem %s0, 19
  %s39 = sld [smem:[%s38]]
  %s40 = scalar_lea.smem %s0, 20
  %s41 = sld [smem:[%s40]]
  %s42 = scalar_lea.smem %s0, 21
  %s43 = sld [smem:[%s42]]
  %s44 = scalar_lea.smem %s0, 22
  %s45 = sld [smem:[%s44]]
  %s46 = scalar_lea.smem %s0, 23
  %s47 = sld [smem:[%s46]]
  %s48 = scalar_lea.smem %s0, 24
  %s49 = sld [smem:[%s48]]
  %s50 = scalar_lea.smem %s0, 25
  %s51 = sld [smem:[%s50]]
  %s52 = scalar_lea.smem %s0, 26
  %s53 = sld [smem:[%s52]]
  %s54 = scalar_lea.smem %s0, 27
  %s55 = sld [smem:[%s54]]
  %s56 = scalar_lea.smem %s0, 28
  %s57 = sld [smem:[%s56]]
  %s58 = scalar_lea.smem %s0, 29
  %s59 = sld [smem:[%s58]]
  %s60 = scalar_lea.smem %s0, 30
  %s61 = sld [smem:[%s60]]
  %s62 = scalar_lea.smem %s0, 31
  %s63 = sld [smem:[%s62]]
  %s64 = scalar_lea.smem %s0, 32
  %s65 = sld [smem:[%s64]]
  %s66 = scalar_lea.smem %s0, 33
  %s67 = sld [smem:[%s66]]
  %s68 = scalar_lea.smem %s0, 34
  %s69 = sld [smem:[%s68]]
  %s70 = scalar_lea.smem %s0, 35
  %s71 = sld [smem:[%s70]]
  %s72 = scalar_lea.smem %s0, 36
  %s73 = sld [smem:[%s72]]
  %s74 = scalar_lea.smem %s0, 37
  %s75 = sld [smem:[%s74]]
  %s76 = scalar_lea.smem %s0, 38
  %s77 = sld [smem:[%s76]]
  %s78 = scalar_lea.smem %s0, 39
  %s79 = sld [smem:[%s78]]
  %s80 = scalar_lea.smem %s0, 40
  %s81 = sld [smem:[%s80]]
  %s82 = scalar_lea.smem %s0, 41
  %s83 = sld [smem:[%s82]]
  %s84 = scalar_lea.smem %s0, 42
  %s85 = sld [smem:[%s84]]
  %s86 = scalar_lea.smem %s0, 43
  %s87 = sld [smem:[%s86]]
  %s88 = scalar_lea.smem %s0, 44
  %s89 = sld [smem:[%s88]]
  %s90 = scalar_lea.smem %s0, 45
  %s91 = sld [smem:[%s90]]
  %s92 = scalar_lea.smem %s0, 46
  %s93 = sld [smem:[%s92]]
  %s94 = scalar_lea.smem %s0, 47
  %s95 = sld [smem:[%s94]]
  %s96 = scalar_lea.smem %s0, 48
  %s97 = sld [smem:[%s96]]
  %s98 = sld [smem:[#allocation0]]
  $region257: #{informer_decoder_forward.1} parent=0
    _
  %s100 = ssub.s32 1, %s98
  %s101 = scalar_select 0, %s100, %s98
  $region1: #{informer_decoder_forward.1} parent=0
    #allocation2 [shape = 'u8[16384]{0}', space=vmem, size = 0x4000, scoped, tag = 'input window, operand 18, single buffered']
    #allocation3 [shape = 's32[2]{0}', space=sflag, size = 0x8, scoped, tag = 'scoped memory for informer_decoder_forward.1']
    #allocation4 [shape = 'u8[16384]{0}', space=vmem, size = 0x4000, scoped, tag = 'input window, operand 20, single buffered']
    #allocation5 [shape = 's32[1]{0}', space=sflag, size = 0x4, scoped, tag = 'scoped memory for informer_decoder_forward.1']
    #allocation6 [shape = 'u8[16384]{0}', space=vmem, size = 0x4000, scoped, tag = 'input window, operand 26, single buffered']
    #allocation7 [shape = 'u8[16384]{0}', space=vmem, size = 0x4000, scoped, tag = 'input window, operand 30, single buffered']
    #allocation8 [shape = 's32[1]{0}', space=sflag, size = 0x4, scoped, tag = 'scoped memory for informer_decoder_forward.1']
    #allocation9 [shape = 'u8[16384]{0}', space=vmem, size = 0x4000, scoped, tag = 'input window, operand 32, single buffered']
    #allocation10 [shape = 'u8[16384]{0}', space=vmem, size = 0x4000, scoped, tag = 'input window, operand 34, single buffered']
    #allocation11 [shape = 's32[1]{0}', space=sflag, size = 0x4, scoped, tag = 'scoped memory for informer_decoder_forward.1']
    #allocation12 [shape = 'u8[16384]{0}', space=vmem, size = 0x4000, scoped, tag = 'input window, operand 38, single buffered']
    #allocation13 [shape = 'u8[16384]{0}', space=vmem, size = 0x4000, scoped, tag = 'input window, operand 40, single buffered']
    #allocation14 [shape = 's32[1]{0}', space=sflag, size = 0x4, scoped, tag = 'scoped memory for informer_decoder_forward.1']
    %102 = vsyncpa [#allocation3], 0
    %103 = vsyncpa [#allocation5], 0
    %104 = vsyncpa [#allocation8], 0
    %105 = vsyncpa [#allocation11], 0
    %106 = vsyncpa [#allocation14], 0
    loop: start=0, step=1, limit=4
    $region2: #{informer_decoder_forward.1} parent=1 // loop_pre_header
      _
    $region3: #{informer_decoder_forward.1} parent=1 // loop_header
      %s108 = sphi 0, %s112
      %p109 = scmp.ge.s32.totalorder %s108, 4
      %s118 = sphi 0, %s120
      %s121 = sphi 0, %s118
      %s122 = sphi 0, %s121
      %s138 = sphi 0, %s122
      %s144 = sphi 0, %s146
      %s147 = sphi 0, %s144
      %s148 = sphi 0, %s147
      %s164 = sphi 0, %s148
      %s168 = sphi 0, %s168
      %s170 = sphi 0, %s168
      %s171 = sphi 0, %s170
      %s185 = sphi 0, %s171
      %s189 = sphi 0, %s189
      %s191 = sphi 0, %s189
      %s192 = sphi 0, %s191
      %s206 = sphi 0, %s192
      %s210 = sphi 0, %s210
      %s212 = sphi 0, %s210
      %s213 = sphi 0, %s212
      %s227 = sphi 0, %s213
      %s231 = sphi 0, %s231
      %s233 = sphi 0, %s231
      %s234 = sphi 0, %s233
      %s248 = sphi 0, %s234
      %s252 = sphi 0, %s252
      %s254 = sphi 0, %s252
      %s255 = sphi 0, %s254
      %s269 = sphi 0, %s255
      %s273 = sphi 0, %s273
      %s275 = sphi 0, %s273
      %s276 = sphi 0, %s275
      %s290 = sphi 0, %s276
      %s294 = sphi 0, %s294
      %s296 = sphi 0, %s294
      %s297 = sphi 0, %s296
      %s311 = sphi 0, %s297
      %s315 = sphi 0, %s315
      %s317 = sphi 0, %s315
      %s318 = sphi 0, %s317
      %s332 = sphi 0, %s318
      %s336 = sphi 0, %s336
      %s338 = sphi 0, %s336
      %s339 = sphi 0, %s338
      %s353 = sphi 0, %s339
      %s357 = sphi 0, %s357
      %s359 = sphi 0, %s357
      %s360 = sphi 0, %s359
      %s374 = sphi 0, %s360
      %s378 = sphi 0, %s378
      %s380 = sphi 0, %s378
      %s381 = sphi 0, %s380
      %s395 = sphi 0, %s381
      %s399 = sphi 0, %s399
      %s401 = sphi 0, %s399
      %s402 = sphi 0, %s401
      %s416 = sphi 0, %s402
      %s420 = sphi 0, %s420
      %s422 = sphi 0, %s420
      %s423 = sphi 0, %s422
      %s437 = sphi 0, %s423
      %s441 = sphi 0, %s441
      %s443 = sphi 0, %s441
      %s444 = sphi 0, %s443
      %s458 = sphi 0, %s444
      %s462 = sphi 0, %s462
      %s464 = sphi 0, %s462
      %s465 = sphi 0, %s464
      %s479 = sphi 0, %s465
      %s483 = sphi 0, %s483
      %s485 = sphi 0, %s483
      %s486 = sphi 0, %s485
      %s500 = sphi 0, %s486
      %s504 = sphi 0, %s504
      %s506 = sphi 0, %s504
      %s507 = sphi 0, %s506
      %s521 = sphi 0, %s507
      %s525 = sphi 0, %s525
      %s527 = sphi 0, %s525
      %s528 = sphi 0, %s527
      %s542 = sphi 0, %s528
      %s546 = sphi 0, %s546
      %s548 = sphi 0, %s546
      %s549 = sphi 0, %s548
      %s563 = sphi 0, %s549
      %s567 = sphi 0, %s567
      %s569 = sphi 0, %s567
      %s570 = sphi 0, %s569
      %s584 = sphi 0, %s570
      %s588 = sphi 0, %s588
      %s590 = sphi 0, %s588
      %s591 = sphi 0, %s590
      %s605 = sphi 0, %s591
      %s609 = sphi 0, %s609
      %s611 = sphi 0, %s609
      %s612 = sphi 0, %s611
      %s626 = sphi 0, %s612
      %s630 = sphi 0, %s630
      %s632 = sphi 0, %s630
      %s633 = sphi 0, %s632
      %s647 = sphi 0, %s633
      %s651 = sphi 0, %s651
      %s653 = sphi 0, %s651
      %s654 = sphi 0, %s653
      %s668 = sphi 0, %s654
      %s672 = sphi 0, %s672
      %s674 = sphi 0, %s672
      %s675 = sphi 0, %s674
      %s689 = sphi 0, %s675
      %s693 = sphi 0, %s693
      %s695 = sphi 0, %s693
      %s696 = sphi 0, %s695
      %s710 = sphi 0, %s696
      %s714 = sphi 0, %s714
      %s716 = sphi 0, %s714
      %s717 = sphi 0, %s716
      %s731 = sphi 0, %s717
      %s735 = sphi 0, %s735
      %s737 = sphi 0, %s735
      %s738 = sphi 0, %s737
      %s752 = sphi 0, %s738
      %s756 = sphi 0, %s756
      %s758 = sphi 0, %s756
      %s759 = sphi 0, %s758
      %s773 = sphi 0, %s759
      %s777 = sphi 0, %s777
      %s779 = sphi 0, %s777
      %s780 = sphi 0, %s779
      %s794 = sphi 0, %s780
      %s798 = sphi 0, %s798
      %s800 = sphi 0, %s798
      %s801 = sphi 0, %s800
      %s815 = sphi 0, %s801
      %s819 = sphi 0, %s819
      %s821 = sphi 0, %s819
      %s822 = sphi 0, %s821
      %s836 = sphi 0, %s822
      %s840 = sphi 0, %s840
      %s842 = sphi 0, %s840
      %s843 = sphi 0, %s842
      %s857 = sphi 0, %s843
      %s861 = sphi 0, %s861
      %s863 = sphi 0, %s861
      %s864 = sphi 0, %s863
      %s878 = sphi 0, %s864
      %s882 = sphi 0, %s882
      %s884 = sphi 0, %s882
      %s885 = sphi 0, %s884
      %s899 = sphi 0, %s885
      %s903 = sphi 0, %s903
      %s905 = sphi 0, %s903
      %s906 = sphi 0, %s905
      %s920 = sphi 0, %s906
      %s924 = sphi 0, %s924
      %s926 = sphi 0, %s924
      %s927 = sphi 0, %s926
      %s941 = sphi 0, %s927
      %s945 = sphi 0, %s945
      %s947 = sphi 0, %s945
      %s948 = sphi 0, %s947
      %s962 = sphi 0, %s948
      %s966 = sphi 0, %s966
      %s968 = sphi 0, %s966
      %s969 = sphi 0, %s968
      %s983 = sphi 0, %s969
      %s987 = sphi 0, %s987
      %s989 = sphi 0, %s987
      %s990 = sphi 0, %s989
      %s1004 = sphi 0, %s990
      %s1008 = sphi 0, %s1008
      %s1010 = sphi 0, %s1008
      %s1011 = sphi 0, %s1010
      %s1025 = sphi 0, %s1011
      %s1029 = sphi 0, %s1029
      %s1031 = sphi 0, %s1029
      %s1032 = sphi 0, %s1031
      %s1046 = sphi 0, %s1032
      %s1050 = sphi 0, %s1050
      %s1052 = sphi 0, %s1050
      %s1053 = sphi 0, %s1052
      %s1067 = sphi 0, %s1053
      %s1071 = sphi 0, %s1071
      %s1073 = sphi 0, %s1071
      %s1074 = sphi 0, %s1073
      %s1088 = sphi 0, %s1074
      %s1092 = sphi 0, %s1092
      %s1094 = sphi 0, %s1092
      %s1095 = sphi 0, %s1094
      %s1109 = sphi 0, %s1095
      %s1113 = sphi 0, %s1113
      %s1115 = sphi 0, %s1113
      %s1116 = sphi 0, %s1115
      %s1130 = sphi 0, %s1116
      %s1136 = sphi 0, %s1138
      %s1139 = sphi 0, %s1136
      %s1140 = sphi 0, %s1139
      %s1156 = sphi 0, %s1140
    $region4: #{informer_decoder_forward.1} parent=1 // loop_header_branch
      %111 = sbr.rel (%p109) target = $region8
    $region5: #{informer_decoder_forward.1} parent=1 // loop_body
      %s113 = ssub.s32 %s108, 1
      %s114 = ssub.s32 %s108, 2
      %s115 = sadd.s32 %s108, 1
      %s116 = ssub.s32 %s108, %s115
      %p117 = scmp.eq.s32.totalorder %s116, 0
      %s119 = sadd.s32 %s118, 1
      %s120 = scalar_select %p117, %s118, %s119
      %p123 = pneg %p117
      %p124 = scmp.eq.s32.totalorder %s108, 1
      %p125 = por %p123, %p124
      %p126 = scmp.ne.s32.totalorder %s118, %s121
      %p127 = scmp.eq.s32.totalorder %s108, 0
      %p128 = por %p126, %p127
      %p129 = scmp.ne.s32.totalorder %s118, %s121
      %p130 = scmp.eq.s32.totalorder %s113, 1
      %p131 = por %p129, %p130
      %p132 = scmp.ne.s32.totalorder %s121, %s122
      %p133 = scmp.eq.s32.totalorder %s113, 0
      %p134 = por %p132, %p133
      %p135 = scmp.ne.s32.totalorder %s121, %s122
      %p136 = scmp.eq.s32.totalorder %s114, 1
      %p137 = por %p135, %p136
      %p139 = scmp.ne.s32.totalorder %s122, %s138
      %p140 = scmp.eq.s32.totalorder %s114, 0
      %p141 = por %p139, %p140
      %s142 = ssub.s32 %s108, %s115
      %p143 = scmp.eq.s32.totalorder %s142, 0
      %s145 = sadd.s32 %s144, 1
      %s146 = scalar_select %p143, %s144, %s145
      %p149 = pneg %p143
      %p150 = scmp.eq.s32.totalorder %s108, 1
      %p151 = por %p149, %p150
      %p152 = scmp.ne.s32.totalorder %s144, %s147
      %p153 = scmp.eq.s32.totalorder %s108, 0
      %p154 = por %p152, %p153
      %p155 = scmp.ne.s32.totalorder %s144, %s147
      %p156 = scmp.eq.s32.totalorder %s113, 1
      %p157 = por %p155, %p156
      %p158 = scmp.ne.s32.totalorder %s147, %s148
      %p159 = scmp.eq.s32.totalorder %s113, 0
      %p160 = por %p158, %p159
      %p161 = scmp.ne.s32.totalorder %s147, %s148
      %p162 = scmp.eq.s32.totalorder %s114, 1
      %p163 = por %p161, %p162
      %p165 = scmp.ne.s32.totalorder %s148, %s164
      %p166 = scmp.eq.s32.totalorder %s114, 0
      %p167 = por %p165, %p166
      %s169 = sadd.s32 %s168, 1
      %p172 = scmp.eq.s32.totalorder %s108, 1
      %p173 = scmp.ne.s32.totalorder %s168, %s170
      %p174 = scmp.eq.s32.totalorder %s108, 0
      %p175 = por %p173, %p174
      %p176 = scmp.ne.s32.totalorder %s168, %s170
      %p177 = scmp.eq.s32.totalorder %s113, 1
      %p178 = por %p176, %p177
      %p179 = scmp.ne.s32.totalorder %s170, %s171
      %p180 = scmp.eq.s32.totalorder %s113, 0
      %p181 = por %p179, %p180
      %p182 = scmp.ne.s32.totalorder %s170, %s171
      %p183 = scmp.eq.s32.totalorder %s114, 1
      %p184 = por %p182, %p183
      %p186 = scmp.ne.s32.totalorder %s171, %s185
      %p187 = scmp.eq.s32.totalorder %s114, 0
      %p188 = por %p186, %p187
      %s190 = sadd.s32 %s189, 1
      %p193 = scmp.eq.s32.totalorder %s108, 1
      %p194 = scmp.ne.s32.totalorder %s189, %s191
      %p195 = scmp.eq.s32.totalorder %s108, 0
      %p196 = por %p194, %p195
      %p197 = scmp.ne.s32.totalorder %s189, %s191
      %p198 = scmp.eq.s32.totalorder %s113, 1
      %p199 = por %p197, %p198
      %p200 = scmp.ne.s32.totalorder %s191, %s192
      %p201 = scmp.eq.s32.totalorder %s113, 0
      %p202 = por %p200, %p201
      %p203 = scmp.ne.s32.totalorder %s191, %s192
      %p204 = scmp.eq.s32.totalorder %s114, 1
      %p205 = por %p203, %p204
      %p207 = scmp.ne.s32.totalorder %s192, %s206
      %p208 = scmp.eq.s32.totalorder %s114, 0
      %p209 = por %p207, %p208
      %s211 = sadd.s32 %s210, 1
      %p214 = scmp.eq.s32.totalorder %s108, 1
      %p215 = scmp.ne.s32.totalorder %s210, %s212
      %p216 = scmp.eq.s32.totalorder %s108, 0
      %p217 = por %p215, %p216
      %p218 = scmp.ne.s32.totalorder %s210, %s212
      %p219 = scmp.eq.s32.totalorder %s113, 1
      %p220 = por %p218, %p219
      %p221 = scmp.ne.s32.totalorder %s212, %s213
      %p222 = scmp.eq.s32.totalorder %s113, 0
      %p223 = por %p221, %p222
      %p224 = scmp.ne.s32.totalorder %s212, %s213
      %p225 = scmp.eq.s32.totalorder %s114, 1
      %p226 = por %p224, %p225
      %p228 = scmp.ne.s32.totalorder %s213, %s227
      %p229 = scmp.eq.s32.totalorder %s114, 0
      %p230 = por %p228, %p229
      %s232 = sadd.s32 %s231, 1
      %p235 = scmp.eq.s32.totalorder %s108, 1
      %p236 = scmp.ne.s32.totalorder %s231, %s233
      %p237 = scmp.eq.s32.totalorder %s108, 0
      %p238 = por %p236, %p237
      %p239 = scmp.ne.s32.totalorder %s231, %s233
      %p240 = scmp.eq.s32.totalorder %s113, 1
      %p241 = por %p239, %p240
      %p242 = scmp.ne.s32.totalorder %s233, %s234
      %p243 = scmp.eq.s32.totalorder %s113, 0
      %p244 = por %p242, %p243
      %p245 = scmp.ne.s32.totalorder %s233, %s234
      %p246 = scmp.eq.s32.totalorder %s114, 1
      %p247 = por %p245, %p246
      %p249 = scmp.ne.s32.totalorder %s234, %s248
      %p250 = scmp.eq.s32.totalorder %s114, 0
      %p251 = por %p249, %p250
      %s253 = sadd.s32 %s252, 1
      %p256 = scmp.eq.s32.totalorder %s108, 1
      %p257 = scmp.ne.s32.totalorder %s252, %s254
      %p258 = scmp.eq.s32.totalorder %s108, 0
      %p259 = por %p257, %p258
      %p260 = scmp.ne.s32.totalorder %s252, %s254
      %p261 = scmp.eq.s32.totalorder %s113, 1
      %p262 = por %p260, %p261
      %p263 = scmp.ne.s32.totalorder %s254, %s255
      %p264 = scmp.eq.s32.totalorder %s113, 0
      %p265 = por %p263, %p264
      %p266 = scmp.ne.s32.totalorder %s254, %s255
      %p267 = scmp.eq.s32.totalorder %s114, 1
      %p268 = por %p266, %p267
      %p270 = scmp.ne.s32.totalorder %s255, %s269
      %p271 = scmp.eq.s32.totalorder %s114, 0
      %p272 = por %p270, %p271
      %s274 = sadd.s32 %s273, 1
      %p277 = scmp.eq.s32.totalorder %s108, 1
      %p278 = scmp.ne.s32.totalorder %s273, %s275
      %p279 = scmp.eq.s32.totalorder %s108, 0
      %p280 = por %p278, %p279
      %p281 = scmp.ne.s32.totalorder %s273, %s275
      %p282 = scmp.eq.s32.totalorder %s113, 1
      %p283 = por %p281, %p282
      %p284 = scmp.ne.s32.totalorder %s275, %s276
      %p285 = scmp.eq.s32.totalorder %s113, 0
      %p286 = por %p284, %p285
      %p287 = scmp.ne.s32.totalorder %s275, %s276
      %p288 = scmp.eq.s32.totalorder %s114, 1
      %p289 = por %p287, %p288
      %p291 = scmp.ne.s32.totalorder %s276, %s290
      %p292 = scmp.eq.s32.totalorder %s114, 0
      %p293 = por %p291, %p292
      %s295 = sadd.s32 %s294, 1
      %p298 = scmp.eq.s32.totalorder %s108, 1
      %p299 = scmp.ne.s32.totalorder %s294, %s296
      %p300 = scmp.eq.s32.totalorder %s108, 0
      %p301 = por %p299, %p300
      %p302 = scmp.ne.s32.totalorder %s294, %s296
      %p303 = scmp.eq.s32.totalorder %s113, 1
      %p304 = por %p302, %p303
      %p305 = scmp.ne.s32.totalorder %s296, %s297
      %p306 = scmp.eq.s32.totalorder %s113, 0
      %p307 = por %p305, %p306
      %p308 = scmp.ne.s32.totalorder %s296, %s297
      %p309 = scmp.eq.s32.totalorder %s114, 1
      %p310 = por %p308, %p309
      %p312 = scmp.ne.s32.totalorder %s297, %s311
      %p313 = scmp.eq.s32.totalorder %s114, 0
      %p314 = por %p312, %p313
      %s316 = sadd.s32 %s315, 1
      %p319 = scmp.eq.s32.totalorder %s108, 1
      %p320 = scmp.ne.s32.totalorder %s315, %s317
      %p321 = scmp.eq.s32.totalorder %s108, 0
      %p322 = por %p320, %p321
      %p323 = scmp.ne.s32.totalorder %s315, %s317
      %p324 = scmp.eq.s32.totalorder %s113, 1
      %p325 = por %p323, %p324
      %p326 = scmp.ne.s32.totalorder %s317, %s318
      %p327 = scmp.eq.s32.totalorder %s113, 0
      %p328 = por %p326, %p327
      %p329 = scmp.ne.s32.totalorder %s317, %s318
      %p330 = scmp.eq.s32.totalorder %s114, 1
      %p331 = por %p329, %p330
      %p333 = scmp.ne.s32.totalorder %s318, %s332
      %p334 = scmp.eq.s32.totalorder %s114, 0
      %p335 = por %p333, %p334
      %s337 = sadd.s32 %s336, 1
      %p340 = scmp.eq.s32.totalorder %s108, 1
      %p341 = scmp.ne.s32.totalorder %s336, %s338
      %p342 = scmp.eq.s32.totalorder %s108, 0
      %p343 = por %p341, %p342
      %p344 = scmp.ne.s32.totalorder %s336, %s338
      %p345 = scmp.eq.s32.totalorder %s113, 1
      %p346 = por %p344, %p345
      %p347 = scmp.ne.s32.totalorder %s338, %s339
      %p348 = scmp.eq.s32.totalorder %s113, 0
      %p349 = por %p347, %p348
      %p350 = scmp.ne.s32.totalorder %s338, %s339
      %p351 = scmp.eq.s32.totalorder %s114, 1
      %p352 = por %p350, %p351
      %p354 = scmp.ne.s32.totalorder %s339, %s353
      %p355 = scmp.eq.s32.totalorder %s114, 0
      %p356 = por %p354, %p355
      %s358 = sadd.s32 %s357, 1
      %p361 = scmp.eq.s32.totalorder %s108, 1
      %p362 = scmp.ne.s32.totalorder %s357, %s359
      %p363 = scmp.eq.s32.totalorder %s108, 0
      %p364 = por %p362, %p363
      %p365 = scmp.ne.s32.totalorder %s357, %s359
      %p366 = scmp.eq.s32.totalorder %s113, 1
      %p367 = por %p365, %p366
      %p368 = scmp.ne.s32.totalorder %s359, %s360
      %p369 = scmp.eq.s32.totalorder %s113, 0
      %p370 = por %p368, %p369
      %p371 = scmp.ne.s32.totalorder %s359, %s360
      %p372 = scmp.eq.s32.totalorder %s114, 1
      %p373 = por %p371, %p372
      %p375 = scmp.ne.s32.totalorder %s360, %s374
      %p376 = scmp.eq.s32.totalorder %s114, 0
      %p377 = por %p375, %p376
      %s379 = sadd.s32 %s378, 1
      %p382 = scmp.eq.s32.totalorder %s108, 1
      %p383 = scmp.ne.s32.totalorder %s378, %s380
      %p384 = scmp.eq.s32.totalorder %s108, 0
      %p385 = por %p383, %p384
      %p386 = scmp.ne.s32.totalorder %s378, %s380
      %p387 = scmp.eq.s32.totalorder %s113, 1
      %p388 = por %p386, %p387
      %p389 = scmp.ne.s32.totalorder %s380, %s381
      %p390 = scmp.eq.s32.totalorder %s113, 0
      %p391 = por %p389, %p390
      %p392 = scmp.ne.s32.totalorder %s380, %s381
      %p393 = scmp.eq.s32.totalorder %s114, 1
      %p394 = por %p392, %p393
      %p396 = scmp.ne.s32.totalorder %s381, %s395
      %p397 = scmp.eq.s32.totalorder %s114, 0
      %p398 = por %p396, %p397
      %s400 = sadd.s32 %s399, 1
      %p403 = scmp.eq.s32.totalorder %s108, 1
      %p404 = scmp.ne.s32.totalorder %s399, %s401
      %p405 = scmp.eq.s32.totalorder %s108, 0
      %p406 = por %p404, %p405
      %p407 = scmp.ne.s32.totalorder %s399, %s401
      %p408 = scmp.eq.s32.totalorder %s113, 1
      %p409 = por %p407, %p408
      %p410 = scmp.ne.s32.totalorder %s401, %s402
      %p411 = scmp.eq.s32.totalorder %s113, 0
      %p412 = por %p410, %p411
      %p413 = scmp.ne.s32.totalorder %s401, %s402
      %p414 = scmp.eq.s32.totalorder %s114, 1
      %p415 = por %p413, %p414
      %p417 = scmp.ne.s32.totalorder %s402, %s416
      %p418 = scmp.eq.s32.totalorder %s114, 0
      %p419 = por %p417, %p418
      %s421 = sadd.s32 %s420, 1
      %p424 = scmp.eq.s32.totalorder %s108, 1
      %p425 = scmp.ne.s32.totalorder %s420, %s422
      %p426 = scmp.eq.s32.totalorder %s108, 0
      %p427 = por %p425, %p426
      %p428 = scmp.ne.s32.totalorder %s420, %s422
      %p429 = scmp.eq.s32.totalorder %s113, 1
      %p430 = por %p428, %p429
      %p431 = scmp.ne.s32.totalorder %s422, %s423
      %p432 = scmp.eq.s32.totalorder %s113, 0
      %p433 = por %p431, %p432
      %p434 = scmp.ne.s32.totalorder %s422, %s423
      %p435 = scmp.eq.s32.totalorder %s114, 1
      %p436 = por %p434, %p435
      %p438 = scmp.ne.s32.totalorder %s423, %s437
      %p439 = scmp.eq.s32.totalorder %s114, 0
      %p440 = por %p438, %p439
      %s442 = sadd.s32 %s441, 1
      %p445 = scmp.eq.s32.totalorder %s108, 1
      %p446 = scmp.ne.s32.totalorder %s441, %s443
      %p447 = scmp.eq.s32.totalorder %s108, 0
      %p448 = por %p446, %p447
      %p449 = scmp.ne.s32.totalorder %s441, %s443
      %p450 = scmp.eq.s32.totalorder %s113, 1
      %p451 = por %p449, %p450
      %p452 = scmp.ne.s32.totalorder %s443, %s444
      %p453 = scmp.eq.s32.totalorder %s113, 0
      %p454 = por %p452, %p453
      %p455 = scmp.ne.s32.totalorder %s443, %s444
      %p456 = scmp.eq.s32.totalorder %s114, 1
      %p457 = por %p455, %p456
      %p459 = scmp.ne.s32.totalorder %s444, %s458
      %p460 = scmp.eq.s32.totalorder %s114, 0
      %p461 = por %p459, %p460
      %s463 = sadd.s32 %s462, 1
      %p466 = scmp.eq.s32.totalorder %s108, 1
      %p467 = scmp.ne.s32.totalorder %s462, %s464
      %p468 = scmp.eq.s32.totalorder %s108, 0
      %p469 = por %p467, %p468
      %p470 = scmp.ne.s32.totalorder %s462, %s464
      %p471 = scmp.eq.s32.totalorder %s113, 1
      %p472 = por %p470, %p471
      %p473 = scmp.ne.s32.totalorder %s464, %s465
      %p474 = scmp.eq.s32.totalorder %s113, 0
      %p475 = por %p473, %p474
      %p476 = scmp.ne.s32.totalorder %s464, %s465
      %p477 = scmp.eq.s32.totalorder %s114, 1
      %p478 = por %p476, %p477
      %p480 = scmp.ne.s32.totalorder %s465, %s479
      %p481 = scmp.eq.s32.totalorder %s114, 0
      %p482 = por %p480, %p481
      %s484 = sadd.s32 %s483, 1
      %p487 = scmp.eq.s32.totalorder %s108, 1
      %p488 = scmp.ne.s32.totalorder %s483, %s485
      %p489 = scmp.eq.s32.totalorder %s108, 0
      %p490 = por %p488, %p489
      %p491 = scmp.ne.s32.totalorder %s483, %s485
      %p492 = scmp.eq.s32.totalorder %s113, 1
      %p493 = por %p491, %p492
      %p494 = scmp.ne.s32.totalorder %s485, %s486
      %p495 = scmp.eq.s32.totalorder %s113, 0
      %p496 = por %p494, %p495
      %p497 = scmp.ne.s32.totalorder %s485, %s486
      %p498 = scmp.eq.s32.totalorder %s114, 1
      %p499 = por %p497, %p498
      %p501 = scmp.ne.s32.totalorder %s486, %s500
      %p502 = scmp.eq.s32.totalorder %s114, 0
      %p503 = por %p501, %p502
      %s505 = sadd.s32 %s504, 1
      %p508 = scmp.eq.s32.totalorder %s108, 1
      %p509 = scmp.ne.s32.totalorder %s504, %s506
      %p510 = scmp.eq.s32.totalorder %s108, 0
      %p511 = por %p509, %p510
      %p512 = scmp.ne.s32.totalorder %s504, %s506
      %p513 = scmp.eq.s32.totalorder %s113, 1
      %p514 = por %p512, %p513
      %p515 = scmp.ne.s32.totalorder %s506, %s507
      %p516 = scmp.eq.s32.totalorder %s113, 0
      %p517 = por %p515, %p516
      %p518 = scmp.ne.s32.totalorder %s506, %s507
      %p519 = scmp.eq.s32.totalorder %s114, 1
      %p520 = por %p518, %p519
      %p522 = scmp.ne.s32.totalorder %s507, %s521
      %p523 = scmp.eq.s32.totalorder %s114, 0
      %p524 = por %p522, %p523
      %s526 = sadd.s32 %s525, 1
      %p529 = scmp.eq.s32.totalorder %s108, 1
      %p530 = scmp.ne.s32.totalorder %s525, %s527
      %p531 = scmp.eq.s32.totalorder %s108, 0
      %p532 = por %p530, %p531
      %p533 = scmp.ne.s32.totalorder %s525, %s527
      %p534 = scmp.eq.s32.totalorder %s113, 1
      %p535 = por %p533, %p534
      %p536 = scmp.ne.s32.totalorder %s527, %s528
      %p537 = scmp.eq.s32.totalorder %s113, 0
      %p538 = por %p536, %p537
      %p539 = scmp.ne.s32.totalorder %s527, %s528
      %p540 = scmp.eq.s32.totalorder %s114, 1
      %p541 = por %p539, %p540
      %p543 = scmp.ne.s32.totalorder %s528, %s542
      %p544 = scmp.eq.s32.totalorder %s114, 0
      %p545 = por %p543, %p544
      %s547 = sadd.s32 %s546, 1
      %p550 = scmp.eq.s32.totalorder %s108, 1
      %p551 = scmp.ne.s32.totalorder %s546, %s548
      %p552 = scmp.eq.s32.totalorder %s108, 0
      %p553 = por %p551, %p552
      %p554 = scmp.ne.s32.totalorder %s546, %s548
      %p555 = scmp.eq.s32.totalorder %s113, 1
      %p556 = por %p554, %p555
      %p557 = scmp.ne.s32.totalorder %s548, %s549
      %p558 = scmp.eq.s32.totalorder %s113, 0
      %p559 = por %p557, %p558
      %p560 = scmp.ne.s32.totalorder %s548, %s549
      %p561 = scmp.eq.s32.totalorder %s114, 1
      %p562 = por %p560, %p561
      %p564 = scmp.ne.s32.totalorder %s549, %s563
      %p565 = scmp.eq.s32.totalorder %s114, 0
      %p566 = por %p564, %p565
      %s568 = sadd.s32 %s567, 1
      %p571 = scmp.eq.s32.totalorder %s108, 1
      %p572 = scmp.ne.s32.totalorder %s567, %s569
      %p573 = scmp.eq.s32.totalorder %s108, 0
      %p574 = por %p572, %p573
      %p575 = scmp.ne.s32.totalorder %s567, %s569
      %p576 = scmp.eq.s32.totalorder %s113, 1
      %p577 = por %p575, %p576
      %p578 = scmp.ne.s32.totalorder %s569, %s570
      %p579 = scmp.eq.s32.totalorder %s113, 0
      %p580 = por %p578, %p579
      %p581 = scmp.ne.s32.totalorder %s569, %s570
      %p582 = scmp.eq.s32.totalorder %s114, 1
      %p583 = por %p581, %p582
      %p585 = scmp.ne.s32.totalorder %s570, %s584
      %p586 = scmp.eq.s32.totalorder %s114, 0
      %p587 = por %p585, %p586
      %s589 = sadd.s32 %s588, 1
      %p592 = scmp.eq.s32.totalorder %s108, 1
      %p593 = scmp.ne.s32.totalorder %s588, %s590
      %p594 = scmp.eq.s32.totalorder %s108, 0
      %p595 = por %p593, %p594
      %p596 = scmp.ne.s32.totalorder %s588, %s590
      %p597 = scmp.eq.s32.totalorder %s113, 1
      %p598 = por %p596, %p597
      %p599 = scmp.ne.s32.totalorder %s590, %s591
      %p600 = scmp.eq.s32.totalorder %s113, 0
      %p601 = por %p599, %p600
      %p602 = scmp.ne.s32.totalorder %s590, %s591
      %p603 = scmp.eq.s32.totalorder %s114, 1
      %p604 = por %p602, %p603
      %p606 = scmp.ne.s32.totalorder %s591, %s605
      %p607 = scmp.eq.s32.totalorder %s114, 0
      %p608 = por %p606, %p607
      %s610 = sadd.s32 %s609, 1
      %p613 = scmp.eq.s32.totalorder %s108, 1
      %p614 = scmp.ne.s32.totalorder %s609, %s611
      %p615 = scmp.eq.s32.totalorder %s108, 0
      %p616 = por %p614, %p615
      %p617 = scmp.ne.s32.totalorder %s609, %s611
      %p618 = scmp.eq.s32.totalorder %s113, 1
      %p619 = por %p617, %p618
      %p620 = scmp.ne.s32.totalorder %s611, %s612
      %p621 = scmp.eq.s32.totalorder %s113, 0
      %p622 = por %p620, %p621
      %p623 = scmp.ne.s32.totalorder %s611, %s612
      %p624 = scmp.eq.s32.totalorder %s114, 1
      %p625 = por %p623, %p624
      %p627 = scmp.ne.s32.totalorder %s612, %s626
      %p628 = scmp.eq.s32.totalorder %s114, 0
      %p629 = por %p627, %p628
      %s631 = sadd.s32 %s630, 1
      %p634 = scmp.eq.s32.totalorder %s108, 1
      %p635 = scmp.ne.s32.totalorder %s630, %s632
      %p636 = scmp.eq.s32.totalorder %s108, 0
      %p637 = por %p635, %p636
      %p638 = scmp.ne.s32.totalorder %s630, %s632
      %p639 = scmp.eq.s32.totalorder %s113, 1
      %p640 = por %p638, %p639
      %p641 = scmp.ne.s32.totalorder %s632, %s633
      %p642 = scmp.eq.s32.totalorder %s113, 0
      %p643 = por %p641, %p642
      %p644 = scmp.ne.s32.totalorder %s632, %s633
      %p645 = scmp.eq.s32.totalorder %s114, 1
      %p646 = por %p644, %p645
      %p648 = scmp.ne.s32.totalorder %s633, %s647
      %p649 = scmp.eq.s32.totalorder %s114, 0
      %p650 = por %p648, %p649
      %s652 = sadd.s32 %s651, 1
      %p655 = scmp.eq.s32.totalorder %s108, 1
      %p656 = scmp.ne.s32.totalorder %s651, %s653
      %p657 = scmp.eq.s32.totalorder %s108, 0
      %p658 = por %p656, %p657
      %p659 = scmp.ne.s32.totalorder %s651, %s653
      %p660 = scmp.eq.s32.totalorder %s113, 1
      %p661 = por %p659, %p660
      %p662 = scmp.ne.s32.totalorder %s653, %s654
      %p663 = scmp.eq.s32.totalorder %s113, 0
      %p664 = por %p662, %p663
      %p665 = scmp.ne.s32.totalorder %s653, %s654
      %p666 = scmp.eq.s32.totalorder %s114, 1
      %p667 = por %p665, %p666
      %p669 = scmp.ne.s32.totalorder %s654, %s668
      %p670 = scmp.eq.s32.totalorder %s114, 0
      %p671 = por %p669, %p670
      %s673 = sadd.s32 %s672, 1
      %p676 = scmp.eq.s32.totalorder %s108, 1
      %p677 = scmp.ne.s32.totalorder %s672, %s674
      %p678 = scmp.eq.s32.totalorder %s108, 0
      %p679 = por %p677, %p678
      %p680 = scmp.ne.s32.totalorder %s672, %s674
      %p681 = scmp.eq.s32.totalorder %s113, 1
      %p682 = por %p680, %p681
      %p683 = scmp.ne.s32.totalorder %s674, %s675
      %p684 = scmp.eq.s32.totalorder %s113, 0
      %p685 = por %p683, %p684
      %p686 = scmp.ne.s32.totalorder %s674, %s675
      %p687 = scmp.eq.s32.totalorder %s114, 1
      %p688 = por %p686, %p687
      %p690 = scmp.ne.s32.totalorder %s675, %s689
      %p691 = scmp.eq.s32.totalorder %s114, 0
      %p692 = por %p690, %p691
      %s694 = sadd.s32 %s693, 1
      %p697 = scmp.eq.s32.totalorder %s108, 1
      %p698 = scmp.ne.s32.totalorder %s693, %s695
      %p699 = scmp.eq.s32.totalorder %s108, 0
      %p700 = por %p698, %p699
      %p701 = scmp.ne.s32.totalorder %s693, %s695
      %p702 = scmp.eq.s32.totalorder %s113, 1
      %p703 = por %p701, %p702
      %p704 = scmp.ne.s32.totalorder %s695, %s696
      %p705 = scmp.eq.s32.totalorder %s113, 0
      %p706 = por %p704, %p705
      %p707 = scmp.ne.s32.totalorder %s695, %s696
      %p708 = scmp.eq.s32.totalorder %s114, 1
      %p709 = por %p707, %p708
      %p711 = scmp.ne.s32.totalorder %s696, %s710
      %p712 = scmp.eq.s32.totalorder %s114, 0
      %p713 = por %p711, %p712
      %s715 = sadd.s32 %s714, 1
      %p718 = scmp.eq.s32.totalorder %s108, 1
      %p719 = scmp.ne.s32.totalorder %s714, %s716
      %p720 = scmp.eq.s32.totalorder %s108, 0
      %p721 = por %p719, %p720
      %p722 = scmp.ne.s32.totalorder %s714, %s716
      %p723 = scmp.eq.s32.totalorder %s113, 1
      %p724 = por %p722, %p723
      %p725 = scmp.ne.s32.totalorder %s716, %s717
      %p726 = scmp.eq.s32.totalorder %s113, 0
      %p727 = por %p725, %p726
      %p728 = scmp.ne.s32.totalorder %s716, %s717
      %p729 = scmp.eq.s32.totalorder %s114, 1
      %p730 = por %p728, %p729
      %p732 = scmp.ne.s32.totalorder %s717, %s731
      %p733 = scmp.eq.s32.totalorder %s114, 0
      %p734 = por %p732, %p733
      %s736 = sadd.s32 %s735, 1
      %p739 = scmp.eq.s32.totalorder %s108, 1
      %p740 = scmp.ne.s32.totalorder %s735, %s737
      %p741 = scmp.eq.s32.totalorder %s108, 0
      %p742 = por %p740, %p741
      %p743 = scmp.ne.s32.totalorder %s735, %s737
      %p744 = scmp.eq.s32.totalorder %s113, 1
      %p745 = por %p743, %p744
      %p746 = scmp.ne.s32.totalorder %s737, %s738
      %p747 = scmp.eq.s32.totalorder %s113, 0
      %p748 = por %p746, %p747
      %p749 = scmp.ne.s32.totalorder %s737, %s738
      %p750 = scmp.eq.s32.totalorder %s114, 1
      %p751 = por %p749, %p750
      %p753 = scmp.ne.s32.totalorder %s738, %s752
      %p754 = scmp.eq.s32.totalorder %s114, 0
      %p755 = por %p753, %p754
      %s757 = sadd.s32 %s756, 1
      %p760 = scmp.eq.s32.totalorder %s108, 1
      %p761 = scmp.ne.s32.totalorder %s756, %s758
      %p762 = scmp.eq.s32.totalorder %s108, 0
      %p763 = por %p761, %p762
      %p764 = scmp.ne.s32.totalorder %s756, %s758
      %p765 = scmp.eq.s32.totalorder %s113, 1
      %p766 = por %p764, %p765
      %p767 = scmp.ne.s32.totalorder %s758, %s759
      %p768 = scmp.eq.s32.totalorder %s113, 0
      %p769 = por %p767, %p768
      %p770 = scmp.ne.s32.totalorder %s758, %s759
      %p771 = scmp.eq.s32.totalorder %s114, 1
      %p772 = por %p770, %p771
      %p774 = scmp.ne.s32.totalorder %s759, %s773
      %p775 = scmp.eq.s32.totalorder %s114, 0
      %p776 = por %p774, %p775
      %s778 = sadd.s32 %s777, 1
      %p781 = scmp.eq.s32.totalorder %s108, 1
      %p782 = scmp.ne.s32.totalorder %s777, %s779
      %p783 = scmp.eq.s32.totalorder %s108, 0
      %p784 = por %p782, %p783
      %p785 = scmp.ne.s32.totalorder %s777, %s779
      %p786 = scmp.eq.s32.totalorder %s113, 1
      %p787 = por %p785, %p786
      %p788 = scmp.ne.s32.totalorder %s779, %s780
      %p789 = scmp.eq.s32.totalorder %s113, 0
      %p790 = por %p788, %p789
      %p791 = scmp.ne.s32.totalorder %s779, %s780
      %p792 = scmp.eq.s32.totalorder %s114, 1
      %p793 = por %p791, %p792
      %p795 = scmp.ne.s32.totalorder %s780, %s794
      %p796 = scmp.eq.s32.totalorder %s114, 0
      %p797 = por %p795, %p796
      %s799 = sadd.s32 %s798, 1
      %p802 = scmp.eq.s32.totalorder %s108, 1
      %p803 = scmp.ne.s32.totalorder %s798, %s800
      %p804 = scmp.eq.s32.totalorder %s108, 0
      %p805 = por %p803, %p804
      %p806 = scmp.ne.s32.totalorder %s798, %s800
      %p807 = scmp.eq.s32.totalorder %s113, 1
      %p808 = por %p806, %p807
      %p809 = scmp.ne.s32.totalorder %s800, %s801
      %p810 = scmp.eq.s32.totalorder %s113, 0
      %p811 = por %p809, %p810
      %p812 = scmp.ne.s32.totalorder %s800, %s801
      %p813 = scmp.eq.s32.totalorder %s114, 1
      %p814 = por %p812, %p813
      %p816 = scmp.ne.s32.totalorder %s801, %s815
      %p817 = scmp.eq.s32.totalorder %s114, 0
      %p818 = por %p816, %p817
      %s820 = sadd.s32 %s819, 1
      %p823 = scmp.eq.s32.totalorder %s108, 1
      %p824 = scmp.ne.s32.totalorder %s819, %s821
      %p825 = scmp.eq.s32.totalorder %s108, 0
      %p826 = por %p824, %p825
      %p827 = scmp.ne.s32.totalorder %s819, %s821
      %p828 = scmp.eq.s32.totalorder %s113, 1
      %p829 = por %p827, %p828
      %p830 = scmp.ne.s32.totalorder %s821, %s822
      %p831 = scmp.eq.s32.totalorder %s113, 0
      %p832 = por %p830, %p831
      %p833 = scmp.ne.s32.totalorder %s821, %s822
      %p834 = scmp.eq.s32.totalorder %s114, 1
      %p835 = por %p833, %p834
      %p837 = scmp.ne.s32.totalorder %s822, %s836
      %p838 = scmp.eq.s32.totalorder %s114, 0
      %p839 = por %p837, %p838
      %s841 = sadd.s32 %s840, 1
      %p844 = scmp.eq.s32.totalorder %s108, 1
      %p845 = scmp.ne.s32.totalorder %s840, %s842
      %p846 = scmp.eq.s32.totalorder %s108, 0
      %p847 = por %p845, %p846
      %p848 = scmp.ne.s32.totalorder %s840, %s842
      %p849 = scmp.eq.s32.totalorder %s113, 1
      %p850 = por %p848, %p849
      %p851 = scmp.ne.s32.totalorder %s842, %s843
      %p852 = scmp.eq.s32.totalorder %s113, 0
      %p853 = por %p851, %p852
      %p854 = scmp.ne.s32.totalorder %s842, %s843
      %p855 = scmp.eq.s32.totalorder %s114, 1
      %p856 = por %p854, %p855
      %p858 = scmp.ne.s32.totalorder %s843, %s857
      %p859 = scmp.eq.s32.totalorder %s114, 0
      %p860 = por %p858, %p859
      %s862 = sadd.s32 %s861, 1
      %p865 = scmp.eq.s32.totalorder %s108, 1
      %p866 = scmp.ne.s32.totalorder %s861, %s863
      %p867 = scmp.eq.s32.totalorder %s108, 0
      %p868 = por %p866, %p867
      %p869 = scmp.ne.s32.totalorder %s861, %s863
      %p870 = scmp.eq.s32.totalorder %s113, 1
      %p871 = por %p869, %p870
      %p872 = scmp.ne.s32.totalorder %s863, %s864
      %p873 = scmp.eq.s32.totalorder %s113, 0
      %p874 = por %p872, %p873
      %p875 = scmp.ne.s32.totalorder %s863, %s864
      %p876 = scmp.eq.s32.totalorder %s114, 1
      %p877 = por %p875, %p876
      %p879 = scmp.ne.s32.totalorder %s864, %s878
      %p880 = scmp.eq.s32.totalorder %s114, 0
      %p881 = por %p879, %p880
      %s883 = sadd.s32 %s882, 1
      %p886 = scmp.eq.s32.totalorder %s108, 1
      %p887 = scmp.ne.s32.totalorder %s882, %s884
      %p888 = scmp.eq.s32.totalorder %s108, 0
      %p889 = por %p887, %p888
      %p890 = scmp.ne.s32.totalorder %s882, %s884
      %p891 = scmp.eq.s32.totalorder %s113, 1
      %p892 = por %p890, %p891
      %p893 = scmp.ne.s32.totalorder %s884, %s885
      %p894 = scmp.eq.s32.totalorder %s113, 0
      %p895 = por %p893, %p894
      %p896 = scmp.ne.s32.totalorder %s884, %s885
      %p897 = scmp.eq.s32.totalorder %s114, 1
      %p898 = por %p896, %p897
      %p900 = scmp.ne.s32.totalorder %s885, %s899
      %p901 = scmp.eq.s32.totalorder %s114, 0
      %p902 = por %p900, %p901
      %s904 = sadd.s32 %s903, 1
      %p907 = scmp.eq.s32.totalorder %s108, 1
      %p908 = scmp.ne.s32.totalorder %s903, %s905
      %p909 = scmp.eq.s32.totalorder %s108, 0
      %p910 = por %p908, %p909
      %p911 = scmp.ne.s32.totalorder %s903, %s905
      %p912 = scmp.eq.s32.totalorder %s113, 1
      %p913 = por %p911, %p912
      %p914 = scmp.ne.s32.totalorder %s905, %s906
      %p915 = scmp.eq.s32.totalorder %s113, 0
      %p916 = por %p914, %p915
      %p917 = scmp.ne.s32.totalorder %s905, %s906
      %p918 = scmp.eq.s32.totalorder %s114, 1
      %p919 = por %p917, %p918
      %p921 = scmp.ne.s32.totalorder %s906, %s920
      %p922 = scmp.eq.s32.totalorder %s114, 0
      %p923 = por %p921, %p922
      %s925 = sadd.s32 %s924, 1
      %p928 = scmp.eq.s32.totalorder %s108, 1
      %p929 = scmp.ne.s32.totalorder %s924, %s926
      %p930 = scmp.eq.s32.totalorder %s108, 0
      %p931 = por %p929, %p930
      %p932 = scmp.ne.s32.totalorder %s924, %s926
      %p933 = scmp.eq.s32.totalorder %s113, 1
      %p934 = por %p932, %p933
      %p935 = scmp.ne.s32.totalorder %s926, %s927
      %p936 = scmp.eq.s32.totalorder %s113, 0
      %p937 = por %p935, %p936
      %p938 = scmp.ne.s32.totalorder %s926, %s927
      %p939 = scmp.eq.s32.totalorder %s114, 1
      %p940 = por %p938, %p939
      %p942 = scmp.ne.s32.totalorder %s927, %s941
      %p943 = scmp.eq.s32.totalorder %s114, 0
      %p944 = por %p942, %p943
      %s946 = sadd.s32 %s945, 1
      %p949 = scmp.eq.s32.totalorder %s108, 1
      %p950 = scmp.ne.s32.totalorder %s945, %s947
      %p951 = scmp.eq.s32.totalorder %s108, 0
      %p952 = por %p950, %p951
      %p953 = scmp.ne.s32.totalorder %s945, %s947
      %p954 = scmp.eq.s32.totalorder %s113, 1
      %p955 = por %p953, %p954
      %p956 = scmp.ne.s32.totalorder %s947, %s948
      %p957 = scmp.eq.s32.totalorder %s113, 0
      %p958 = por %p956, %p957
      %p959 = scmp.ne.s32.totalorder %s947, %s948
      %p960 = scmp.eq.s32.totalorder %s114, 1
      %p961 = por %p959, %p960
      %p963 = scmp.ne.s32.totalorder %s948, %s962
      %p964 = scmp.eq.s32.totalorder %s114, 0
      %p965 = por %p963, %p964
      %s967 = sadd.s32 %s966, 1
      %p970 = scmp.eq.s32.totalorder %s108, 1
      %p971 = scmp.ne.s32.totalorder %s966, %s968
      %p972 = scmp.eq.s32.totalorder %s108, 0
      %p973 = por %p971, %p972
      %p974 = scmp.ne.s32.totalorder %s966, %s968
      %p975 = scmp.eq.s32.totalorder %s113, 1
      %p976 = por %p974, %p975
      %p977 = scmp.ne.s32.totalorder %s968, %s969
      %p978 = scmp.eq.s32.totalorder %s113, 0
      %p979 = por %p977, %p978
      %p980 = scmp.ne.s32.totalorder %s968, %s969
      %p981 = scmp.eq.s32.totalorder %s114, 1
      %p982 = por %p980, %p981
      %p984 = scmp.ne.s32.totalorder %s969, %s983
      %p985 = scmp.eq.s32.totalorder %s114, 0
      %p986 = por %p984, %p985
      %s988 = sadd.s32 %s987, 1
      %p991 = scmp.eq.s32.totalorder %s108, 1
      %p992 = scmp.ne.s32.totalorder %s987, %s989
      %p993 = scmp.eq.s32.totalorder %s108, 0
      %p994 = por %p992, %p993
      %p995 = scmp.ne.s32.totalorder %s987, %s989
      %p996 = scmp.eq.s32.totalorder %s113, 1
      %p997 = por %p995, %p996
      %p998 = scmp.ne.s32.totalorder %s989, %s990
      %p999 = scmp.eq.s32.totalorder %s113, 0
      %p1000 = por %p998, %p999
      %p1001 = scmp.ne.s32.totalorder %s989, %s990
      %p1002 = scmp.eq.s32.totalorder %s114, 1
      %p1003 = por %p1001, %p1002
      %p1005 = scmp.ne.s32.totalorder %s990, %s1004
      %p1006 = scmp.eq.s32.totalorder %s114, 0
      %p1007 = por %p1005, %p1006
      %s1009 = sadd.s32 %s1008, 1
      %p1012 = scmp.eq.s32.totalorder %s108, 1
      %p1013 = scmp.ne.s32.totalorder %s1008, %s1010
      %p1014 = scmp.eq.s32.totalorder %s108, 0
      %p1015 = por %p1013, %p1014
      %p1016 = scmp.ne.s32.totalorder %s1008, %s1010
      %p1017 = scmp.eq.s32.totalorder %s113, 1
      %p1018 = por %p1016, %p1017
      %p1019 = scmp.ne.s32.totalorder %s1010, %s1011
      %p1020 = scmp.eq.s32.totalorder %s113, 0
      %p1021 = por %p1019, %p1020
      %p1022 = scmp.ne.s32.totalorder %s1010, %s1011
      %p1023 = scmp.eq.s32.totalorder %s114, 1
      %p1024 = por %p1022, %p1023
      %p1026 = scmp.ne.s32.totalorder %s1011, %s1025
      %p1027 = scmp.eq.s32.totalorder %s114, 0
      %p1028 = por %p1026, %p1027
      %s1030 = sadd.s32 %s1029, 1
      %p1033 = scmp.eq.s32.totalorder %s108, 1
      %p1034 = scmp.ne.s32.totalorder %s1029, %s1031
      %p1035 = scmp.eq.s32.totalorder %s108, 0
      %p1036 = por %p1034, %p1035
      %p1037 = scmp.ne.s32.totalorder %s1029, %s1031
      %p1038 = scmp.eq.s32.totalorder %s113, 1
      %p1039 = por %p1037, %p1038
      %p1040 = scmp.ne.s32.totalorder %s1031, %s1032
      %p1041 = scmp.eq.s32.totalorder %s113, 0
      %p1042 = por %p1040, %p1041
      %p1043 = scmp.ne.s32.totalorder %s1031, %s1032
      %p1044 = scmp.eq.s32.totalorder %s114, 1
      %p1045 = por %p1043, %p1044
      %p1047 = scmp.ne.s32.totalorder %s1032, %s1046
      %p1048 = scmp.eq.s32.totalorder %s114, 0
      %p1049 = por %p1047, %p1048
      %s1051 = sadd.s32 %s1050, 1
      %p1054 = scmp.eq.s32.totalorder %s108, 1
      %p1055 = scmp.ne.s32.totalorder %s1050, %s1052
      %p1056 = scmp.eq.s32.totalorder %s108, 0
      %p1057 = por %p1055, %p1056
      %p1058 = scmp.ne.s32.totalorder %s1050, %s1052
      %p1059 = scmp.eq.s32.totalorder %s113, 1
      %p1060 = por %p1058, %p1059
      %p1061 = scmp.ne.s32.totalorder %s1052, %s1053
      %p1062 = scmp.eq.s32.totalorder %s113, 0
      %p1063 = por %p1061, %p1062
      %p1064 = scmp.ne.s32.totalorder %s1052, %s1053
      %p1065 = scmp.eq.s32.totalorder %s114, 1
      %p1066 = por %p1064, %p1065
      %p1068 = scmp.ne.s32.totalorder %s1053, %s1067
      %p1069 = scmp.eq.s32.totalorder %s114, 0
      %p1070 = por %p1068, %p1069
      %s1072 = sadd.s32 %s1071, 1
      %p1075 = scmp.eq.s32.totalorder %s108, 1
      %p1076 = scmp.ne.s32.totalorder %s1071, %s1073
      %p1077 = scmp.eq.s32.totalorder %s108, 0
      %p1078 = por %p1076, %p1077
      %p1079 = scmp.ne.s32.totalorder %s1071, %s1073
      %p1080 = scmp.eq.s32.totalorder %s113, 1
      %p1081 = por %p1079, %p1080
      %p1082 = scmp.ne.s32.totalorder %s1073, %s1074
      %p1083 = scmp.eq.s32.totalorder %s113, 0
      %p1084 = por %p1082, %p1083
      %p1085 = scmp.ne.s32.totalorder %s1073, %s1074
      %p1086 = scmp.eq.s32.totalorder %s114, 1
      %p1087 = por %p1085, %p1086
      %p1089 = scmp.ne.s32.totalorder %s1074, %s1088
      %p1090 = scmp.eq.s32.totalorder %s114, 0
      %p1091 = por %p1089, %p1090
      %s1093 = sadd.s32 %s1092, 1
      %p1096 = scmp.eq.s32.totalorder %s108, 1
      %p1097 = scmp.ne.s32.totalorder %s1092, %s1094
      %p1098 = scmp.eq.s32.totalorder %s108, 0
      %p1099 = por %p1097, %p1098
      %p1100 = scmp.ne.s32.totalorder %s1092, %s1094
      %p1101 = scmp.eq.s32.totalorder %s113, 1
      %p1102 = por %p1100, %p1101
      %p1103 = scmp.ne.s32.totalorder %s1094, %s1095
      %p1104 = scmp.eq.s32.totalorder %s113, 0
      %p1105 = por %p1103, %p1104
      %p1106 = scmp.ne.s32.totalorder %s1094, %s1095
      %p1107 = scmp.eq.s32.totalorder %s114, 1
      %p1108 = por %p1106, %p1107
      %p1110 = scmp.ne.s32.totalorder %s1095, %s1109
      %p1111 = scmp.eq.s32.totalorder %s114, 0
      %p1112 = por %p1110, %p1111
      %s1114 = sadd.s32 %s1113, 1
      %p1117 = scmp.eq.s32.totalorder %s108, 1
      %p1118 = scmp.ne.s32.totalorder %s1113, %s1115
      %p1119 = scmp.eq.s32.totalorder %s108, 0
      %p1120 = por %p1118, %p1119
      %p1121 = scmp.ne.s32.totalorder %s1113, %s1115
      %p1122 = scmp.eq.s32.totalorder %s113, 1
      %p1123 = por %p1121, %p1122
      %p1124 = scmp.ne.s32.totalorder %s1115, %s1116
      %p1125 = scmp.eq.s32.totalorder %s113, 0
      %p1126 = por %p1124, %p1125
      %p1127 = scmp.ne.s32.totalorder %s1115, %s1116
      %p1128 = scmp.eq.s32.totalorder %s114, 1
      %p1129 = por %p1127, %p1128
      %p1131 = scmp.ne.s32.totalorder %s1116, %s1130
      %p1132 = scmp.eq.s32.totalorder %s114, 0
      %p1133 = por %p1131, %p1132
      %s1134 = ssub.s32 %s108, %s115
      %p1135 = scmp.eq.s32.totalorder %s1134, 0
      %s1137 = sadd.s32 %s1136, 1
      %s1138 = scalar_select %p1135, %s1136, %s1137
      %p1141 = pneg %p1135
      %p1142 = scmp.eq.s32.totalorder %s108, 1
      %p1143 = por %p1141, %p1142
      %p1144 = scmp.ne.s32.totalorder %s1136, %s1139
      %p1145 = scmp.eq.s32.totalorder %s108, 0
      %p1146 = por %p1144, %p1145
      %p1147 = scmp.ne.s32.totalorder %s1136, %s1139
      %p1148 = scmp.eq.s32.totalorder %s113, 1
      %p1149 = por %p1147, %p1148
      %p1150 = scmp.ne.s32.totalorder %s1139, %s1140
      %p1151 = scmp.eq.s32.totalorder %s113, 0
      %p1152 = por %p1150, %p1151
      %p1153 = scmp.ne.s32.totalorder %s1139, %s1140
      %p1154 = scmp.eq.s32.totalorder %s114, 1
      %p1155 = por %p1153, %p1154
      %p1157 = scmp.ne.s32.totalorder %s1140, %s1156
      %p1158 = scmp.eq.s32.totalorder %s114, 0
      %p1159 = por %p1157, %p1158
      %p1160 = scmp.le.s32.totalorder 1, %s108
      %p1161 = scmp.lt.s32.totalorder %s108, 3
      %p1162 = pnand %p1160, %p1161
      %p1163 = pneg %p1162
      // Predicated region
      $region9: #{informer_decoder_forward.1} parent=5 // pred_check
        _
      $region10: #{informer_decoder_forward.1} parent=5 // pred_check_branch
        %1165 = sbr.rel (%p1162) target = $region12
      $region11: #{informer_decoder_forward.1} parent=5 // pred_region
        %s1166 = ssub.s32 %s108, 1
        // Predicated region
        $region13: #{informer_decoder_forward.1} parent=11 // pred_check
          %p1167 = pneg %p181
        $region14: #{informer_decoder_forward.1} parent=11 // pred_check_branch
          %1169 = sbr.rel (%p1167) target = $region16
        $region15: #{informer_decoder_forward.1} parent=11 // pred_region
          _
        $region16: #{informer_decoder_forward.1} parent=11 // pred_fallthru
          _
        // Predicated region
        $region17: #{informer_decoder_forward.1} parent=11 // pred_check
          %p1170 = pneg %p202
        $region18: #{informer_decoder_forward.1} parent=11 // pred_check_branch
          %1172 = sbr.rel (%p1170) target = $region20
        $region19: #{informer_decoder_forward.1} parent=11 // pred_region
          _
        $region20: #{informer_decoder_forward.1} parent=11 // pred_fallthru
          _
        // Predicated region
        $region21: #{informer_decoder_forward.1} parent=11 // pred_check
          %p1173 = pneg %p223
        $region22: #{informer_decoder_forward.1} parent=11 // pred_check_branch
          %1175 = sbr.rel (%p1173) target = $region24
        $region23: #{informer_decoder_forward.1} parent=11 // pred_region
          _
        $region24: #{informer_decoder_forward.1} parent=11 // pred_fallthru
          _
        // Predicated region
        $region25: #{informer_decoder_forward.1} parent=11 // pred_check
          %p1176 = pneg %p244
        $region26: #{informer_decoder_forward.1} parent=11 // pred_check_branch
          %1178 = sbr.rel (%p1176) target = $region28
        $region27: #{informer_decoder_forward.1} parent=11 // pred_region
          _
        $region28: #{informer_decoder_forward.1} parent=11 // pred_fallthru
          _
        // Predicated region
        $region29: #{informer_decoder_forward.1} parent=11 // pred_check
          %p1179 = pneg %p265
        $region30: #{informer_decoder_forward.1} parent=11 // pred_check_branch
          %1181 = sbr.rel (%p1179) target = $region32
        $region31: #{informer_decoder_forward.1} parent=11 // pred_region
          _
        $region32: #{informer_decoder_forward.1} parent=11 // pred_fallthru
          _
        // Predicated region
        $region33: #{informer_decoder_forward.1} parent=11 // pred_check
          %p1182 = pneg %p286
        $region34: #{informer_decoder_forward.1} parent=11 // pred_check_branch
          %1184 = sbr.rel (%p1182) target = $region36
        $region35: #{informer_decoder_forward.1} parent=11 // pred_region
          _
        $region36: #{informer_decoder_forward.1} parent=11 // pred_fallthru
          _
        // Predicated region
        $region37: #{informer_decoder_forward.1} parent=11 // pred_check
          %p1185 = pneg %p307
        $region38: #{informer_decoder_forward.1} parent=11 // pred_check_branch
          %1187 = sbr.rel (%p1185) target = $region40
        $region39: #{informer_decoder_forward.1} parent=11 // pred_region
          _
        $region40: #{informer_decoder_forward.1} parent=11 // pred_fallthru
          _
        // Predicated region
        $region41: #{informer_decoder_forward.1} parent=11 // pred_check
          %p1188 = pneg %p328
        $region42: #{informer_decoder_forward.1} parent=11 // pred_check_branch
          %1190 = sbr.rel (%p1188) target = $region44
        $region43: #{informer_decoder_forward.1} parent=11 // pred_region
          _
        $region44: #{informer_decoder_forward.1} parent=11 // pred_fallthru
          _
        // Predicated region
        $region45: #{informer_decoder_forward.1} parent=11 // pred_check
          %p1191 = pneg %p349
        $region46: #{informer_decoder_forward.1} parent=11 // pred_check_branch
          %1193 = sbr.rel (%p1191) target = $region48
        $region47: #{informer_decoder_forward.1} parent=11 // pred_region
          _
        $region48: #{informer_decoder_forward.1} parent=11 // pred_fallthru
          _
        // Predicated region
        $region49: #{informer_decoder_forward.1} parent=11 // pred_check
          %p1194 = pneg %p370
        $region50: #{informer_decoder_forward.1} parent=11 // pred_check_branch
          %1196 = sbr.rel (%p1194) target = $region52
        $region51: #{informer_decoder_forward.1} parent=11 // pred_region
          _
        $region52: #{informer_decoder_forward.1} parent=11 // pred_fallthru
          _
        // Predicated region
        $region53: #{informer_decoder_forward.1} parent=11 // pred_check
          %p1197 = pneg %p391
        $region54: #{informer_decoder_forward.1} parent=11 // pred_check_branch
          %1199 = sbr.rel (%p1197) target = $region56
        $region55: #{informer_decoder_forward.1} parent=11 // pred_region
          _
        $region56: #{informer_decoder_forward.1} parent=11 // pred_fallthru
          _
        // Predicated region
        $region57: #{informer_decoder_forward.1} parent=11 // pred_check
          %p1200 = pneg %p412
        $region58: #{informer_decoder_forward.1} parent=11 // pred_check_branch
          %1202 = sbr.rel (%p1200) target = $region60
        $region59: #{informer_decoder_forward.1} parent=11 // pred_region
          _
        $region60: #{informer_decoder_forward.1} parent=11 // pred_fallthru
          _
        // Predicated region
        $region61: #{informer_decoder_forward.1} parent=11 // pred_check
          %p1203 = pneg %p433
        $region62: #{informer_decoder_forward.1} parent=11 // pred_check_branch
          %1205 = sbr.rel (%p1203) target = $region64
        $region63: #{informer_decoder_forward.1} parent=11 // pred_region
          _
        $region64: #{informer_decoder_forward.1} parent=11 // pred_fallthru
          _
        // Predicated region
        $region65: #{informer_decoder_forward.1} parent=11 // pred_check
          %p1206 = pneg %p454
        $region66: #{informer_decoder_forward.1} parent=11 // pred_check_branch
          %1208 = sbr.rel (%p1206) target = $region68
        $region67: #{informer_decoder_forward.1} parent=11 // pred_region
          _
        $region68: #{informer_decoder_forward.1} parent=11 // pred_fallthru
          _
        // Predicated region
        $region69: #{informer_decoder_forward.1} parent=11 // pred_check
          %p1209 = pneg %p475
        $region70: #{informer_decoder_forward.1} parent=11 // pred_check_branch
          %1211 = sbr.rel (%p1209) target = $region72
        $region71: #{informer_decoder_forward.1} parent=11 // pred_region
          _
        $region72: #{informer_decoder_forward.1} parent=11 // pred_fallthru
          _
        // Predicated region
        $region73: #{informer_decoder_forward.1} parent=11 // pred_check
          %p1212 = pneg %p496
        $region74: #{informer_decoder_forward.1} parent=11 // pred_check_branch
          %1214 = sbr.rel (%p1212) target = $region76
        $region75: #{informer_decoder_forward.1} parent=11 // pred_region
          _
        $region76: #{informer_decoder_forward.1} parent=11 // pred_fallthru
          _
        // Predicated region
        $region77: #{informer_decoder_forward.1} parent=11 // pred_check
          %p1215 = pneg %p517
        $region78: #{informer_decoder_forward.1} parent=11 // pred_check_branch
          %1217 = sbr.rel (%p1215) target = $region80
        $region79: #{informer_decoder_forward.1} parent=11 // pred_region
          %1219 = vsyncadd [#allocation3], 0
          %s1220 = sshll.u32 %s37, 4
          %s1221 = int_to_ptr.hbm [resolvable:$true] %s1220
          %s1222 = sshll.u32 [#allocation2], 4
          %s1223 = int_to_ptr.vmem [resolvable:$true] %s1222
          %1228 = dma.hbm_to_vmem [thread:$0]  %s1221, 512, %s1223, [#allocation3], 128, 128, 8
        $region80: #{informer_decoder_forward.1} parent=11 // pred_fallthru
          _
        // Predicated region
        $region81: #{informer_decoder_forward.1} parent=11 // pred_check
          %p1229 = pneg %p538
        $region82: #{informer_decoder_forward.1} parent=11 // pred_check_branch
          %1231 = sbr.rel (%p1229) target = $region84
        $region83: #{informer_decoder_forward.1} parent=11 // pred_region
          _
        $region84: #{informer_decoder_forward.1} parent=11 // pred_fallthru
          _
        // Predicated region
        $region85: #{informer_decoder_forward.1} parent=11 // pred_check
          %p1232 = pneg %p559
        $region86: #{informer_decoder_forward.1} parent=11 // pred_check_branch
          %1234 = sbr.rel (%p1232) target = $region88
        $region87: #{informer_decoder_forward.1} parent=11 // pred_region
          %1236 = vsyncadd [#allocation5], 0
          %s1237 = sshll.u32 %s41, 4
          %s1238 = int_to_ptr.hbm [resolvable:$true] %s1237
          %s1239 = sshll.u32 [#allocation4], 4
          %s1240 = int_to_ptr.vmem [resolvable:$true] %s1239
          %1245 = dma.hbm_to_vmem [thread:$0]  %s1238, 512, %s1240, [#allocation5], 128, 128, 8
        $region88: #{informer_decoder_forward.1} parent=11 // pred_fallthru
          _
        // Predicated region
        $region89: #{informer_decoder_forward.1} parent=11 // pred_check
          %p1246 = pneg %p580
        $region90: #{informer_decoder_forward.1} parent=11 // pred_check_branch
          %1248 = sbr.rel (%p1246) target = $region92
        $region91: #{informer_decoder_forward.1} parent=11 // pred_region
          _
        $region92: #{informer_decoder_forward.1} parent=11 // pred_fallthru
          _
        // Predicated region
        $region93: #{informer_decoder_forward.1} parent=11 // pred_check
          %p1249 = pneg %p601
        $region94: #{informer_decoder_forward.1} parent=11 // pred_check_branch
          %1251 = sbr.rel (%p1249) target = $region96
        $region95: #{informer_decoder_forward.1} parent=11 // pred_region
          _
        $region96: #{informer_decoder_forward.1} parent=11 // pred_fallthru
          _
        // Predicated region
        $region97: #{informer_decoder_forward.1} parent=11 // pred_check
          %p1252 = pneg %p622
        $region98: #{informer_decoder_forward.1} parent=11 // pred_check_branch
          %1254 = sbr.rel (%p1252) target = $region100
        $region99: #{informer_decoder_forward.1} parent=11 // pred_region
          _
        $region100: #{informer_decoder_forward.1} parent=11 // pred_fallthru
          _
        // Predicated region
        $region101: #{informer_decoder_forward.1} parent=11 // pred_check
          %p1255 = pneg %p643
        $region102: #{informer_decoder_forward.1} parent=11 // pred_check_branch
          %1257 = sbr.rel (%p1255) target = $region104
        $region103: #{informer_decoder_forward.1} parent=11 // pred_region
          _
        $region104: #{informer_decoder_forward.1} parent=11 // pred_fallthru
          _
        // Predicated region
        $region105: #{informer_decoder_forward.1} parent=11 // pred_check
          %p1258 = pneg %p664
        $region106: #{informer_decoder_forward.1} parent=11 // pred_check_branch
          %1260 = sbr.rel (%p1258) target = $region108
        $region107: #{informer_decoder_forward.1} parent=11 // pred_region
          _
        $region108: #{informer_decoder_forward.1} parent=11 // pred_fallthru
          _
        // Predicated region
        $region109: #{informer_decoder_forward.1} parent=11 // pred_check
          %p1261 = pneg %p685
        $region110: #{informer_decoder_forward.1} parent=11 // pred_check_branch
          %1263 = sbr.rel (%p1261) target = $region112
        $region111: #{informer_decoder_forward.1} parent=11 // pred_region
          %1265 = vsyncadd [#allocation5], 0
          %s1266 = sshll.u32 %s53, 4
          %s1267 = int_to_ptr.hbm [resolvable:$true] %s1266
          %s1268 = sshll.u32 [#allocation6], 4
          %s1269 = int_to_ptr.vmem [resolvable:$true] %s1268
          %1274 = dma.hbm_to_vmem [thread:$0]  %s1267, 512, %s1269, [#allocation5], 128, 128, 8
        $region112: #{informer_decoder_forward.1} parent=11 // pred_fallthru
          _
        // Predicated region
        $region113: #{informer_decoder_forward.1} parent=11 // pred_check
          %p1275 = pneg %p706
        $region114: #{informer_decoder_forward.1} parent=11 // pred_check_branch
          %1277 = sbr.rel (%p1275) target = $region116
        $region115: #{informer_decoder_forward.1} parent=11 // pred_region
          _
        $region116: #{informer_decoder_forward.1} parent=11 // pred_fallthru
          _
        // Predicated region
        $region117: #{informer_decoder_forward.1} parent=11 // pred_check
          %p1278 = pneg %p727
        $region118: #{informer_decoder_forward.1} parent=11 // pred_check_branch
          %1280 = sbr.rel (%p1278) target = $region120
        $region119: #{informer_decoder_forward.1} parent=11 // pred_region
          _
        $region120: #{informer_decoder_forward.1} parent=11 // pred_fallthru
          _
        // Predicated region
        $region121: #{informer_decoder_forward.1} parent=11 // pred_check
          %p1281 = pneg %p748
        $region122: #{informer_decoder_forward.1} parent=11 // pred_check_branch
          %1283 = sbr.rel (%p1281) target = $region124
        $region123: #{informer_decoder_forward.1} parent=11 // pred_region
          _
        $region124: #{informer_decoder_forward.1} parent=11 // pred_fallthru
          _
        // Predicated region
        $region125: #{informer_decoder_forward.1} parent=11 // pred_check
          %p1284 = pneg %p769
        $region126: #{informer_decoder_forward.1} parent=11 // pred_check_branch
          %1286 = sbr.rel (%p1284) target = $region128
        $region127: #{informer_decoder_forward.1} parent=11 // pred_region
          %1288 = vsyncadd [#allocation8], 0
          %s1289 = sshll.u32 %s61, 4
          %s1290 = int_to_ptr.hbm [resolvable:$true] %s1289
          %s1291 = sshll.u32 [#allocation7], 4
          %s1292 = int_to_ptr.vmem [resolvable:$true] %s1291
          %1297 = dma.hbm_to_vmem [thread:$0]  %s1290, 512, %s1292, [#allocation8], 128, 128, 8
        $region128: #{informer_decoder_forward.1} parent=11 // pred_fallthru
          _
        // Predicated region
        $region129: #{informer_decoder_forward.1} parent=11 // pred_check
          %p1298 = pneg %p790
        $region130: #{informer_decoder_forward.1} parent=11 // pred_check_branch
          %1300 = sbr.rel (%p1298) target = $region132
        $region131: #{informer_decoder_forward.1} parent=11 // pred_region
          _
        $region132: #{informer_decoder_forward.1} parent=11 // pred_fallthru
          _
        // Predicated region
        $region133: #{informer_decoder_forward.1} parent=11 // pred_check
          %p1301 = pneg %p811
        $region134: #{informer_decoder_forward.1} parent=11 // pred_check_branch
          %1303 = sbr.rel (%p1301) target = $region136
        $region135: #{informer_decoder_forward.1} parent=11 // pred_region
          %1305 = vsyncadd [#allocation8], 0
          %s1306 = sshll.u32 %s65, 4
          %s1307 = int_to_ptr.hbm [resolvable:$true] %s1306
          %s1308 = sshll.u32 [#allocation9], 4
          %s1309 = int_to_ptr.vmem [resolvable:$true] %s1308
          %1314 = dma.hbm_to_vmem [thread:$0]  %s1307, 512, %s1309, [#allocation8], 128, 128, 8
        $region136: #{informer_decoder_forward.1} parent=11 // pred_fallthru
          _
        // Predicated region
        $region137: #{informer_decoder_forward.1} parent=11 // pred_check
          %p1315 = pneg %p832
        $region138: #{informer_decoder_forward.1} parent=11 // pred_check_branch
          %1317 = sbr.rel (%p1315) target = $region140
        $region139: #{informer_decoder_forward.1} parent=11 // pred_region
          _
        $region140: #{informer_decoder_forward.1} parent=11 // pred_fallthru
          _
        // Predicated region
        $region141: #{informer_decoder_forward.1} parent=11 // pred_check
          %p1318 = pneg %p853
        $region142: #{informer_decoder_forward.1} parent=11 // pred_check_branch
          %1320 = sbr.rel (%p1318) target = $region144
        $region143: #{informer_decoder_forward.1} parent=11 // pred_region
          %1322 = vsyncadd [#allocation11], 0
          %s1323 = sshll.u32 %s69, 4
          %s1324 = int_to_ptr.hbm [resolvable:$true] %s1323
          %s1325 = sshll.u32 [#allocation10], 4
          %s1326 = int_to_ptr.vmem [resolvable:$true] %s1325
          %1331 = dma.hbm_to_vmem [thread:$0]  %s1324, 512, %s1326, [#allocation11], 128, 128, 8
        $region144: #{informer_decoder_forward.1} parent=11 // pred_fallthru
          _
        // Predicated region
        $region145: #{informer_decoder_forward.1} parent=11 // pred_check
          %p1332 = pneg %p874
        $region146: #{informer_decoder_forward.1} parent=11 // pred_check_branch
          %1334 = sbr.rel (%p1332) target = $region148
        $region147: #{informer_decoder_forward.1} parent=11 // pred_region
          _
        $region148: #{informer_decoder_forward.1} parent=11 // pred_fallthru
          _
        // Predicated region
        $region149: #{informer_decoder_forward.1} parent=11 // pred_check
          %p1335 = pneg %p895
        $region150: #{informer_decoder_forward.1} parent=11 // pred_check_branch
          %1337 = sbr.rel (%p1335) target = $region152
        $region151: #{informer_decoder_forward.1} parent=11 // pred_region
          _
        $region152: #{informer_decoder_forward.1} parent=11 // pred_fallthru
          _
        // Predicated region
        $region153: #{informer_decoder_forward.1} parent=11 // pred_check
          %p1338 = pneg %p916
        $region154: #{informer_decoder_forward.1} parent=11 // pred_check_branch
          %1340 = sbr.rel (%p1338) target = $region156
        $region155: #{informer_decoder_forward.1} parent=11 // pred_region
          _
        $region156: #{informer_decoder_forward.1} parent=11 // pred_fallthru
          _
        // Predicated region
        $region157: #{informer_decoder_forward.1} parent=11 // pred_check
          %p1341 = pneg %p937
        $region158: #{informer_decoder_forward.1} parent=11 // pred_check_branch
          %1343 = sbr.rel (%p1341) target = $region160
        $region159: #{informer_decoder_forward.1} parent=11 // pred_region
          %1345 = vsyncadd [#allocation11], 0
          %s1346 = sshll.u32 %s77, 4
          %s1347 = int_to_ptr.hbm [resolvable:$true] %s1346
          %s1348 = sshll.u32 [#allocation12], 4
          %s1349 = int_to_ptr.vmem [resolvable:$true] %s1348
          %1354 = dma.hbm_to_vmem [thread:$0]  %s1347, 512, %s1349, [#allocation11], 128, 128, 8
        $region160: #{informer_decoder_forward.1} parent=11 // pred_fallthru
          _
        // Predicated region
        $region161: #{informer_decoder_forward.1} parent=11 // pred_check
          %p1355 = pneg %p958
        $region162: #{informer_decoder_forward.1} parent=11 // pred_check_branch
          %1357 = sbr.rel (%p1355) target = $region164
        $region163: #{informer_decoder_forward.1} parent=11 // pred_region
          _
        $region164: #{informer_decoder_forward.1} parent=11 // pred_fallthru
          _
        // Predicated region
        $region165: #{informer_decoder_forward.1} parent=11 // pred_check
          %p1358 = pneg %p979
        $region166: #{informer_decoder_forward.1} parent=11 // pred_check_branch
          %1360 = sbr.rel (%p1358) target = $region168
        $region167: #{informer_decoder_forward.1} parent=11 // pred_region
          %1362 = vsyncadd [#allocation14], 0
          %s1363 = sshll.u32 %s81, 4
          %s1364 = int_to_ptr.hbm [resolvable:$true] %s1363
          %s1365 = sshll.u32 [#allocation13], 4
          %s1366 = int_to_ptr.vmem [resolvable:$true] %s1365
          %1371 = dma.hbm_to_vmem [thread:$0]  %s1364, 512, %s1366, [#allocation14], 128, 128, 8
        $region168: #{informer_decoder_forward.1} parent=11 // pred_fallthru
          _
        // Predicated region
        $region169: #{informer_decoder_forward.1} parent=11 // pred_check
          %p1372 = pneg %p1000
        $region170: #{informer_decoder_forward.1} parent=11 // pred_check_branch
          %1374 = sbr.rel (%p1372) target = $region172
        $region171: #{informer_decoder_forward.1} parent=11 // pred_region
          _
        $region172: #{informer_decoder_forward.1} parent=11 // pred_fallthru
          _
        // Predicated region
        $region173: #{informer_decoder_forward.1} parent=11 // pred_check
          %p1375 = pneg %p1021
        $region174: #{informer_decoder_forward.1} parent=11 // pred_check_branch
          %1377 = sbr.rel (%p1375) target = $region176
        $region175: #{informer_decoder_forward.1} parent=11 // pred_region
          _
        $region176: #{informer_decoder_forward.1} parent=11 // pred_fallthru
          _
        // Predicated region
        $region177: #{informer_decoder_forward.1} parent=11 // pred_check
          %p1378 = pneg %p1042
        $region178: #{informer_decoder_forward.1} parent=11 // pred_check_branch
          %1380 = sbr.rel (%p1378) target = $region180
        $region179: #{informer_decoder_forward.1} parent=11 // pred_region
          _
        $region180: #{informer_decoder_forward.1} parent=11 // pred_fallthru
          _
        // Predicated region
        $region181: #{informer_decoder_forward.1} parent=11 // pred_check
          %p1381 = pneg %p1063
        $region182: #{informer_decoder_forward.1} parent=11 // pred_check_branch
          %1383 = sbr.rel (%p1381) target = $region184
        $region183: #{informer_decoder_forward.1} parent=11 // pred_region
          _
        $region184: #{informer_decoder_forward.1} parent=11 // pred_fallthru
          _
        // Predicated region
        $region185: #{informer_decoder_forward.1} parent=11 // pred_check
          %p1384 = pneg %p1084
        $region186: #{informer_decoder_forward.1} parent=11 // pred_check_branch
          %1386 = sbr.rel (%p1384) target = $region188
        $region187: #{informer_decoder_forward.1} parent=11 // pred_region
          _
        $region188: #{informer_decoder_forward.1} parent=11 // pred_fallthru
          _
        // Predicated region
        $region189: #{informer_decoder_forward.1} parent=11 // pred_check
          %p1387 = pneg %p1105
        $region190: #{informer_decoder_forward.1} parent=11 // pred_check_branch
          %1389 = sbr.rel (%p1387) target = $region192
        $region191: #{informer_decoder_forward.1} parent=11 // pred_region
          _
        $region192: #{informer_decoder_forward.1} parent=11 // pred_fallthru
          _
        // Predicated region
        $region193: #{informer_decoder_forward.1} parent=11 // pred_check
          %p1390 = pneg %p1126
        $region194: #{informer_decoder_forward.1} parent=11 // pred_check_branch
          %1392 = sbr.rel (%p1390) target = $region196
        $region195: #{informer_decoder_forward.1} parent=11 // pred_region
          _
        $region196: #{informer_decoder_forward.1} parent=11 // pred_fallthru
          _
      $region12: #{informer_decoder_forward.1} parent=5 // pred_fallthru
        _
      %p1393 = scmp.lt.s32.totalorder %s108, 2
      // Predicated region
      $region197: #{informer_decoder_forward.1} parent=5 // pred_check
        %p1394 = pneg %p1393
      $region198: #{informer_decoder_forward.1} parent=5 // pred_check_branch
        %1396 = sbr.rel (%p1394) target = $region200
      $region199: #{informer_decoder_forward.1} parent=5 // pred_region
        // Predicated region
        $region201: #{informer_decoder_forward.1} parent=199 // pred_check
          %p1397 = pneg %p128
        $region202: #{informer_decoder_forward.1} parent=199 // pred_check_branch
          %1399 = sbr.rel (%p1397) target = $region204
        $region203: #{informer_decoder_forward.1} parent=199 // pred_region
          %p1400 = scmp.lt.s32.totalorder %s108, 1
          %s1401 = scalar_select %p1400, %s108, 1
          %s1402 = smul.addr %s1401, 8
          %s1403 = scalar_lea.vmem %s1, %s1402
        $region204: #{informer_decoder_forward.1} parent=199 // pred_fallthru
          _
        // Predicated region
        $region205: #{informer_decoder_forward.1} parent=199 // pred_check
          %p1404 = pneg %p154
        $region206: #{informer_decoder_forward.1} parent=199 // pred_check_branch
          %1406 = sbr.rel (%p1404) target = $region208
        $region207: #{informer_decoder_forward.1} parent=199 // pred_region
          %p1407 = scmp.lt.s32.totalorder %s108, 1
          %s1408 = scalar_select %p1407, %s108, 1
          %s1409 = smul.addr %s1408, 2
          %s1410 = smul.addr %s1409, 8
          %s1411 = scalar_lea.vmem %s3, %s1410
        $region208: #{informer_decoder_forward.1} parent=199 // pred_fallthru
          _
      $region200: #{informer_decoder_forward.1} parent=5 // pred_fallthru
        _
      %p1412 = scmp.le.s32.totalorder 1, %s108
      %p1413 = scmp.lt.s32.totalorder %s108, 3
      %p1414 = pnand %p1412, %p1413
      %p1415 = pneg %p1414
      // Predicated region
      $region209: #{informer_decoder_forward.1} parent=5 // pred_check
        _
      $region210: #{informer_decoder_forward.1} parent=5 // pred_check_branch
        %1417 = sbr.rel (%p1414) target = $region212
      $region211: #{informer_decoder_forward.1} parent=5 // pred_region
        %s1418 = ssub.s32 %s108, 1
        // Predicated region
        $region213: #{informer_decoder_forward.1} parent=211 // pred_check
          %p1419 = pneg %p517
        $region214: #{informer_decoder_forward.1} parent=211 // pred_check_branch
          %1421 = sbr.rel (%p1419) target = $region216
        $region215: #{informer_decoder_forward.1} parent=211 // pred_region
          %1423 = dma.done [#allocation3], 512
        $region216: #{informer_decoder_forward.1} parent=211 // pred_fallthru
          _
        // Predicated region
        $region217: #{informer_decoder_forward.1} parent=211 // pred_check
          %p1424 = pneg %p559
        $region218: #{informer_decoder_forward.1} parent=211 // pred_check_branch
          %1426 = sbr.rel (%p1424) target = $region220
        $region219: #{informer_decoder_forward.1} parent=211 // pred_region
          %1428 = dma.done [#allocation5], 512
        $region220: #{informer_decoder_forward.1} parent=211 // pred_fallthru
          _
        // Predicated region
        $region221: #{informer_decoder_forward.1} parent=211 // pred_check
          %p1429 = pneg %p685
        $region222: #{informer_decoder_forward.1} parent=211 // pred_check_branch
          %1431 = sbr.rel (%p1429) target = $region224
        $region223: #{informer_decoder_forward.1} parent=211 // pred_region
          %1433 = dma.done [#allocation5], 512
        $region224: #{informer_decoder_forward.1} parent=211 // pred_fallthru
          _
        // Predicated region
        $region225: #{informer_decoder_forward.1} parent=211 // pred_check
          %p1434 = pneg %p769
        $region226: #{informer_decoder_forward.1} parent=211 // pred_check_branch
          %1436 = sbr.rel (%p1434) target = $region228
        $region227: #{informer_decoder_forward.1} parent=211 // pred_region
          %1438 = dma.done [#allocation8], 512
        $region228: #{informer_decoder_forward.1} parent=211 // pred_fallthru
          _
        // Predicated region
        $region229: #{informer_decoder_forward.1} parent=211 // pred_check
          %p1439 = pneg %p811
        $region230: #{informer_decoder_forward.1} parent=211 // pred_check_branch
          %1441 = sbr.rel (%p1439) target = $region232
        $region231: #{informer_decoder_forward.1} parent=211 // pred_region
          %1443 = dma.done [#allocation8], 512
        $region232: #{informer_decoder_forward.1} parent=211 // pred_fallthru
          _
        // Predicated region
        $region233: #{informer_decoder_forward.1} parent=211 // pred_check
          %p1444 = pneg %p853
        $region234: #{informer_decoder_forward.1} parent=211 // pred_check_branch
          %1446 = sbr.rel (%p1444) target = $region236
        $region235: #{informer_decoder_forward.1} parent=211 // pred_region
          %1448 = dma.done [#allocation11], 512
        $region236: #{informer_decoder_forward.1} parent=211 // pred_fallthru
          _
        // Predicated region
        $region237: #{informer_decoder_forward.1} parent=211 // pred_check
          %p1449 = pneg %p937
        $region238: #{informer_decoder_forward.1} parent=211 // pred_check_branch
          %1451 = sbr.rel (%p1449) target = $region240
        $region239: #{informer_decoder_forward.1} parent=211 // pred_region
          %1453 = dma.done [#allocation11], 512
        $region240: #{informer_decoder_forward.1} parent=211 // pred_fallthru
          _
        // Predicated region
        $region241: #{informer_decoder_forward.1} parent=211 // pred_check
          %p1454 = pneg %p979
        $region242: #{informer_decoder_forward.1} parent=211 // pred_check_branch
          %1456 = sbr.rel (%p1454) target = $region244
        $region243: #{informer_decoder_forward.1} parent=211 // pred_region
          %1458 = dma.done [#allocation14], 512
        $region244: #{informer_decoder_forward.1} parent=211 // pred_fallthru
          _
        %p1459 = scmp.lt.s32.totalorder %s113, 1
        %s1460 = scalar_select %p1459, %s113, 1
        %s1461 = smul.addr %s1460, 8
        %s1462 = scalar_lea.vmem %s1, %s1461
        %p1463 = pneg %p134
        %p1464 = pneg %p131
        %p1465 = scmp.lt.s32.totalorder %s113, 1
        %s1466 = scalar_select %p1465, %s113, 1
        %s1467 = smul.addr %s1466, 2
        %s1468 = smul.addr %s1467, 8
        %s1469 = scalar_lea.vmem %s3, %s1468
        %p1470 = pneg %p160
        %p1471 = pneg %p157
        %p1472 = pneg %p181
        %p1473 = pneg %p178
        %p1474 = pneg %p202
        %p1475 = pneg %p199
        %p1476 = pneg %p223
        %p1477 = pneg %p220
        %p1478 = pneg %p244
        %p1479 = pneg %p241
        %p1480 = pneg %p265
        %p1481 = pneg %p262
        %p1482 = pneg %p286
        %p1483 = pneg %p283
        %p1484 = pneg %p307
        %p1485 = pneg %p304
        %p1486 = pneg %p328
        %p1487 = pneg %p325
        %p1488 = pneg %p349
        %p1489 = pneg %p346
        %p1490 = pneg %p370
        %p1491 = pneg %p367
        %p1492 = pneg %p391
        %p1493 = pneg %p388
        %p1494 = pneg %p412
        %p1495 = pneg %p409
        %p1496 = pneg %p433
        %p1497 = pneg %p430
        %p1498 = pneg %p454
        %p1499 = pneg %p451
        %p1500 = pneg %p475
        %p1501 = pneg %p472
        %p1502 = pneg %p496
        %p1503 = pneg %p493
        %p1504 = pneg %p517
        %p1505 = pneg %p514
        %p1506 = pneg %p538
        %p1507 = pneg %p535
        %p1508 = pneg %p559
        %p1509 = pneg %p556
        %p1510 = pneg %p580
        %p1511 = pneg %p577
        %p1512 = pneg %p601
        %p1513 = pneg %p598
        %p1514 = pneg %p622
        %p1515 = pneg %p619
        %p1516 = pneg %p643
        %p1517 = pneg %p640
        %p1518 = pneg %p664
        %p1519 = pneg %p661
        %p1520 = pneg %p685
        %p1521 = pneg %p682
        %p1522 = pneg %p706
        %p1523 = pneg %p703
        %p1524 = pneg %p727
        %p1525 = pneg %p724
        %p1526 = pneg %p748
        %p1527 = pneg %p745
        %p1528 = pneg %p769
        %p1529 = pneg %p766
        %p1530 = pneg %p790
        %p1531 = pneg %p787
        %p1532 = pneg %p811
        %p1533 = pneg %p808
        %p1534 = pneg %p832
        %p1535 = pneg %p829
        %p1536 = pneg %p853
        %p1537 = pneg %p850
        %p1538 = pneg %p874
        %p1539 = pneg %p871
        %p1540 = pneg %p895
        %p1541 = pneg %p892
        %p1542 = pneg %p916
        %p1543 = pneg %p913
        %p1544 = pneg %p937
        %p1545 = pneg %p934
        %p1546 = pneg %p958
        %p1547 = pneg %p955
        %p1548 = pneg %p979
        %p1549 = pneg %p976
        %p1550 = pneg %p1000
        %p1551 = pneg %p997
        %p1552 = pneg %p1021
        %p1553 = pneg %p1018
        %p1554 = pneg %p1042
        %p1555 = pneg %p1039
        %p1556 = pneg %p1063
        %p1557 = pneg %p1060
        %p1558 = pneg %p1084
        %p1559 = pneg %p1081
        %p1560 = pneg %p1105
        %p1561 = pneg %p1102
        %p1562 = pneg %p1126
        %p1563 = pneg %p1123
        %p1564 = pneg %p1152
        %p1565 = pneg %p1149
        %p1566 = scmp.lt.s32.totalorder %s113, 1
        %s1567 = scalar_select %p1566, %s113, 1
        %s1568 = smul.addr %s1567, 8
        %s1569 = scalar_lea.vmem %s97, %s1568
        %p1570 = scmp.lt.s32.totalorder %s113, 1
        %s1571 = scalar_select %p1570, %s113, 1
        %s1572 = smul.addr %s1571, 8
        %s1573 = scalar_lea.vmem %s1, %s1572
        %p1574 = scmp.lt.s32.totalorder %s113, 1
        %s1575 = scalar_select %p1574, %s113, 1
        %s1576 = smul.addr %s1575, 2
        %s1577 = smul.addr %s1576, 8
        %s1578 = scalar_lea.vmem %s3, %s1577
        %p1579 = scmp.lt.s32.totalorder %s113, 1
        %s1580 = scalar_select %p1579, %s113, 1
        %s1581 = smul.addr %s1580, 8
        %s1582 = scalar_lea.vmem %s97, %s1581
        %v1583 = vld [vmem:[%s1573] sm:$0xff]
        %v1584 = vld [vmem:[%s1578] sm:$0xff]
        %v1585 = vld [vmem:[%s1578 + $0x8] sm:$0xff]
        %v1586 = vld [vmem:[%s5] sm:$0x7]
        %v1587 = vld [vmem:[%s7] sm:$0xff]
        %vm1588 = vcmask 23552
        %v1590 = vsel %vm1588, %v1583, 0
        %vm1592 = vcmask 1042432
        %v1594 = vsel %vm1592, %v1586, 0
        %1596 = vmatpush.msra.mxu0 0.0
        %1597 = vmatpush.msra.mxu0 0.0
        %1598 = vmatpush.msra.mxu0 0.0
        %1599 = vmatpush.msra.mxu0 0.0
        %1600 = vmatpush.msra.mxu0 0.0
        %1601 = vmatpush.msra.mxu0 0.0
        %1602 = vmatpush.msra.mxu0 0.0
        %1603 = vmatpush.msra.mxu0 0.0
        %1604 = vmatpush.msra.mxu0 0.0
        %1605 = vmatpush.msra.mxu0 0.0
        %1606 = vmatpush.msra.mxu0 0.0
        %1607 = vmatpush.msra.mxu0 0.0
        %1608 = vmatpush.msra.mxu0 0.0
        %1609 = vmatpush.msra.mxu0 0.0
        %1610 = vmatpush.msra.mxu0 0.0
        %1611 = vmatpush.msra.mxu0 %v1594
        %1612 = vmatmul.f32.gmra.mxu0 %v1590
        %v1613 = vpop.f32.mrf.mxu0
        %v1614 = vadd.f32 %v1587, %v1613
        %1615 = vdwg.mxu0
        %v1616 = vlaneseq
        %v1617 = vshrl.u32 %v1616, 7
        %v1618 = vlaneseq
        %v1619 = vand.u32 %v1618, 127
        %vm1620 = vcmp.gt.s32.totalorder %v1619, %v1617
        %v1621 = vsel %vm1620, -1e+30, 0.0
        %v1622 = vld [vmem:[%s9] sm:$0xff]
        %v1623 = vld [vmem:[%s9 + $0x8] sm:$0xff]
        %v1624 = vld [vmem:[%s9 + $0x10] sm:$0xff]
        %v1625 = vld [vmem:[%s9 + $0x18] sm:$0xff]
        %v1626 = vld [vmem:[%s11] sm:$0x1]
        %v1627 = vld [vmem:[%s13] sm:$0xff]
        %v1628 = vld [vmem:[%s13 + $0x8] sm:$0xff]
        %v1629 = vld [vmem:[%s13 + $0x10] sm:$0xff]
        %v1630 = vld [vmem:[%s13 + $0x18] sm:$0xff]
        %v1631 = vld [vmem:[%s15] sm:$0x1]
        %v1632 = vld [vmem:[%s17] sm:$0x1]
        %v1633 = vld [vmem:[%s19] sm:$0x1]
        %v1635 = vperm.slane %v1626, 0
        %vm1637 = vcmask 261120
        %v1639 = vsel %vm1637, %v1614, 0
        %1641 = vmatpush.msra.mxu0 0.0
        %1642 = vmatpush.msra.mxu0 0.0
        %1643 = vmatpush.msra.mxu0 0.0
        %1644 = vmatpush.msra.mxu0 0.0
        %1645 = vmatpush.msra.mxu0 0.0
        %1646 = vmatpush.msra.mxu0 0.0
        %1647 = vmatpush.msra.mxu0 0.0
        %1648 = vmatpush.msra.mxu0 0.0
        %1649 = vmatpush.msra.mxu0 0.0
        %1650 = vmatpush.msra.mxu0 0.0
        %1651 = vmatpush.msra.mxu0 0.0
        %1652 = vmatpush.msra.mxu0 0.0
        %1653 = vmatpush.msra.mxu0 %v1625
        %1654 = vmatpush.msra.mxu0 %v1624
        %1655 = vmatpush.msra.mxu0 %v1623
        %1656 = vmatpush.msra.mxu0 %v1622
        %1657 = vmatmul.f32.gmra.mxu0 %v1639
        %v1658 = vpop.f32.mrf.mxu0
        %v1659 = vadd.f32 %v1635, %v1658
        %1660 = vdwg.mxu0
        %1662 = vrot.lane.b32.xlu0 %v1659, 96
        %v1663 = vpop.permute.xlu0 %1662
        %vm1664 = vcmask 64512
        %v1665 = vsel %vm1664, %v1659, 0
        %v1667 = vsel %vm1664, %v1663, 0
        %1669 = vmatpush.xpose.msra.mxu0 0.0
        %1670 = vmatpush.xpose.msra.mxu0 0.0
        %1671 = vmatpush.xpose.msra.mxu0 0.0
        %1672 = vmatpush.xpose.msra.mxu0 0.0
        %1673 = vmatpush.xpose.msra.mxu0 0.0
        %1674 = vmatpush.xpose.msra.mxu0 0.0
        %1675 = vmatpush.xpose.msra.mxu0 0.0
        %1676 = vmatpush.xpose.msra.mxu0 0.0
        %1677 = vmatpush.xpose.msra.mxu0 0.0
        %1678 = vmatpush.xpose.msra.mxu0 0.0
        %1679 = vmatpush.xpose.msra.mxu0 0.0
        %1680 = vmatpush.xpose.msra.mxu0 0.0
        %1681 = vmatpush.xpose.msra.mxu0 0.0
        %1682 = vmatpush.xpose.msra.mxu0 0.0
        %1683 = vmatpush.xpose.msra.mxu0 0.0
        %1684 = vmatpush.xpose.msra.mxu0 %v1667
        %1685 = vmatmul.f32.gmra.mxu0 %v1665
        %v1686 = vpop.f32.mrf.mxu0
        %v1687 = vadd.f32 0.0, %v1686
        %1688 = vdwg.mxu0
        %v1689 = vmul.f32 %v1687, 0.35355338
        %v1690 = vadd.f32 %v1689, %v1621
        %v1691 = vsel %vm1664, %v1690, -inf
        %1692 = vmax.xlane.f32.xlu0 %v1691
        %v1693 = vpop.xlane.xlu0 %1692
        %v1694 = vsub.f32 %v1690, %v1693
        %v1695 = vmul.f32 %v1694, 1.442695
        %v1696 = vpow.pop %v1695
        %v1697 = vsel %vm1664, %v1696, 0.0
        %1698 = vadd.xlane.f32.xlu0 %v1697
        %v1699 = vpop.xlane.xlu0 %1698
        %v1700 = vrcp.pop %v1699
        %v1701 = vmul.f32 %v1696, %v1700
        %1702 = vrot.lane.b32.xlu0 %v1659, 64
        %v1703 = vpop.permute.xlu0 %1702
        %v1706 = vsel %vm1664, %v1701, 0
        %1708 = vmatpush.msra.mxu0 0.0
        %1709 = vmatpush.msra.mxu0 0.0
        %1710 = vmatpush.msra.mxu0 0.0
        %1711 = vmatpush.msra.mxu0 0.0
        %1712 = vmatpush.msra.mxu0 0.0
        %1713 = vmatpush.msra.mxu0 0.0
        %1714 = vmatpush.msra.mxu0 0.0
        %1715 = vmatpush.msra.mxu0 0.0
        %1716 = vmatpush.msra.mxu0 0.0
        %1717 = vmatpush.msra.mxu0 0.0
        %1718 = vmatpush.msra.mxu0 0.0
        %1719 = vmatpush.msra.mxu0 0.0
        %1720 = vmatpush.msra.mxu0 0.0
        %1721 = vmatpush.msra.mxu0 0.0
        %1722 = vmatpush.msra.mxu0 0.0
        %1723 = vmatpush.msra.mxu0 %v1703
        %1724 = vmatmul.f32.gmra.mxu0 %v1706
        %v1725 = vpop.f32.mrf.mxu0
        %v1726 = vadd.f32 0.0, %v1725
        %1727 = vdwg.mxu0
        %1728 = vrot.lane.b32.xlu0 %v1659, 120
        %v1729 = vpop.permute.xlu0 %1728
        %1730 = vrot.lane.b32.xlu0 %v1659, 88
        %v1731 = vpop.permute.xlu0 %1730
        %v1732 = vsel %vm1664, %v1729, 0
        %v1734 = vsel %vm1664, %v1731, 0
        %1736 = vmatpush.xpose.msra.mxu0 0.0
        %1737 = vmatpush.xpose.msra.mxu0 0.0
        %1738 = vmatpush.xpose.msra.mxu0 0.0
        %1739 = vmatpush.xpose.msra.mxu0 0.0
        %1740 = vmatpush.xpose.msra.mxu0 0.0
        %1741 = vmatpush.xpose.msra.mxu0 0.0
        %1742 = vmatpush.xpose.msra.mxu0 0.0
        %1743 = vmatpush.xpose.msra.mxu0 0.0
        %1744 = vmatpush.xpose.msra.mxu0 0.0
        %1745 = vmatpush.xpose.msra.mxu0 0.0
        %1746 = vmatpush.xpose.msra.mxu0 0.0
        %1747 = vmatpush.xpose.msra.mxu0 0.0
        %1748 = vmatpush.xpose.msra.mxu0 0.0
        %1749 = vmatpush.xpose.msra.mxu0 0.0
        %1750 = vmatpush.xpose.msra.mxu0 0.0
        %1751 = vmatpush.xpose.msra.mxu0 %v1734
        %1752 = vmatmul.f32.gmra.mxu0 %v1732
        %v1753 = vpop.f32.mrf.mxu0
        %v1754 = vadd.f32 0.0, %v1753
        %1755 = vdwg.mxu0
        %v1756 = vmul.f32 %v1754, 0.35355338
        %v1757 = vadd.f32 %v1756, %v1621
        %v1758 = vsel %vm1664, %v1757, -inf
        %1759 = vmax.xlane.f32.xlu0 %v1758
        %v1760 = vpop.xlane.xlu0 %1759
        %v1761 = vsub.f32 %v1757, %v1760
        %v1762 = vmul.f32 %v1761, 1.442695
        %v1763 = vpow.pop %v1762
        %v1764 = vsel %vm1664, %v1763, 0.0
        %1765 = vadd.xlane.f32.xlu0 %v1764
        %v1766 = vpop.xlane.xlu0 %1765
        %v1767 = vrcp.pop %v1766
        %v1768 = vmul.f32 %v1763, %v1767
        %1769 = vrot.lane.b32.xlu0 %v1659, 56
        %v1770 = vpop.permute.xlu0 %1769
        %v1773 = vsel %vm1664, %v1768, 0
        %1775 = vmatpush.msra.mxu0 0.0
        %1776 = vmatpush.msra.mxu0 0.0
        %1777 = vmatpush.msra.mxu0 0.0
        %1778 = vmatpush.msra.mxu0 0.0
        %1779 = vmatpush.msra.mxu0 0.0
        %1780 = vmatpush.msra.mxu0 0.0
        %1781 = vmatpush.msra.mxu0 0.0
        %1782 = vmatpush.msra.mxu0 0.0
        %1783 = vmatpush.msra.mxu0 0.0
        %1784 = vmatpush.msra.mxu0 0.0
        %1785 = vmatpush.msra.mxu0 0.0
        %1786 = vmatpush.msra.mxu0 0.0
        %1787 = vmatpush.msra.mxu0 0.0
        %1788 = vmatpush.msra.mxu0 0.0
        %1789 = vmatpush.msra.mxu0 0.0
        %1790 = vmatpush.msra.mxu0 %v1770
        %1791 = vmatmul.f32.gmra.mxu0 %v1773
        %v1792 = vpop.f32.mrf.mxu0
        %v1793 = vadd.f32 0.0, %v1792
        %1794 = vdwg.mxu0
        %1795 = vrot.lane.b32.xlu0 %v1659, 112
        %v1796 = vpop.permute.xlu0 %1795
        %1797 = vrot.lane.b32.xlu0 %v1659, 80
        %v1798 = vpop.permute.xlu0 %1797
        %v1799 = vsel %vm1664, %v1796, 0
        %v1801 = vsel %vm1664, %v1798, 0
        %1803 = vmatpush.xpose.msra.mxu0 0.0
        %1804 = vmatpush.xpose.msra.mxu0 0.0
        %1805 = vmatpush.xpose.msra.mxu0 0.0
        %1806 = vmatpush.xpose.msra.mxu0 0.0
        %1807 = vmatpush.xpose.msra.mxu0 0.0
        %1808 = vmatpush.xpose.msra.mxu0 0.0
        %1809 = vmatpush.xpose.msra.mxu0 0.0
        %1810 = vmatpush.xpose.msra.mxu0 0.0
        %1811 = vmatpush.xpose.msra.mxu0 0.0
        %1812 = vmatpush.xpose.msra.mxu0 0.0
        %1813 = vmatpush.xpose.msra.mxu0 0.0
        %1814 = vmatpush.xpose.msra.mxu0 0.0
        %1815 = vmatpush.xpose.msra.mxu0 0.0
        %1816 = vmatpush.xpose.msra.mxu0 0.0
        %1817 = vmatpush.xpose.msra.mxu0 0.0
        %1818 = vmatpush.xpose.msra.mxu0 %v1801
        %1819 = vmatmul.f32.gmra.mxu0 %v1799
        %v1820 = vpop.f32.mrf.mxu0
        %v1821 = vadd.f32 0.0, %v1820
        %1822 = vdwg.mxu0
        %v1823 = vmul.f32 %v1821, 0.35355338
        %v1824 = vadd.f32 %v1823, %v1621
        %v1825 = vsel %vm1664, %v1824, -inf
        %1826 = vmax.xlane.f32.xlu0 %v1825
        %v1827 = vpop.xlane.xlu0 %1826
        %v1828 = vsub.f32 %v1824, %v1827
        %v1829 = vmul.f32 %v1828, 1.442695
        %v1830 = vpow.pop %v1829
        %v1831 = vsel %vm1664, %v1830, 0.0
        %1832 = vadd.xlane.f32.xlu0 %v1831
        %v1833 = vpop.xlane.xlu0 %1832
        %v1834 = vrcp.pop %v1833
        %v1835 = vmul.f32 %v1830, %v1834
        %1836 = vrot.lane.b32.xlu0 %v1659, 48
        %v1837 = vpop.permute.xlu0 %1836
        %v1840 = vsel %vm1664, %v1835, 0
        %1842 = vmatpush.msra.mxu0 0.0
        %1843 = vmatpush.msra.mxu0 0.0
        %1844 = vmatpush.msra.mxu0 0.0
        %1845 = vmatpush.msra.mxu0 0.0
        %1846 = vmatpush.msra.mxu0 0.0
        %1847 = vmatpush.msra.mxu0 0.0
        %1848 = vmatpush.msra.mxu0 0.0
        %1849 = vmatpush.msra.mxu0 0.0
        %1850 = vmatpush.msra.mxu0 0.0
        %1851 = vmatpush.msra.mxu0 0.0
        %1852 = vmatpush.msra.mxu0 0.0
        %1853 = vmatpush.msra.mxu0 0.0
        %1854 = vmatpush.msra.mxu0 0.0
        %1855 = vmatpush.msra.mxu0 0.0
        %1856 = vmatpush.msra.mxu0 0.0
        %1857 = vmatpush.msra.mxu0 %v1837
        %1858 = vmatmul.f32.gmra.mxu0 %v1840
        %v1859 = vpop.f32.mrf.mxu0
        %v1860 = vadd.f32 0.0, %v1859
        %1861 = vdwg.mxu0
        %1862 = vrot.lane.b32.xlu0 %v1659, 104
        %v1863 = vpop.permute.xlu0 %1862
        %1864 = vrot.lane.b32.xlu0 %v1659, 72
        %v1865 = vpop.permute.xlu0 %1864
        %v1866 = vsel %vm1664, %v1863, 0
        %v1868 = vsel %vm1664, %v1865, 0
        %1870 = vmatpush.xpose.msra.mxu0 0.0
        %1871 = vmatpush.xpose.msra.mxu0 0.0
        %1872 = vmatpush.xpose.msra.mxu0 0.0
        %1873 = vmatpush.xpose.msra.mxu0 0.0
        %1874 = vmatpush.xpose.msra.mxu0 0.0
        %1875 = vmatpush.xpose.msra.mxu0 0.0
        %1876 = vmatpush.xpose.msra.mxu0 0.0
        %1877 = vmatpush.xpose.msra.mxu0 0.0
        %1878 = vmatpush.xpose.msra.mxu0 0.0
        %1879 = vmatpush.xpose.msra.mxu0 0.0
        %1880 = vmatpush.xpose.msra.mxu0 0.0
        %1881 = vmatpush.xpose.msra.mxu0 0.0
        %1882 = vmatpush.xpose.msra.mxu0 0.0
        %1883 = vmatpush.xpose.msra.mxu0 0.0
        %1884 = vmatpush.xpose.msra.mxu0 0.0
        %1885 = vmatpush.xpose.msra.mxu0 %v1868
        %1886 = vmatmul.f32.gmra.mxu0 %v1866
        %v1887 = vpop.f32.mrf.mxu0
        %v1888 = vadd.f32 0.0, %v1887
        %1889 = vdwg.mxu0
        %v1890 = vmul.f32 %v1888, 0.35355338
        %v1891 = vadd.f32 %v1890, %v1621
        %v1892 = vsel %vm1664, %v1891, -inf
        %1893 = vmax.xlane.f32.xlu0 %v1892
        %v1894 = vpop.xlane.xlu0 %1893
        %v1895 = vsub.f32 %v1891, %v1894
        %v1896 = vmul.f32 %v1895, 1.442695
        %v1897 = vpow.pop %v1896
        %v1898 = vsel %vm1664, %v1897, 0.0
        %1899 = vadd.xlane.f32.xlu0 %v1898
        %v1900 = vpop.xlane.xlu0 %1899
        %v1901 = vrcp.pop %v1900
        %v1902 = vmul.f32 %v1897, %v1901
        %1903 = vrot.lane.b32.xlu0 %v1659, 40
        %v1904 = vpop.permute.xlu0 %1903
        %v1907 = vsel %vm1664, %v1902, 0
        %1909 = vmatpush.msra.mxu0 0.0
        %1910 = vmatpush.msra.mxu0 0.0
        %1911 = vmatpush.msra.mxu0 0.0
        %1912 = vmatpush.msra.mxu0 0.0
        %1913 = vmatpush.msra.mxu0 0.0
        %1914 = vmatpush.msra.mxu0 0.0
        %1915 = vmatpush.msra.mxu0 0.0
        %1916 = vmatpush.msra.mxu0 0.0
        %1917 = vmatpush.msra.mxu0 0.0
        %1918 = vmatpush.msra.mxu0 0.0
        %1919 = vmatpush.msra.mxu0 0.0
        %1920 = vmatpush.msra.mxu0 0.0
        %1921 = vmatpush.msra.mxu0 0.0
        %1922 = vmatpush.msra.mxu0 0.0
        %1923 = vmatpush.msra.mxu0 0.0
        %1924 = vmatpush.msra.mxu0 %v1904
        %1925 = vmatmul.f32.gmra.mxu0 %v1907
        %v1926 = vpop.f32.mrf.mxu0
        %v1927 = vadd.f32 0.0, %v1926
        %1928 = vdwg.mxu0
        %v1930 = vrot.slane %v1726, 3
        %v1933 = vrot.slane %v1793, 6
        %v1935 = vrot.slane %v1793, 1
        %v1938 = vrot.slane %v1860, 4
        %v1940 = vrot.slane %v1860, 7
        %v1943 = vrot.slane %v1927, 2
        %v1945 = vrot.slane %v1927, 5
        %vm1947 = vcmask 1040384
        %v1948 = vsel %vm1947, %v1726, %v1930
        %vm1949 = vcmask 1041408
        %v1950 = vsel %vm1949, %v1948, %v1933
        %v1951 = vsel %vm1592, %v1950, %v1935
        %vm1952 = vcmask 1043456
        %v1953 = vsel %vm1952, %v1951, %v1938
        %vm1954 = vcmask 1044480
        %v1955 = vsel %vm1954, %v1953, %v1940
        %vm1956 = vcmask 1045504
        %v1957 = vsel %vm1956, %v1955, %v1943
        %vm1958 = vcmask 1046528
        %v1959 = vsel %vm1958, %v1957, %v1945
        %v1960 = vrot.slane %v1726, 1
        %v1962 = vrot.slane %v1726, 4
        %v1964 = vrot.slane %v1793, 7
        %v1966 = vrot.slane %v1793, 2
        %v1968 = vrot.slane %v1860, 5
        %v1970 = vrot.slane %v1927, 3
        %v1972 = vrot.slane %v1927, 6
        %v1974 = vsel %vm1947, %v1960, %v1962
        %v1975 = vsel %vm1949, %v1974, %v1964
        %v1976 = vsel %vm1592, %v1975, %v1966
        %v1977 = vsel %vm1952, %v1976, %v1968
        %v1978 = vsel %vm1954, %v1977, %v1860
        %v1979 = vsel %vm1956, %v1978, %v1970
        %v1980 = vsel %vm1958, %v1979, %v1972
        %v1981 = vrot.slane %v1726, 2
        %v1983 = vrot.slane %v1726, 5
        %v1985 = vrot.slane %v1793, 3
        %v1987 = vrot.slane %v1860, 6
        %v1989 = vrot.slane %v1860, 1
        %v1991 = vrot.slane %v1927, 4
        %v1993 = vrot.slane %v1927, 7
        %v1995 = vsel %vm1947, %v1981, %v1983
        %v1996 = vsel %vm1949, %v1995, %v1793
        %v1997 = vsel %vm1592, %v1996, %v1985
        %v1998 = vsel %vm1952, %v1997, %v1987
        %v1999 = vsel %vm1954, %v1998, %v1989
        %v2000 = vsel %vm1956, %v1999, %v1991
        %v2001 = vsel %vm1958, %v2000, %v1993
        %v2002 = vrot.slane %v1726, 6
        %v2004 = vrot.slane %v1793, 4
        %v2006 = vrot.slane %v1860, 2
        %v2008 = vsel %vm1947, %v1930, %v2002
        %v2009 = vsel %vm1949, %v2008, %v1935
        %v2010 = vsel %vm1592, %v2009, %v2004
        %v2011 = vsel %vm1952, %v2010, %v1940
        %v2012 = vsel %vm1954, %v2011, %v2006
        %v2013 = vsel %vm1956, %v2012, %v1945
        %v2014 = vsel %vm1958, %v2013, %v1927
        %2016 = vrot.lane.b32.xlu0 %v1980, 8
        %v2017 = vpop.permute.xlu0 %2016
        %2020 = vrot.lane.b32.xlu0 %v2001, 16
        %v2021 = vpop.permute.xlu0 %2020
        %2024 = vrot.lane.b32.xlu0 %v2014, 24
        %v2025 = vpop.permute.xlu0 %2024
        %v2027 = vsel %vm1664, %v1959, %v2017
        %vm2028 = vcmask 130048
        %v2029 = vsel %vm2028, %v2027, %v2021
        %vm2030 = vcmask 195584
        %v2031 = vsel %vm2030, %v2029, %v2025
        %v2033 = vperm.slane %v1631, 0
        %v2036 = vsel %vm1637, %v2031, 0
        %2038 = vmatpush.msra.mxu0 0.0
        %2039 = vmatpush.msra.mxu0 0.0
        %2040 = vmatpush.msra.mxu0 0.0
        %2041 = vmatpush.msra.mxu0 0.0
        %2042 = vmatpush.msra.mxu0 0.0
        %2043 = vmatpush.msra.mxu0 0.0
        %2044 = vmatpush.msra.mxu0 0.0
        %2045 = vmatpush.msra.mxu0 0.0
        %2046 = vmatpush.msra.mxu0 0.0
        %2047 = vmatpush.msra.mxu0 0.0
        %2048 = vmatpush.msra.mxu0 0.0
        %2049 = vmatpush.msra.mxu0 0.0
        %2050 = vmatpush.msra.mxu0 %v1630
        %2051 = vmatpush.msra.mxu0 %v1629
        %2052 = vmatpush.msra.mxu0 %v1628
        %2053 = vmatpush.msra.mxu0 %v1627
        %2054 = vmatmul.f32.gmra.mxu0 %v2036
        %v2055 = vpop.f32.mrf.mxu0
        %v2056 = vadd.f32 %v2033, %v2055
        %2057 = vdwg.mxu0
        %v2058 = vadd.f32 %v1614, %v2056
        %v2059 = vsel %vm1637, %v2058, 0.0
        %2060 = vadd.xlane.f32.xlu0 %v2059
        %v2061 = vpop.xlane.xlu0 %2060
        %v2062 = vrcp.pop 32.0
        %v2063 = vmul.f32 32.0, %v2062
        %v2064 = vsub.f32 1.0, %v2063
        %v2065 = vmul.f32 %v2062, %v2064
        %v2066 = vadd.f32 %v2062, %v2065
        %vm2067 = vweird.f32 %v2062
        %v2068 = vsel %vm2067, %v2062, %v2066
        %v2069 = vmul.f32 %v2061, %v2068
        %v2070 = vsub.f32 %v2058, %v2069
        %v2071 = vmul.f32 %v2070, %v2070
        %v2072 = vsel %vm1637, %v2071, 0.0
        %2073 = vadd.xlane.f32.xlu0 %v2072
        %v2074 = vpop.xlane.xlu0 %2073
        %v2075 = vmul.f32 %v2074, %v2068
        %v2076 = vadd.f32 %v2075, 1e-05
        %v2077 = vrsqrt.pop %v2076
        %v2078 = vmul.f32 %v2077, %v2076
        %v2079 = vmul.f32 %v2078, %v2077
        %v2080 = vmul.f32 0.5, %v2079
        %v2081 = vsub.f32 1.5, %v2080
        %v2082 = vmul.f32 %v2077, %v2081
        %vm2083 = vweird.f32 %v2076
        %vm2084 = vweird.f32 %v2077
        %vm2085 = vmor %vm2083, %vm2084
        %v2086 = vsel %vm2085, %v2077, %v2082
        %v2087 = vmul.f32 %v2070, %v2086
        %v2089 = vperm.slane %v1632, 0
        %v2091 = vmul.f32 %v2087, %v2089
        %v2093 = vperm.slane %v1633, 0
        %v2095 = vadd.f32 %v2091, %v2093
        %v2096 = vld [vmem:[%s21] sm:$0xff]
        %v2097 = vld [vmem:[%s21 + $0x8] sm:$0xff]
        %v2098 = vld [vmem:[%s21 + $0x10] sm:$0xff]
        %v2099 = vld [vmem:[%s21 + $0x18] sm:$0xff]
        %v2100 = vld [vmem:[%s23] sm:$0x1]
        %v2101 = vld [vmem:[%s25] sm:$0xff]
        %v2102 = vld [vmem:[%s25 + $0x8] sm:$0xff]
        %v2103 = vld [vmem:[%s25 + $0x10] sm:$0xff]
        %v2104 = vld [vmem:[%s25 + $0x18] sm:$0xff]
        %v2105 = vld [vmem:[%s27] sm:$0x1]
        %v2106 = vld [vmem:[%s29] sm:$0xff]
        %v2107 = vld [vmem:[%s29 + $0x8] sm:$0xff]
        %v2108 = vld [vmem:[%s29 + $0x10] sm:$0xff]
        %v2109 = vld [vmem:[%s29 + $0x18] sm:$0xff]
        %v2110 = vld [vmem:[%s31] sm:$0x1]
        %v2111 = vld [vmem:[%s33] sm:$0x1]
        %v2112 = vld [vmem:[%s35] sm:$0x1]
        %v2114 = vperm.slane %v2100, 0
        %v2117 = vsel %vm1637, %v2095, 0
        %2119 = vmatpush.msra.mxu0 0.0
        %2120 = vmatpush.msra.mxu0 0.0
        %2121 = vmatpush.msra.mxu0 0.0
        %2122 = vmatpush.msra.mxu0 0.0
        %2123 = vmatpush.msra.mxu0 0.0
        %2124 = vmatpush.msra.mxu0 0.0
        %2125 = vmatpush.msra.mxu0 0.0
        %2126 = vmatpush.msra.mxu0 0.0
        %2127 = vmatpush.msra.mxu0 0.0
        %2128 = vmatpush.msra.mxu0 0.0
        %2129 = vmatpush.msra.mxu0 0.0
        %2130 = vmatpush.msra.mxu0 0.0
        %2131 = vmatpush.msra.mxu0 %v2099
        %2132 = vmatpush.msra.mxu0 %v2098
        %2133 = vmatpush.msra.mxu0 %v2097
        %2134 = vmatpush.msra.mxu0 %v2096
        %2135 = vmatmul.f32.gmra.mxu0 %v2117
        %v2136 = vpop.f32.mrf.mxu0
        %v2137 = vadd.f32 %v2114, %v2136
        %2138 = vdwg.mxu0
        %v2140 = vperm.slane %v2105, 0
        %v2143 = vsel %vm1637, %v1584, 0
        %v2146 = vsel %vm1637, %v1585, 0
        %2148 = vmatpush.msra.mxu0 0.0
        %2149 = vmatpush.msra.mxu0 0.0
        %2150 = vmatpush.msra.mxu0 0.0
        %2151 = vmatpush.msra.mxu0 0.0
        %2152 = vmatpush.msra.mxu0 0.0
        %2153 = vmatpush.msra.mxu0 0.0
        %2154 = vmatpush.msra.mxu0 0.0
        %2155 = vmatpush.msra.mxu0 0.0
        %2156 = vmatpush.msra.mxu0 0.0
        %2157 = vmatpush.msra.mxu0 0.0
        %2158 = vmatpush.msra.mxu0 0.0
        %2159 = vmatpush.msra.mxu0 0.0
        %2160 = vmatpush.msra.mxu0 %v2104
        %2161 = vmatpush.msra.mxu0 %v2103
        %2162 = vmatpush.msra.mxu0 %v2102
        %2163 = vmatpush.msra.mxu0 %v2101
        %2164 = vmatmul.f32.gmra.mxu0 %v2143
        %v2165 = vpop.f32.mrf.mxu0
        %v2166 = vadd.f32 %v2140, %v2165
        %2167 = vmatmul.f32.gmra.mxu0 %v2146
        %v2168 = vpop.f32.mrf.mxu0
        %v2169 = vadd.f32 %v2140, %v2168
        %2170 = vdwg.mxu0
        %v2172 = vsel %vm1664, %v2137, 0
        %v2175 = vsel %vm1664, %v2166, 0
        %v2178 = vsel %vm1664, %v2169, 0
        %2180 = vmatpush.xpose.msra.mxu0 0.0
        %2181 = vmatpush.xpose.msra.mxu0 0.0
        %2182 = vmatpush.xpose.msra.mxu0 0.0
        %2183 = vmatpush.xpose.msra.mxu0 0.0
        %2184 = vmatpush.xpose.msra.mxu0 0.0
        %2185 = vmatpush.xpose.msra.mxu0 0.0
        %2186 = vmatpush.xpose.msra.mxu0 0.0
        %2187 = vmatpush.xpose.msra.mxu0 0.0
        %2188 = vmatpush.xpose.msra.mxu0 0.0
        %2189 = vmatpush.xpose.msra.mxu0 0.0
        %2190 = vmatpush.xpose.msra.mxu0 0.0
        %2191 = vmatpush.xpose.msra.mxu0 0.0
        %2192 = vmatpush.xpose.msra.mxu0 0.0
        %2193 = vmatpush.xpose.msra.mxu0 0.0
        %2194 = vmatpush.xpose.msra.mxu0 %v2178
        %2195 = vmatpush.xpose.msra.mxu0 %v2175
        %2196 = vmatmul.f32.gmra.mxu0 %v2172
        %v2197 = vpop.f32.mrf.mxu0
        %v2198 = vadd.f32 0.0, %v2197
        %2199 = vdwg.mxu0
        %v2200 = vmul.f32 %v2198, 0.35355338
        %v2201 = vsel %vm2028, %v2200, -inf
        %2202 = vmax.xlane.f32.xlu0 %v2201
        %v2203 = vpop.xlane.xlu0 %2202
        %v2204 = vsub.f32 %v2200, %v2203
        %v2205 = vmul.f32 %v2204, 1.442695
        %v2206 = vpow.pop %v2205
        %v2207 = vsel %vm2028, %v2206, 0.0
        %2208 = vadd.xlane.f32.xlu0 %v2207
        %v2209 = vpop.xlane.xlu0 %2208
        %v2210 = vrcp.pop %v2209
        %v2211 = vmul.f32 %v2206, %v2210
        %2212 = vrot.lane.b32.xlu0 %v2166, 96
        %v2213 = vpop.permute.xlu0 %2212
        %2214 = vrot.lane.b32.xlu0 %v2169, 96
        %v2215 = vpop.permute.xlu0 %2214
        %v2219 = vsel %vm2028, %v2211, 0
        %2221 = vmatpush.msra.mxu0 0.0
        %2222 = vmatpush.msra.mxu0 0.0
        %2223 = vmatpush.msra.mxu0 0.0
        %2224 = vmatpush.msra.mxu0 0.0
        %2225 = vmatpush.msra.mxu0 0.0
        %2226 = vmatpush.msra.mxu0 0.0
        %2227 = vmatpush.msra.mxu0 0.0
        %2228 = vmatpush.msra.mxu0 0.0
        %2229 = vmatpush.msra.mxu0 0.0
        %2230 = vmatpush.msra.mxu0 0.0
        %2231 = vmatpush.msra.mxu0 0.0
        %2232 = vmatpush.msra.mxu0 0.0
        %2233 = vmatpush.msra.mxu0 0.0
        %2234 = vmatpush.msra.mxu0 0.0
        %2235 = vmatpush.msra.mxu0 %v2215
        %2236 = vmatpush.msra.mxu0 %v2213
        %2237 = vmatmul.f32.gmra.mxu0 %v2219
        %v2238 = vpop.f32.mrf.mxu0
        %v2239 = vadd.f32 0.0, %v2238
        %2240 = vdwg.mxu0
        %2241 = vrot.lane.b32.xlu0 %v2137, 120
        %v2242 = vpop.permute.xlu0 %2241
        %2243 = vrot.lane.b32.xlu0 %v2166, 120
        %v2244 = vpop.permute.xlu0 %2243
        %2245 = vrot.lane.b32.xlu0 %v2169, 120
        %v2246 = vpop.permute.xlu0 %2245
        %v2247 = vsel %vm1664, %v2242, 0
        %v2249 = vsel %vm1664, %v2244, 0
        %v2251 = vsel %vm1664, %v2246, 0
        %2253 = vmatpush.xpose.msra.mxu0 0.0
        %2254 = vmatpush.xpose.msra.mxu0 0.0
        %2255 = vmatpush.xpose.msra.mxu0 0.0
        %2256 = vmatpush.xpose.msra.mxu0 0.0
        %2257 = vmatpush.xpose.msra.mxu0 0.0
        %2258 = vmatpush.xpose.msra.mxu0 0.0
        %2259 = vmatpush.xpose.msra.mxu0 0.0
        %2260 = vmatpush.xpose.msra.mxu0 0.0
        %2261 = vmatpush.xpose.msra.mxu0 0.0
        %2262 = vmatpush.xpose.msra.mxu0 0.0
        %2263 = vmatpush.xpose.msra.mxu0 0.0
        %2264 = vmatpush.xpose.msra.mxu0 0.0
        %2265 = vmatpush.xpose.msra.mxu0 0.0
        %2266 = vmatpush.xpose.msra.mxu0 0.0
        %2267 = vmatpush.xpose.msra.mxu0 %v2251
        %2268 = vmatpush.xpose.msra.mxu0 %v2249
        %2269 = vmatmul.f32.gmra.mxu0 %v2247
        %v2270 = vpop.f32.mrf.mxu0
        %v2271 = vadd.f32 0.0, %v2270
        %2272 = vdwg.mxu0
        %v2273 = vmul.f32 %v2271, 0.35355338
        %v2274 = vsel %vm2028, %v2273, -inf
        %2275 = vmax.xlane.f32.xlu0 %v2274
        %v2276 = vpop.xlane.xlu0 %2275
        %v2277 = vsub.f32 %v2273, %v2276
        %v2278 = vmul.f32 %v2277, 1.442695
        %v2279 = vpow.pop %v2278
        %v2280 = vsel %vm2028, %v2279, 0.0
        %2281 = vadd.xlane.f32.xlu0 %v2280
        %v2282 = vpop.xlane.xlu0 %2281
        %v2283 = vrcp.pop %v2282
        %v2284 = vmul.f32 %v2279, %v2283
        %2285 = vrot.lane.b32.xlu0 %v2166, 88
        %v2286 = vpop.permute.xlu0 %2285
        %2287 = vrot.lane.b32.xlu0 %v2169, 88
        %v2288 = vpop.permute.xlu0 %2287
        %v2292 = vsel %vm2028, %v2284, 0
        %2294 = vmatpush.msra.mxu0 0.0
        %2295 = vmatpush.msra.mxu0 0.0
        %2296 = vmatpush.msra.mxu0 0.0
        %2297 = vmatpush.msra.mxu0 0.0
        %2298 = vmatpush.msra.mxu0 0.0
        %2299 = vmatpush.msra.mxu0 0.0
        %2300 = vmatpush.msra.mxu0 0.0
        %2301 = vmatpush.msra.mxu0 0.0
        %2302 = vmatpush.msra.mxu0 0.0
        %2303 = vmatpush.msra.mxu0 0.0
        %2304 = vmatpush.msra.mxu0 0.0
        %2305 = vmatpush.msra.mxu0 0.0
        %2306 = vmatpush.msra.mxu0 0.0
        %2307 = vmatpush.msra.mxu0 0.0
        %2308 = vmatpush.msra.mxu0 %v2288
        %2309 = vmatpush.msra.mxu0 %v2286
        %2310 = vmatmul.f32.gmra.mxu0 %v2292
        %v2311 = vpop.f32.mrf.mxu0
        %v2312 = vadd.f32 0.0, %v2311
        %2313 = vdwg.mxu0
        %2314 = vrot.lane.b32.xlu0 %v2137, 112
        %v2315 = vpop.permute.xlu0 %2314
        %2316 = vrot.lane.b32.xlu0 %v2166, 112
        %v2317 = vpop.permute.xlu0 %2316
        %2318 = vrot.lane.b32.xlu0 %v2169, 112
        %v2319 = vpop.permute.xlu0 %2318
        %v2320 = vsel %vm1664, %v2315, 0
        %v2322 = vsel %vm1664, %v2317, 0
        %v2324 = vsel %vm1664, %v2319, 0
        %2326 = vmatpush.xpose.msra.mxu0 0.0
        %2327 = vmatpush.xpose.msra.mxu0 0.0
        %2328 = vmatpush.xpose.msra.mxu0 0.0
        %2329 = vmatpush.xpose.msra.mxu0 0.0
        %2330 = vmatpush.xpose.msra.mxu0 0.0
        %2331 = vmatpush.xpose.msra.mxu0 0.0
        %2332 = vmatpush.xpose.msra.mxu0 0.0
        %2333 = vmatpush.xpose.msra.mxu0 0.0
        %2334 = vmatpush.xpose.msra.mxu0 0.0
        %2335 = vmatpush.xpose.msra.mxu0 0.0
        %2336 = vmatpush.xpose.msra.mxu0 0.0
        %2337 = vmatpush.xpose.msra.mxu0 0.0
        %2338 = vmatpush.xpose.msra.mxu0 0.0
        %2339 = vmatpush.xpose.msra.mxu0 0.0
        %2340 = vmatpush.xpose.msra.mxu0 %v2324
        %2341 = vmatpush.xpose.msra.mxu0 %v2322
        %2342 = vmatmul.f32.gmra.mxu0 %v2320
        %v2343 = vpop.f32.mrf.mxu0
        %v2344 = vadd.f32 0.0, %v2343
        %2345 = vdwg.mxu0
        %v2346 = vmul.f32 %v2344, 0.35355338
        %v2347 = vsel %vm2028, %v2346, -inf
        %2348 = vmax.xlane.f32.xlu0 %v2347
        %v2349 = vpop.xlane.xlu0 %2348
        %v2350 = vsub.f32 %v2346, %v2349
        %v2351 = vmul.f32 %v2350, 1.442695
        %v2352 = vpow.pop %v2351
        %v2353 = vsel %vm2028, %v2352, 0.0
        %2354 = vadd.xlane.f32.xlu0 %v2353
        %v2355 = vpop.xlane.xlu0 %2354
        %v2356 = vrcp.pop %v2355
        %v2357 = vmul.f32 %v2352, %v2356
        %2358 = vrot.lane.b32.xlu0 %v2166, 80
        %v2359 = vpop.permute.xlu0 %2358
        %2360 = vrot.lane.b32.xlu0 %v2169, 80
        %v2361 = vpop.permute.xlu0 %2360
        %v2365 = vsel %vm2028, %v2357, 0
        %2367 = vmatpush.msra.mxu0 0.0
        %2368 = vmatpush.msra.mxu0 0.0
        %2369 = vmatpush.msra.mxu0 0.0
        %2370 = vmatpush.msra.mxu0 0.0
        %2371 = vmatpush.msra.mxu0 0.0
        %2372 = vmatpush.msra.mxu0 0.0
        %2373 = vmatpush.msra.mxu0 0.0
        %2374 = vmatpush.msra.mxu0 0.0
        %2375 = vmatpush.msra.mxu0 0.0
        %2376 = vmatpush.msra.mxu0 0.0
        %2377 = vmatpush.msra.mxu0 0.0
        %2378 = vmatpush.msra.mxu0 0.0
        %2379 = vmatpush.msra.mxu0 0.0
        %2380 = vmatpush.msra.mxu0 0.0
        %2381 = vmatpush.msra.mxu0 %v2361
        %2382 = vmatpush.msra.mxu0 %v2359
        %2383 = vmatmul.f32.gmra.mxu0 %v2365
        %v2384 = vpop.f32.mrf.mxu0
        %v2385 = vadd.f32 0.0, %v2384
        %2386 = vdwg.mxu0
        %2387 = vrot.lane.b32.xlu0 %v2137, 104
        %v2388 = vpop.permute.xlu0 %2387
        %2389 = vrot.lane.b32.xlu0 %v2166, 104
        %v2390 = vpop.permute.xlu0 %2389
        %2391 = vrot.lane.b32.xlu0 %v2169, 104
        %v2392 = vpop.permute.xlu0 %2391
        %v2393 = vsel %vm1664, %v2388, 0
        %v2395 = vsel %vm1664, %v2390, 0
        %v2397 = vsel %vm1664, %v2392, 0
        %2399 = vmatpush.xpose.msra.mxu0 0.0
        %2400 = vmatpush.xpose.msra.mxu0 0.0
        %2401 = vmatpush.xpose.msra.mxu0 0.0
        %2402 = vmatpush.xpose.msra.mxu0 0.0
        %2403 = vmatpush.xpose.msra.mxu0 0.0
        %2404 = vmatpush.xpose.msra.mxu0 0.0
        %2405 = vmatpush.xpose.msra.mxu0 0.0
        %2406 = vmatpush.xpose.msra.mxu0 0.0
        %2407 = vmatpush.xpose.msra.mxu0 0.0
        %2408 = vmatpush.xpose.msra.mxu0 0.0
        %2409 = vmatpush.xpose.msra.mxu0 0.0
        %2410 = vmatpush.xpose.msra.mxu0 0.0
        %2411 = vmatpush.xpose.msra.mxu0 0.0
        %2412 = vmatpush.xpose.msra.mxu0 0.0
        %2413 = vmatpush.xpose.msra.mxu0 %v2397
        %2414 = vmatpush.xpose.msra.mxu0 %v2395
        %2415 = vmatmul.f32.gmra.mxu0 %v2393
        %v2416 = vpop.f32.mrf.mxu0
        %v2417 = vadd.f32 0.0, %v2416
        %2418 = vdwg.mxu0
        %v2419 = vmul.f32 %v2417, 0.35355338
        %v2420 = vsel %vm2028, %v2419, -inf
        %2421 = vmax.xlane.f32.xlu0 %v2420
        %v2422 = vpop.xlane.xlu0 %2421
        %v2423 = vsub.f32 %v2419, %v2422
        %v2424 = vmul.f32 %v2423, 1.442695
        %v2425 = vpow.pop %v2424
        %v2426 = vsel %vm2028, %v2425, 0.0
        %2427 = vadd.xlane.f32.xlu0 %v2426
        %v2428 = vpop.xlane.xlu0 %2427
        %v2429 = vrcp.pop %v2428
        %v2430 = vmul.f32 %v2425, %v2429
        %2431 = vrot.lane.b32.xlu0 %v2166, 72
        %v2432 = vpop.permute.xlu0 %2431
        %2433 = vrot.lane.b32.xlu0 %v2169, 72
        %v2434 = vpop.permute.xlu0 %2433
        %v2438 = vsel %vm2028, %v2430, 0
        %2440 = vmatpush.msra.mxu0 0.0
        %2441 = vmatpush.msra.mxu0 0.0
        %2442 = vmatpush.msra.mxu0 0.0
        %2443 = vmatpush.msra.mxu0 0.0
        %2444 = vmatpush.msra.mxu0 0.0
        %2445 = vmatpush.msra.mxu0 0.0
        %2446 = vmatpush.msra.mxu0 0.0
        %2447 = vmatpush.msra.mxu0 0.0
        %2448 = vmatpush.msra.mxu0 0.0
        %2449 = vmatpush.msra.mxu0 0.0
        %2450 = vmatpush.msra.mxu0 0.0
        %2451 = vmatpush.msra.mxu0 0.0
        %2452 = vmatpush.msra.mxu0 0.0
        %2453 = vmatpush.msra.mxu0 0.0
        %2454 = vmatpush.msra.mxu0 %v2434
        %2455 = vmatpush.msra.mxu0 %v2432
        %2456 = vmatmul.f32.gmra.mxu0 %v2438
        %v2457 = vpop.f32.mrf.mxu0
        %v2458 = vadd.f32 0.0, %v2457
        %2459 = vdwg.mxu0
        %2461 = vrot.lane.b32.xlu0 %v2312, 8
        %v2462 = vpop.permute.xlu0 %2461
        %2465 = vrot.lane.b32.xlu0 %v2385, 16
        %v2466 = vpop.permute.xlu0 %2465
        %2469 = vrot.lane.b32.xlu0 %v2458, 24
        %v2470 = vpop.permute.xlu0 %2469
        %v2472 = vsel %vm1664, %v2239, %v2462
        %v2473 = vsel %vm2028, %v2472, %v2466
        %v2474 = vsel %vm2030, %v2473, %v2470
        %v2476 = vperm.slane %v2110, 0
        %v2479 = vsel %vm1637, %v2474, 0
        %2481 = vmatpush.msra.mxu0 0.0
        %2482 = vmatpush.msra.mxu0 0.0
        %2483 = vmatpush.msra.mxu0 0.0
        %2484 = vmatpush.msra.mxu0 0.0
        %2485 = vmatpush.msra.mxu0 0.0
        %2486 = vmatpush.msra.mxu0 0.0
        %2487 = vmatpush.msra.mxu0 0.0
        %2488 = vmatpush.msra.mxu0 0.0
        %2489 = vmatpush.msra.mxu0 0.0
        %2490 = vmatpush.msra.mxu0 0.0
        %2491 = vmatpush.msra.mxu0 0.0
        %2492 = vmatpush.msra.mxu0 0.0
        %2493 = vmatpush.msra.mxu0 %v2109
        %2494 = vmatpush.msra.mxu0 %v2108
        %2495 = vmatpush.msra.mxu0 %v2107
        %2496 = vmatpush.msra.mxu0 %v2106
        %2497 = vmatmul.f32.gmra.mxu0 %v2479
        %v2498 = vpop.f32.mrf.mxu0
        %v2499 = vadd.f32 %v2476, %v2498
        %2500 = vdwg.mxu0
        %v2501 = vadd.f32 %v2095, %v2499
        %v2502 = vsel %vm1637, %v2501, 0.0
        %2503 = vadd.xlane.f32.xlu0 %v2502
        %v2504 = vpop.xlane.xlu0 %2503
        %v2505 = vmul.f32 %v2504, %v2068
        %v2506 = vsub.f32 %v2501, %v2505
        %v2507 = vmul.f32 %v2506, %v2506
        %v2508 = vsel %vm1637, %v2507, 0.0
        %2509 = vadd.xlane.f32.xlu0 %v2508
        %v2510 = vpop.xlane.xlu0 %2509
        %v2511 = vmul.f32 %v2510, %v2068
        %v2512 = vadd.f32 %v2511, 1e-05
        %v2513 = vrsqrt.pop %v2512
        %v2514 = vmul.f32 %v2513, %v2512
        %v2515 = vmul.f32 %v2514, %v2513
        %v2516 = vmul.f32 0.5, %v2515
        %v2517 = vsub.f32 1.5, %v2516
        %v2518 = vmul.f32 %v2513, %v2517
        %vm2519 = vweird.f32 %v2512
        %vm2520 = vweird.f32 %v2513
        %vm2521 = vmor %vm2519, %vm2520
        %v2522 = vsel %vm2521, %v2513, %v2518
        %v2523 = vmul.f32 %v2506, %v2522
        %v2525 = vperm.slane %v2111, 0
        %v2527 = vmul.f32 %v2523, %v2525
        %v2529 = vperm.slane %v2112, 0
        %v2531 = vadd.f32 %v2527, %v2529
        %v2532 = vld [vmem:[#allocation2] sm:$0xff]
        %v2533 = vld [vmem:[#allocation2 + $0x8] sm:$0xff]
        %v2534 = vld [vmem:[#allocation2 + $0x10] sm:$0xff]
        %v2535 = vld [vmem:[#allocation2 + $0x18] sm:$0xff]
        %v2536 = vld [vmem:[%s39] sm:$0x1]
        %v2537 = vld [vmem:[#allocation4] sm:$0xff]
        %v2538 = vld [vmem:[#allocation4 + $0x8] sm:$0xff]
        %v2539 = vld [vmem:[#allocation4 + $0x10] sm:$0xff]
        %v2540 = vld [vmem:[#allocation4 + $0x18] sm:$0xff]
        %v2541 = vld [vmem:[%s43] sm:$0x1]
        %v2542 = vld [vmem:[%s45] sm:$0x1]
        %v2543 = vld [vmem:[%s47] sm:$0x1]
        %v2545 = vperm.slane %v2536, 0
        %v2548 = vsel %vm1637, %v2531, 0
        %2550 = vmatpush.msra.mxu0 0.0
        %2551 = vmatpush.msra.mxu0 0.0
        %2552 = vmatpush.msra.mxu0 0.0
        %2553 = vmatpush.msra.mxu0 0.0
        %2554 = vmatpush.msra.mxu0 0.0
        %2555 = vmatpush.msra.mxu0 0.0
        %2556 = vmatpush.msra.mxu0 0.0
        %2557 = vmatpush.msra.mxu0 0.0
        %2558 = vmatpush.msra.mxu0 0.0
        %2559 = vmatpush.msra.mxu0 0.0
        %2560 = vmatpush.msra.mxu0 0.0
        %2561 = vmatpush.msra.mxu0 0.0
        %2562 = vmatpush.msra.mxu0 %v2535
        %2563 = vmatpush.msra.mxu0 %v2534
        %2564 = vmatpush.msra.mxu0 %v2533
        %2565 = vmatpush.msra.mxu0 %v2532
        %2566 = vmatmul.f32.gmra.mxu0 %v2548
        %v2567 = vpop.f32.mrf.mxu0
        %v2568 = vadd.f32 %v2545, %v2567
        %2569 = vdwg.mxu0
        %v2570 = vmul.f32 %v2568, 0.5
        %v2571 = vmul.f32 %v2568, 0.70710677
        %vm2572 = vcmp.lt.f32.partialorder %v2571, 0.0
        %v2573 = vsel %vm2572, -1.0, 1.0
        %v2574 = vand.u32 2147483647, %v2571
        %v2575 = vmul.f32 %v2574, 0.3275911
        %v2576 = vadd.f32 %v2575, 1.0
        %v2577 = vrcp.pop %v2576
        %v2578 = vmul.f32 %v2576, %v2577
        %v2579 = vsub.f32 1.0, %v2578
        %v2580 = vmul.f32 %v2577, %v2579
        %v2581 = vadd.f32 %v2577, %v2580
        %vm2582 = vweird.f32 %v2576
        %vm2583 = vweird.f32 %v2577
        %vm2584 = vmor %vm2582, %vm2583
        %v2585 = vsel %vm2584, %v2577, %v2581
        %v2586 = vand.u32 2147483647, %v2576
        %vm2587 = vcmp.eq.f32.partialorder %v2586, 8.507059e+37
        %v2588 = vand.u32 %v2576, 2147483648
        %v2589 = vor.u32 1.1754944e-38, %v2588
        %v2590 = vsel %vm2587, %v2589, %v2585
        %v2591 = vmul.f32 1.0, %v2590
        %v2592 = vmul.f32 %v2591, 1.0614054
        %v2593 = vadd.f32 %v2592, -1.4531521
        %v2594 = vmul.f32 %v2593, %v2591
        %v2595 = vadd.f32 %v2594, 1.4214138
        %v2596 = vmul.f32 %v2595, %v2591
        %v2597 = vadd.f32 %v2596, -0.28449672
        %v2598 = vmul.f32 %v2597, %v2591
        %v2599 = vadd.f32 %v2598, 0.2548296
        %v2600 = vmul.f32 %v2599, %v2591
        %v2601 = vsub.f32 0.0, %v2574
        %v2602 = vmul.f32 %v2601, %v2574
        %v2603 = vmul.f32 %v2602, 1.442695
        %v2604 = vpow.pop %v2603
        %v2605 = vmul.f32 %v2600, %v2604
        %v2606 = vsub.f32 1.0, %v2605
        %v2607 = vmul.f32 %v2573, %v2606
        %v2608 = vadd.f32 %v2607, 1.0
        %v2609 = vmul.f32 %v2570, %v2608
        %v2611 = vperm.slane %v2541, 0
        %v2614 = vsel %vm1637, %v2609, 0
        %2616 = vmatpush.msra.mxu0 0.0
        %2617 = vmatpush.msra.mxu0 0.0
        %2618 = vmatpush.msra.mxu0 0.0
        %2619 = vmatpush.msra.mxu0 0.0
        %2620 = vmatpush.msra.mxu0 0.0
        %2621 = vmatpush.msra.mxu0 0.0
        %2622 = vmatpush.msra.mxu0 0.0
        %2623 = vmatpush.msra.mxu0 0.0
        %2624 = vmatpush.msra.mxu0 0.0
        %2625 = vmatpush.msra.mxu0 0.0
        %2626 = vmatpush.msra.mxu0 0.0
        %2627 = vmatpush.msra.mxu0 0.0
        %2628 = vmatpush.msra.mxu0 %v2540
        %2629 = vmatpush.msra.mxu0 %v2539
        %2630 = vmatpush.msra.mxu0 %v2538
        %2631 = vmatpush.msra.mxu0 %v2537
        %2632 = vmatmul.f32.gmra.mxu0 %v2614
        %v2633 = vpop.f32.mrf.mxu0
        %v2634 = vadd.f32 %v2611, %v2633
        %2635 = vdwg.mxu0
        %v2636 = vadd.f32 %v2531, %v2634
        %v2637 = vsel %vm1637, %v2636, 0.0
        %2638 = vadd.xlane.f32.xlu0 %v2637
        %v2639 = vpop.xlane.xlu0 %2638
        %v2640 = vmul.f32 %v2639, %v2068
        %v2641 = vsub.f32 %v2636, %v2640
        %v2642 = vmul.f32 %v2641, %v2641
        %v2643 = vsel %vm1637, %v2642, 0.0
        %2644 = vadd.xlane.f32.xlu0 %v2643
        %v2645 = vpop.xlane.xlu0 %2644
        %v2646 = vmul.f32 %v2645, %v2068
        %v2647 = vadd.f32 %v2646, 1e-05
        %v2648 = vrsqrt.pop %v2647
        %v2649 = vmul.f32 %v2648, %v2647
        %v2650 = vmul.f32 %v2649, %v2648
        %v2651 = vmul.f32 0.5, %v2650
        %v2652 = vsub.f32 1.5, %v2651
        %v2653 = vmul.f32 %v2648, %v2652
        %vm2654 = vweird.f32 %v2647
        %vm2655 = vweird.f32 %v2648
        %vm2656 = vmor %vm2654, %vm2655
        %v2657 = vsel %vm2656, %v2648, %v2653
        %v2658 = vmul.f32 %v2641, %v2657
        %v2660 = vperm.slane %v2542, 0
        %v2662 = vmul.f32 %v2658, %v2660
        %v2664 = vperm.slane %v2543, 0
        %v2666 = vadd.f32 %v2662, %v2664
        %v2667 = vld [vmem:[%s49] sm:$0xff]
        %v2668 = vld [vmem:[%s49 + $0x8] sm:$0xff]
        %v2669 = vld [vmem:[%s49 + $0x10] sm:$0xff]
        %v2670 = vld [vmem:[%s49 + $0x18] sm:$0xff]
        %v2671 = vld [vmem:[%s51] sm:$0x1]
        %v2672 = vld [vmem:[#allocation6] sm:$0xff]
        %v2673 = vld [vmem:[#allocation6 + $0x8] sm:$0xff]
        %v2674 = vld [vmem:[#allocation6 + $0x10] sm:$0xff]
        %v2675 = vld [vmem:[#allocation6 + $0x18] sm:$0xff]
        %v2676 = vld [vmem:[%s55] sm:$0x1]
        %v2677 = vld [vmem:[%s57] sm:$0x1]
        %v2678 = vld [vmem:[%s59] sm:$0x1]
        %v2680 = vperm.slane %v2671, 0
        %v2683 = vsel %vm1637, %v2666, 0
        %2685 = vmatpush.msra.mxu0 0.0
        %2686 = vmatpush.msra.mxu0 0.0
        %2687 = vmatpush.msra.mxu0 0.0
        %2688 = vmatpush.msra.mxu0 0.0
        %2689 = vmatpush.msra.mxu0 0.0
        %2690 = vmatpush.msra.mxu0 0.0
        %2691 = vmatpush.msra.mxu0 0.0
        %2692 = vmatpush.msra.mxu0 0.0
        %2693 = vmatpush.msra.mxu0 0.0
        %2694 = vmatpush.msra.mxu0 0.0
        %2695 = vmatpush.msra.mxu0 0.0
        %2696 = vmatpush.msra.mxu0 0.0
        %2697 = vmatpush.msra.mxu0 %v2670
        %2698 = vmatpush.msra.mxu0 %v2669
        %2699 = vmatpush.msra.mxu0 %v2668
        %2700 = vmatpush.msra.mxu0 %v2667
        %2701 = vmatmul.f32.gmra.mxu0 %v2683
        %v2702 = vpop.f32.mrf.mxu0
        %v2703 = vadd.f32 %v2680, %v2702
        %2704 = vdwg.mxu0
        %2706 = vrot.lane.b32.xlu0 %v2703, 96
        %v2707 = vpop.permute.xlu0 %2706
        %v2708 = vsel %vm1664, %v2703, 0
        %v2710 = vsel %vm1664, %v2707, 0
        %2712 = vmatpush.xpose.msra.mxu0 0.0
        %2713 = vmatpush.xpose.msra.mxu0 0.0
        %2714 = vmatpush.xpose.msra.mxu0 0.0
        %2715 = vmatpush.xpose.msra.mxu0 0.0
        %2716 = vmatpush.xpose.msra.mxu0 0.0
        %2717 = vmatpush.xpose.msra.mxu0 0.0
        %2718 = vmatpush.xpose.msra.mxu0 0.0
        %2719 = vmatpush.xpose.msra.mxu0 0.0
        %2720 = vmatpush.xpose.msra.mxu0 0.0
        %2721 = vmatpush.xpose.msra.mxu0 0.0
        %2722 = vmatpush.xpose.msra.mxu0 0.0
        %2723 = vmatpush.xpose.msra.mxu0 0.0
        %2724 = vmatpush.xpose.msra.mxu0 0.0
        %2725 = vmatpush.xpose.msra.mxu0 0.0
        %2726 = vmatpush.xpose.msra.mxu0 0.0
        %2727 = vmatpush.xpose.msra.mxu0 %v2710
        %2728 = vmatmul.f32.gmra.mxu0 %v2708
        %v2729 = vpop.f32.mrf.mxu0
        %v2730 = vadd.f32 0.0, %v2729
        %2731 = vdwg.mxu0
        %v2732 = vmul.f32 %v2730, 0.35355338
        %v2733 = vadd.f32 %v2732, %v1621
        %v2734 = vsel %vm1664, %v2733, -inf
        %2735 = vmax.xlane.f32.xlu0 %v2734
        %v2736 = vpop.xlane.xlu0 %2735
        %v2737 = vsub.f32 %v2733, %v2736
        %v2738 = vmul.f32 %v2737, 1.442695
        %v2739 = vpow.pop %v2738
        %v2740 = vsel %vm1664, %v2739, 0.0
        %2741 = vadd.xlane.f32.xlu0 %v2740
        %v2742 = vpop.xlane.xlu0 %2741
        %v2743 = vrcp.pop %v2742
        %v2744 = vmul.f32 %v2739, %v2743
        %2745 = vrot.lane.b32.xlu0 %v2703, 64
        %v2746 = vpop.permute.xlu0 %2745
        %v2749 = vsel %vm1664, %v2744, 0
        %2751 = vmatpush.msra.mxu0 0.0
        %2752 = vmatpush.msra.mxu0 0.0
        %2753 = vmatpush.msra.mxu0 0.0
        %2754 = vmatpush.msra.mxu0 0.0
        %2755 = vmatpush.msra.mxu0 0.0
        %2756 = vmatpush.msra.mxu0 0.0
        %2757 = vmatpush.msra.mxu0 0.0
        %2758 = vmatpush.msra.mxu0 0.0
        %2759 = vmatpush.msra.mxu0 0.0
        %2760 = vmatpush.msra.mxu0 0.0
        %2761 = vmatpush.msra.mxu0 0.0
        %2762 = vmatpush.msra.mxu0 0.0
        %2763 = vmatpush.msra.mxu0 0.0
        %2764 = vmatpush.msra.mxu0 0.0
        %2765 = vmatpush.msra.mxu0 0.0
        %2766 = vmatpush.msra.mxu0 %v2746
        %2767 = vmatmul.f32.gmra.mxu0 %v2749
        %v2768 = vpop.f32.mrf.mxu0
        %v2769 = vadd.f32 0.0, %v2768
        %2770 = vdwg.mxu0
        %2771 = vrot.lane.b32.xlu0 %v2703, 120
        %v2772 = vpop.permute.xlu0 %2771
        %2773 = vrot.lane.b32.xlu0 %v2703, 88
        %v2774 = vpop.permute.xlu0 %2773
        %v2775 = vsel %vm1664, %v2772, 0
        %v2777 = vsel %vm1664, %v2774, 0
        %2779 = vmatpush.xpose.msra.mxu0 0.0
        %2780 = vmatpush.xpose.msra.mxu0 0.0
        %2781 = vmatpush.xpose.msra.mxu0 0.0
        %2782 = vmatpush.xpose.msra.mxu0 0.0
        %2783 = vmatpush.xpose.msra.mxu0 0.0
        %2784 = vmatpush.xpose.msra.mxu0 0.0
        %2785 = vmatpush.xpose.msra.mxu0 0.0
        %2786 = vmatpush.xpose.msra.mxu0 0.0
        %2787 = vmatpush.xpose.msra.mxu0 0.0
        %2788 = vmatpush.xpose.msra.mxu0 0.0
        %2789 = vmatpush.xpose.msra.mxu0 0.0
        %2790 = vmatpush.xpose.msra.mxu0 0.0
        %2791 = vmatpush.xpose.msra.mxu0 0.0
        %2792 = vmatpush.xpose.msra.mxu0 0.0
        %2793 = vmatpush.xpose.msra.mxu0 0.0
        %2794 = vmatpush.xpose.msra.mxu0 %v2777
        %2795 = vmatmul.f32.gmra.mxu0 %v2775
        %v2796 = vpop.f32.mrf.mxu0
        %v2797 = vadd.f32 0.0, %v2796
        %2798 = vdwg.mxu0
        %v2799 = vmul.f32 %v2797, 0.35355338
        %v2800 = vadd.f32 %v2799, %v1621
        %v2801 = vsel %vm1664, %v2800, -inf
        %2802 = vmax.xlane.f32.xlu0 %v2801
        %v2803 = vpop.xlane.xlu0 %2802
        %v2804 = vsub.f32 %v2800, %v2803
        %v2805 = vmul.f32 %v2804, 1.442695
        %v2806 = vpow.pop %v2805
        %v2807 = vsel %vm1664, %v2806, 0.0
        %2808 = vadd.xlane.f32.xlu0 %v2807
        %v2809 = vpop.xlane.xlu0 %2808
        %v2810 = vrcp.pop %v2809
        %v2811 = vmul.f32 %v2806, %v2810
        %2812 = vrot.lane.b32.xlu0 %v2703, 56
        %v2813 = vpop.permute.xlu0 %2812
        %v2816 = vsel %vm1664, %v2811, 0
        %2818 = vmatpush.msra.mxu0 0.0
        %2819 = vmatpush.msra.mxu0 0.0
        %2820 = vmatpush.msra.mxu0 0.0
        %2821 = vmatpush.msra.mxu0 0.0
        %2822 = vmatpush.msra.mxu0 0.0
        %2823 = vmatpush.msra.mxu0 0.0
        %2824 = vmatpush.msra.mxu0 0.0
        %2825 = vmatpush.msra.mxu0 0.0
        %2826 = vmatpush.msra.mxu0 0.0
        %2827 = vmatpush.msra.mxu0 0.0
        %2828 = vmatpush.msra.mxu0 0.0
        %2829 = vmatpush.msra.mxu0 0.0
        %2830 = vmatpush.msra.mxu0 0.0
        %2831 = vmatpush.msra.mxu0 0.0
        %2832 = vmatpush.msra.mxu0 0.0
        %2833 = vmatpush.msra.mxu0 %v2813
        %2834 = vmatmul.f32.gmra.mxu0 %v2816
        %v2835 = vpop.f32.mrf.mxu0
        %v2836 = vadd.f32 0.0, %v2835
        %2837 = vdwg.mxu0
        %2838 = vrot.lane.b32.xlu0 %v2703, 112
        %v2839 = vpop.permute.xlu0 %2838
        %2840 = vrot.lane.b32.xlu0 %v2703, 80
        %v2841 = vpop.permute.xlu0 %2840
        %v2842 = vsel %vm1664, %v2839, 0
        %v2844 = vsel %vm1664, %v2841, 0
        %2846 = vmatpush.xpose.msra.mxu0 0.0
        %2847 = vmatpush.xpose.msra.mxu0 0.0
        %2848 = vmatpush.xpose.msra.mxu0 0.0
        %2849 = vmatpush.xpose.msra.mxu0 0.0
        %2850 = vmatpush.xpose.msra.mxu0 0.0
        %2851 = vmatpush.xpose.msra.mxu0 0.0
        %2852 = vmatpush.xpose.msra.mxu0 0.0
        %2853 = vmatpush.xpose.msra.mxu0 0.0
        %2854 = vmatpush.xpose.msra.mxu0 0.0
        %2855 = vmatpush.xpose.msra.mxu0 0.0
        %2856 = vmatpush.xpose.msra.mxu0 0.0
        %2857 = vmatpush.xpose.msra.mxu0 0.0
        %2858 = vmatpush.xpose.msra.mxu0 0.0
        %2859 = vmatpush.xpose.msra.mxu0 0.0
        %2860 = vmatpush.xpose.msra.mxu0 0.0
        %2861 = vmatpush.xpose.msra.mxu0 %v2844
        %2862 = vmatmul.f32.gmra.mxu0 %v2842
        %v2863 = vpop.f32.mrf.mxu0
        %v2864 = vadd.f32 0.0, %v2863
        %2865 = vdwg.mxu0
        %v2866 = vmul.f32 %v2864, 0.35355338
        %v2867 = vadd.f32 %v2866, %v1621
        %v2868 = vsel %vm1664, %v2867, -inf
        %2869 = vmax.xlane.f32.xlu0 %v2868
        %v2870 = vpop.xlane.xlu0 %2869
        %v2871 = vsub.f32 %v2867, %v2870
        %v2872 = vmul.f32 %v2871, 1.442695
        %v2873 = vpow.pop %v2872
        %v2874 = vsel %vm1664, %v2873, 0.0
        %2875 = vadd.xlane.f32.xlu0 %v2874
        %v2876 = vpop.xlane.xlu0 %2875
        %v2877 = vrcp.pop %v2876
        %v2878 = vmul.f32 %v2873, %v2877
        %2879 = vrot.lane.b32.xlu0 %v2703, 48
        %v2880 = vpop.permute.xlu0 %2879
        %v2883 = vsel %vm1664, %v2878, 0
        %2885 = vmatpush.msra.mxu0 0.0
        %2886 = vmatpush.msra.mxu0 0.0
        %2887 = vmatpush.msra.mxu0 0.0
        %2888 = vmatpush.msra.mxu0 0.0
        %2889 = vmatpush.msra.mxu0 0.0
        %2890 = vmatpush.msra.mxu0 0.0
        %2891 = vmatpush.msra.mxu0 0.0
        %2892 = vmatpush.msra.mxu0 0.0
        %2893 = vmatpush.msra.mxu0 0.0
        %2894 = vmatpush.msra.mxu0 0.0
        %2895 = vmatpush.msra.mxu0 0.0
        %2896 = vmatpush.msra.mxu0 0.0
        %2897 = vmatpush.msra.mxu0 0.0
        %2898 = vmatpush.msra.mxu0 0.0
        %2899 = vmatpush.msra.mxu0 0.0
        %2900 = vmatpush.msra.mxu0 %v2880
        %2901 = vmatmul.f32.gmra.mxu0 %v2883
        %v2902 = vpop.f32.mrf.mxu0
        %v2903 = vadd.f32 0.0, %v2902
        %2904 = vdwg.mxu0
        %2905 = vrot.lane.b32.xlu0 %v2703, 104
        %v2906 = vpop.permute.xlu0 %2905
        %2907 = vrot.lane.b32.xlu0 %v2703, 72
        %v2908 = vpop.permute.xlu0 %2907
        %v2909 = vsel %vm1664, %v2906, 0
        %v2911 = vsel %vm1664, %v2908, 0
        %2913 = vmatpush.xpose.msra.mxu0 0.0
        %2914 = vmatpush.xpose.msra.mxu0 0.0
        %2915 = vmatpush.xpose.msra.mxu0 0.0
        %2916 = vmatpush.xpose.msra.mxu0 0.0
        %2917 = vmatpush.xpose.msra.mxu0 0.0
        %2918 = vmatpush.xpose.msra.mxu0 0.0
        %2919 = vmatpush.xpose.msra.mxu0 0.0
        %2920 = vmatpush.xpose.msra.mxu0 0.0
        %2921 = vmatpush.xpose.msra.mxu0 0.0
        %2922 = vmatpush.xpose.msra.mxu0 0.0
        %2923 = vmatpush.xpose.msra.mxu0 0.0
        %2924 = vmatpush.xpose.msra.mxu0 0.0
        %2925 = vmatpush.xpose.msra.mxu0 0.0
        %2926 = vmatpush.xpose.msra.mxu0 0.0
        %2927 = vmatpush.xpose.msra.mxu0 0.0
        %2928 = vmatpush.xpose.msra.mxu0 %v2911
        %2929 = vmatmul.f32.gmra.mxu0 %v2909
        %v2930 = vpop.f32.mrf.mxu0
        %v2931 = vadd.f32 0.0, %v2930
        %2932 = vdwg.mxu0
        %v2933 = vmul.f32 %v2931, 0.35355338
        %v2934 = vadd.f32 %v2933, %v1621
        %v2935 = vsel %vm1664, %v2934, -inf
        %2936 = vmax.xlane.f32.xlu0 %v2935
        %v2937 = vpop.xlane.xlu0 %2936
        %v2938 = vsub.f32 %v2934, %v2937
        %v2939 = vmul.f32 %v2938, 1.442695
        %v2940 = vpow.pop %v2939
        %v2941 = vsel %vm1664, %v2940, 0.0
        %2942 = vadd.xlane.f32.xlu0 %v2941
        %v2943 = vpop.xlane.xlu0 %2942
        %v2944 = vrcp.pop %v2943
        %v2945 = vmul.f32 %v2940, %v2944
        %2946 = vrot.lane.b32.xlu0 %v2703, 40
        %v2947 = vpop.permute.xlu0 %2946
        %v2950 = vsel %vm1664, %v2945, 0
        %2952 = vmatpush.msra.mxu0 0.0
        %2953 = vmatpush.msra.mxu0 0.0
        %2954 = vmatpush.msra.mxu0 0.0
        %2955 = vmatpush.msra.mxu0 0.0
        %2956 = vmatpush.msra.mxu0 0.0
        %2957 = vmatpush.msra.mxu0 0.0
        %2958 = vmatpush.msra.mxu0 0.0
        %2959 = vmatpush.msra.mxu0 0.0
        %2960 = vmatpush.msra.mxu0 0.0
        %2961 = vmatpush.msra.mxu0 0.0
        %2962 = vmatpush.msra.mxu0 0.0
        %2963 = vmatpush.msra.mxu0 0.0
        %2964 = vmatpush.msra.mxu0 0.0
        %2965 = vmatpush.msra.mxu0 0.0
        %2966 = vmatpush.msra.mxu0 0.0
        %2967 = vmatpush.msra.mxu0 %v2947
        %2968 = vmatmul.f32.gmra.mxu0 %v2950
        %v2969 = vpop.f32.mrf.mxu0
        %v2970 = vadd.f32 0.0, %v2969
        %2971 = vdwg.mxu0
        %v2973 = vrot.slane %v2769, 3
        %v2976 = vrot.slane %v2836, 6
        %v2978 = vrot.slane %v2836, 1
        %v2981 = vrot.slane %v2903, 4
        %v2983 = vrot.slane %v2903, 7
        %v2986 = vrot.slane %v2970, 2
        %v2988 = vrot.slane %v2970, 5
        %v2990 = vsel %vm1947, %v2769, %v2973
        %v2991 = vsel %vm1949, %v2990, %v2976
        %v2992 = vsel %vm1592, %v2991, %v2978
        %v2993 = vsel %vm1952, %v2992, %v2981
        %v2994 = vsel %vm1954, %v2993, %v2983
        %v2995 = vsel %vm1956, %v2994, %v2986
        %v2996 = vsel %vm1958, %v2995, %v2988
        %v2997 = vrot.slane %v2769, 1
        %v2999 = vrot.slane %v2769, 4
        %v3001 = vrot.slane %v2836, 7
        %v3003 = vrot.slane %v2836, 2
        %v3005 = vrot.slane %v2903, 5
        %v3007 = vrot.slane %v2970, 3
        %v3009 = vrot.slane %v2970, 6
        %v3011 = vsel %vm1947, %v2997, %v2999
        %v3012 = vsel %vm1949, %v3011, %v3001
        %v3013 = vsel %vm1592, %v3012, %v3003
        %v3014 = vsel %vm1952, %v3013, %v3005
        %v3015 = vsel %vm1954, %v3014, %v2903
        %v3016 = vsel %vm1956, %v3015, %v3007
        %v3017 = vsel %vm1958, %v3016, %v3009
        %v3018 = vrot.slane %v2769, 2
        %v3020 = vrot.slane %v2769, 5
        %v3022 = vrot.slane %v2836, 3
        %v3024 = vrot.slane %v2903, 6
        %v3026 = vrot.slane %v2903, 1
        %v3028 = vrot.slane %v2970, 4
        %v3030 = vrot.slane %v2970, 7
        %v3032 = vsel %vm1947, %v3018, %v3020
        %v3033 = vsel %vm1949, %v3032, %v2836
        %v3034 = vsel %vm1592, %v3033, %v3022
        %v3035 = vsel %vm1952, %v3034, %v3024
        %v3036 = vsel %vm1954, %v3035, %v3026
        %v3037 = vsel %vm1956, %v3036, %v3028
        %v3038 = vsel %vm1958, %v3037, %v3030
        %v3039 = vrot.slane %v2769, 6
        %v3041 = vrot.slane %v2836, 4
        %v3043 = vrot.slane %v2903, 2
        %v3045 = vsel %vm1947, %v2973, %v3039
        %v3046 = vsel %vm1949, %v3045, %v2978
        %v3047 = vsel %vm1592, %v3046, %v3041
        %v3048 = vsel %vm1952, %v3047, %v2983
        %v3049 = vsel %vm1954, %v3048, %v3043
        %v3050 = vsel %vm1956, %v3049, %v2988
        %v3051 = vsel %vm1958, %v3050, %v2970
        %3053 = vrot.lane.b32.xlu0 %v3017, 8
        %v3054 = vpop.permute.xlu0 %3053
        %3057 = vrot.lane.b32.xlu0 %v3038, 16
        %v3058 = vpop.permute.xlu0 %3057
        %3061 = vrot.lane.b32.xlu0 %v3051, 24
        %v3062 = vpop.permute.xlu0 %3061
        %v3064 = vsel %vm1664, %v2996, %v3054
        %v3065 = vsel %vm2028, %v3064, %v3058
        %v3066 = vsel %vm2030, %v3065, %v3062
        %v3068 = vperm.slane %v2676, 0
        %v3071 = vsel %vm1637, %v3066, 0
        %3073 = vmatpush.msra.mxu0 0.0
        %3074 = vmatpush.msra.mxu0 0.0
        %3075 = vmatpush.msra.mxu0 0.0
        %3076 = vmatpush.msra.mxu0 0.0
        %3077 = vmatpush.msra.mxu0 0.0
        %3078 = vmatpush.msra.mxu0 0.0
        %3079 = vmatpush.msra.mxu0 0.0
        %3080 = vmatpush.msra.mxu0 0.0
        %3081 = vmatpush.msra.mxu0 0.0
        %3082 = vmatpush.msra.mxu0 0.0
        %3083 = vmatpush.msra.mxu0 0.0
        %3084 = vmatpush.msra.mxu0 0.0
        %3085 = vmatpush.msra.mxu0 %v2675
        %3086 = vmatpush.msra.mxu0 %v2674
        %3087 = vmatpush.msra.mxu0 %v2673
        %3088 = vmatpush.msra.mxu0 %v2672
        %3089 = vmatmul.f32.gmra.mxu0 %v3071
        %v3090 = vpop.f32.mrf.mxu0
        %v3091 = vadd.f32 %v3068, %v3090
        %3092 = vdwg.mxu0
        %v3093 = vadd.f32 %v2666, %v3091
        %v3094 = vsel %vm1637, %v3093, 0.0
        %3095 = vadd.xlane.f32.xlu0 %v3094
        %v3096 = vpop.xlane.xlu0 %3095
        %v3097 = vmul.f32 %v3096, %v2068
        %v3098 = vsub.f32 %v3093, %v3097
        %v3099 = vmul.f32 %v3098, %v3098
        %v3100 = vsel %vm1637, %v3099, 0.0
        %3101 = vadd.xlane.f32.xlu0 %v3100
        %v3102 = vpop.xlane.xlu0 %3101
        %v3103 = vmul.f32 %v3102, %v2068
        %v3104 = vadd.f32 %v3103, 1e-05
        %v3105 = vrsqrt.pop %v3104
        %v3106 = vmul.f32 %v3105, %v3104
        %v3107 = vmul.f32 %v3106, %v3105
        %v3108 = vmul.f32 0.5, %v3107
        %v3109 = vsub.f32 1.5, %v3108
        %v3110 = vmul.f32 %v3105, %v3109
        %vm3111 = vweird.f32 %v3104
        %vm3112 = vweird.f32 %v3105
        %vm3113 = vmor %vm3111, %vm3112
        %v3114 = vsel %vm3113, %v3105, %v3110
        %v3115 = vmul.f32 %v3098, %v3114
        %v3117 = vperm.slane %v2677, 0
        %v3119 = vmul.f32 %v3115, %v3117
        %v3121 = vperm.slane %v2678, 0
        %v3123 = vadd.f32 %v3119, %v3121
        %v3124 = vld [vmem:[#allocation7] sm:$0xff]
        %v3125 = vld [vmem:[#allocation7 + $0x8] sm:$0xff]
        %v3126 = vld [vmem:[#allocation7 + $0x10] sm:$0xff]
        %v3127 = vld [vmem:[#allocation7 + $0x18] sm:$0xff]
        %v3128 = vld [vmem:[%s63] sm:$0x1]
        %v3129 = vld [vmem:[#allocation9] sm:$0xff]
        %v3130 = vld [vmem:[#allocation9 + $0x8] sm:$0xff]
        %v3131 = vld [vmem:[#allocation9 + $0x10] sm:$0xff]
        %v3132 = vld [vmem:[#allocation9 + $0x18] sm:$0xff]
        %v3133 = vld [vmem:[%s67] sm:$0x1]
        %v3134 = vld [vmem:[#allocation10] sm:$0xff]
        %v3135 = vld [vmem:[#allocation10 + $0x8] sm:$0xff]
        %v3136 = vld [vmem:[#allocation10 + $0x10] sm:$0xff]
        %v3137 = vld [vmem:[#allocation10 + $0x18] sm:$0xff]
        %v3138 = vld [vmem:[%s71] sm:$0x1]
        %v3139 = vld [vmem:[%s73] sm:$0x1]
        %v3140 = vld [vmem:[%s75] sm:$0x1]
        %v3142 = vperm.slane %v3128, 0
        %v3145 = vsel %vm1637, %v3123, 0
        %3147 = vmatpush.msra.mxu0 0.0
        %3148 = vmatpush.msra.mxu0 0.0
        %3149 = vmatpush.msra.mxu0 0.0
        %3150 = vmatpush.msra.mxu0 0.0
        %3151 = vmatpush.msra.mxu0 0.0
        %3152 = vmatpush.msra.mxu0 0.0
        %3153 = vmatpush.msra.mxu0 0.0
        %3154 = vmatpush.msra.mxu0 0.0
        %3155 = vmatpush.msra.mxu0 0.0
        %3156 = vmatpush.msra.mxu0 0.0
        %3157 = vmatpush.msra.mxu0 0.0
        %3158 = vmatpush.msra.mxu0 0.0
        %3159 = vmatpush.msra.mxu0 %v3127
        %3160 = vmatpush.msra.mxu0 %v3126
        %3161 = vmatpush.msra.mxu0 %v3125
        %3162 = vmatpush.msra.mxu0 %v3124
        %3163 = vmatmul.f32.gmra.mxu0 %v3145
        %v3164 = vpop.f32.mrf.mxu0
        %v3165 = vadd.f32 %v3142, %v3164
        %3166 = vdwg.mxu0
        %v3168 = vperm.slane %v3133, 0
        %3170 = vmatpush.msra.mxu0 0.0
        %3171 = vmatpush.msra.mxu0 0.0
        %3172 = vmatpush.msra.mxu0 0.0
        %3173 = vmatpush.msra.mxu0 0.0
        %3174 = vmatpush.msra.mxu0 0.0
        %3175 = vmatpush.msra.mxu0 0.0
        %3176 = vmatpush.msra.mxu0 0.0
        %3177 = vmatpush.msra.mxu0 0.0
        %3178 = vmatpush.msra.mxu0 0.0
        %3179 = vmatpush.msra.mxu0 0.0
        %3180 = vmatpush.msra.mxu0 0.0
        %3181 = vmatpush.msra.mxu0 0.0
        %3182 = vmatpush.msra.mxu0 %v3132
        %3183 = vmatpush.msra.mxu0 %v3131
        %3184 = vmatpush.msra.mxu0 %v3130
        %3185 = vmatpush.msra.mxu0 %v3129
        %3186 = vmatmul.f32.gmra.mxu0 %v2143
        %v3187 = vpop.f32.mrf.mxu0
        %v3188 = vadd.f32 %v3168, %v3187
        %3189 = vmatmul.f32.gmra.mxu0 %v2146
        %v3190 = vpop.f32.mrf.mxu0
        %v3191 = vadd.f32 %v3168, %v3190
        %3192 = vdwg.mxu0
        %v3194 = vsel %vm1664, %v3165, 0
        %v3197 = vsel %vm1664, %v3188, 0
        %v3200 = vsel %vm1664, %v3191, 0
        %3202 = vmatpush.xpose.msra.mxu0 0.0
        %3203 = vmatpush.xpose.msra.mxu0 0.0
        %3204 = vmatpush.xpose.msra.mxu0 0.0
        %3205 = vmatpush.xpose.msra.mxu0 0.0
        %3206 = vmatpush.xpose.msra.mxu0 0.0
        %3207 = vmatpush.xpose.msra.mxu0 0.0
        %3208 = vmatpush.xpose.msra.mxu0 0.0
        %3209 = vmatpush.xpose.msra.mxu0 0.0
        %3210 = vmatpush.xpose.msra.mxu0 0.0
        %3211 = vmatpush.xpose.msra.mxu0 0.0
        %3212 = vmatpush.xpose.msra.mxu0 0.0
        %3213 = vmatpush.xpose.msra.mxu0 0.0
        %3214 = vmatpush.xpose.msra.mxu0 0.0
        %3215 = vmatpush.xpose.msra.mxu0 0.0
        %3216 = vmatpush.xpose.msra.mxu0 %v3200
        %3217 = vmatpush.xpose.msra.mxu0 %v3197
        %3218 = vmatmul.f32.gmra.mxu0 %v3194
        %v3219 = vpop.f32.mrf.mxu0
        %v3220 = vadd.f32 0.0, %v3219
        %3221 = vdwg.mxu0
        %v3222 = vmul.f32 %v3220, 0.35355338
        %v3223 = vsel %vm2028, %v3222, -inf
        %3224 = vmax.xlane.f32.xlu0 %v3223
        %v3225 = vpop.xlane.xlu0 %3224
        %v3226 = vsub.f32 %v3222, %v3225
        %v3227 = vmul.f32 %v3226, 1.442695
        %v3228 = vpow.pop %v3227
        %v3229 = vsel %vm2028, %v3228, 0.0
        %3230 = vadd.xlane.f32.xlu0 %v3229
        %v3231 = vpop.xlane.xlu0 %3230
        %v3232 = vrcp.pop %v3231
        %v3233 = vmul.f32 %v3228, %v3232
        %3234 = vrot.lane.b32.xlu0 %v3188, 96
        %v3235 = vpop.permute.xlu0 %3234
        %3236 = vrot.lane.b32.xlu0 %v3191, 96
        %v3237 = vpop.permute.xlu0 %3236
        %v3241 = vsel %vm2028, %v3233, 0
        %3243 = vmatpush.msra.mxu0 0.0
        %3244 = vmatpush.msra.mxu0 0.0
        %3245 = vmatpush.msra.mxu0 0.0
        %3246 = vmatpush.msra.mxu0 0.0
        %3247 = vmatpush.msra.mxu0 0.0
        %3248 = vmatpush.msra.mxu0 0.0
        %3249 = vmatpush.msra.mxu0 0.0
        %3250 = vmatpush.msra.mxu0 0.0
        %3251 = vmatpush.msra.mxu0 0.0
        %3252 = vmatpush.msra.mxu0 0.0
        %3253 = vmatpush.msra.mxu0 0.0
        %3254 = vmatpush.msra.mxu0 0.0
        %3255 = vmatpush.msra.mxu0 0.0
        %3256 = vmatpush.msra.mxu0 0.0
        %3257 = vmatpush.msra.mxu0 %v3237
        %3258 = vmatpush.msra.mxu0 %v3235
        %3259 = vmatmul.f32.gmra.mxu0 %v3241
        %v3260 = vpop.f32.mrf.mxu0
        %v3261 = vadd.f32 0.0, %v3260
        %3262 = vdwg.mxu0
        %3263 = vrot.lane.b32.xlu0 %v3165, 120
        %v3264 = vpop.permute.xlu0 %3263
        %3265 = vrot.lane.b32.xlu0 %v3188, 120
        %v3266 = vpop.permute.xlu0 %3265
        %3267 = vrot.lane.b32.xlu0 %v3191, 120
        %v3268 = vpop.permute.xlu0 %3267
        %v3269 = vsel %vm1664, %v3264, 0
        %v3271 = vsel %vm1664, %v3266, 0
        %v3273 = vsel %vm1664, %v3268, 0
        %3275 = vmatpush.xpose.msra.mxu0 0.0
        %3276 = vmatpush.xpose.msra.mxu0 0.0
        %3277 = vmatpush.xpose.msra.mxu0 0.0
        %3278 = vmatpush.xpose.msra.mxu0 0.0
        %3279 = vmatpush.xpose.msra.mxu0 0.0
        %3280 = vmatpush.xpose.msra.mxu0 0.0
        %3281 = vmatpush.xpose.msra.mxu0 0.0
        %3282 = vmatpush.xpose.msra.mxu0 0.0
        %3283 = vmatpush.xpose.msra.mxu0 0.0
        %3284 = vmatpush.xpose.msra.mxu0 0.0
        %3285 = vmatpush.xpose.msra.mxu0 0.0
        %3286 = vmatpush.xpose.msra.mxu0 0.0
        %3287 = vmatpush.xpose.msra.mxu0 0.0
        %3288 = vmatpush.xpose.msra.mxu0 0.0
        %3289 = vmatpush.xpose.msra.mxu0 %v3273
        %3290 = vmatpush.xpose.msra.mxu0 %v3271
        %3291 = vmatmul.f32.gmra.mxu0 %v3269
        %v3292 = vpop.f32.mrf.mxu0
        %v3293 = vadd.f32 0.0, %v3292
        %3294 = vdwg.mxu0
        %v3295 = vmul.f32 %v3293, 0.35355338
        %v3296 = vsel %vm2028, %v3295, -inf
        %3297 = vmax.xlane.f32.xlu0 %v3296
        %v3298 = vpop.xlane.xlu0 %3297
        %v3299 = vsub.f32 %v3295, %v3298
        %v3300 = vmul.f32 %v3299, 1.442695
        %v3301 = vpow.pop %v3300
        %v3302 = vsel %vm2028, %v3301, 0.0
        %3303 = vadd.xlane.f32.xlu0 %v3302
        %v3304 = vpop.xlane.xlu0 %3303
        %v3305 = vrcp.pop %v3304
        %v3306 = vmul.f32 %v3301, %v3305
        %3307 = vrot.lane.b32.xlu0 %v3188, 88
        %v3308 = vpop.permute.xlu0 %3307
        %3309 = vrot.lane.b32.xlu0 %v3191, 88
        %v3310 = vpop.permute.xlu0 %3309
        %v3314 = vsel %vm2028, %v3306, 0
        %3316 = vmatpush.msra.mxu0 0.0
        %3317 = vmatpush.msra.mxu0 0.0
        %3318 = vmatpush.msra.mxu0 0.0
        %3319 = vmatpush.msra.mxu0 0.0
        %3320 = vmatpush.msra.mxu0 0.0
        %3321 = vmatpush.msra.mxu0 0.0
        %3322 = vmatpush.msra.mxu0 0.0
        %3323 = vmatpush.msra.mxu0 0.0
        %3324 = vmatpush.msra.mxu0 0.0
        %3325 = vmatpush.msra.mxu0 0.0
        %3326 = vmatpush.msra.mxu0 0.0
        %3327 = vmatpush.msra.mxu0 0.0
        %3328 = vmatpush.msra.mxu0 0.0
        %3329 = vmatpush.msra.mxu0 0.0
        %3330 = vmatpush.msra.mxu0 %v3310
        %3331 = vmatpush.msra.mxu0 %v3308
        %3332 = vmatmul.f32.gmra.mxu0 %v3314
        %v3333 = vpop.f32.mrf.mxu0
        %v3334 = vadd.f32 0.0, %v3333
        %3335 = vdwg.mxu0
        %3336 = vrot.lane.b32.xlu0 %v3165, 112
        %v3337 = vpop.permute.xlu0 %3336
        %3338 = vrot.lane.b32.xlu0 %v3188, 112
        %v3339 = vpop.permute.xlu0 %3338
        %3340 = vrot.lane.b32.xlu0 %v3191, 112
        %v3341 = vpop.permute.xlu0 %3340
        %v3342 = vsel %vm1664, %v3337, 0
        %v3344 = vsel %vm1664, %v3339, 0
        %v3346 = vsel %vm1664, %v3341, 0
        %3348 = vmatpush.xpose.msra.mxu0 0.0
        %3349 = vmatpush.xpose.msra.mxu0 0.0
        %3350 = vmatpush.xpose.msra.mxu0 0.0
        %3351 = vmatpush.xpose.msra.mxu0 0.0
        %3352 = vmatpush.xpose.msra.mxu0 0.0
        %3353 = vmatpush.xpose.msra.mxu0 0.0
        %3354 = vmatpush.xpose.msra.mxu0 0.0
        %3355 = vmatpush.xpose.msra.mxu0 0.0
        %3356 = vmatpush.xpose.msra.mxu0 0.0
        %3357 = vmatpush.xpose.msra.mxu0 0.0
        %3358 = vmatpush.xpose.msra.mxu0 0.0
        %3359 = vmatpush.xpose.msra.mxu0 0.0
        %3360 = vmatpush.xpose.msra.mxu0 0.0
        %3361 = vmatpush.xpose.msra.mxu0 0.0
        %3362 = vmatpush.xpose.msra.mxu0 %v3346
        %3363 = vmatpush.xpose.msra.mxu0 %v3344
        %3364 = vmatmul.f32.gmra.mxu0 %v3342
        %v3365 = vpop.f32.mrf.mxu0
        %v3366 = vadd.f32 0.0, %v3365
        %3367 = vdwg.mxu0
        %v3368 = vmul.f32 %v3366, 0.35355338
        %v3369 = vsel %vm2028, %v3368, -inf
        %3370 = vmax.xlane.f32.xlu0 %v3369
        %v3371 = vpop.xlane.xlu0 %3370
        %v3372 = vsub.f32 %v3368, %v3371
        %v3373 = vmul.f32 %v3372, 1.442695
        %v3374 = vpow.pop %v3373
        %v3375 = vsel %vm2028, %v3374, 0.0
        %3376 = vadd.xlane.f32.xlu0 %v3375
        %v3377 = vpop.xlane.xlu0 %3376
        %v3378 = vrcp.pop %v3377
        %v3379 = vmul.f32 %v3374, %v3378
        %3380 = vrot.lane.b32.xlu0 %v3188, 80
        %v3381 = vpop.permute.xlu0 %3380
        %3382 = vrot.lane.b32.xlu0 %v3191, 80
        %v3383 = vpop.permute.xlu0 %3382
        %v3387 = vsel %vm2028, %v3379, 0
        %3389 = vmatpush.msra.mxu0 0.0
        %3390 = vmatpush.msra.mxu0 0.0
        %3391 = vmatpush.msra.mxu0 0.0
        %3392 = vmatpush.msra.mxu0 0.0
        %3393 = vmatpush.msra.mxu0 0.0
        %3394 = vmatpush.msra.mxu0 0.0
        %3395 = vmatpush.msra.mxu0 0.0
        %3396 = vmatpush.msra.mxu0 0.0
        %3397 = vmatpush.msra.mxu0 0.0
        %3398 = vmatpush.msra.mxu0 0.0
        %3399 = vmatpush.msra.mxu0 0.0
        %3400 = vmatpush.msra.mxu0 0.0
        %3401 = vmatpush.msra.mxu0 0.0
        %3402 = vmatpush.msra.mxu0 0.0
        %3403 = vmatpush.msra.mxu0 %v3383
        %3404 = vmatpush.msra.mxu0 %v3381
        %3405 = vmatmul.f32.gmra.mxu0 %v3387
        %v3406 = vpop.f32.mrf.mxu0
        %v3407 = vadd.f32 0.0, %v3406
        %3408 = vdwg.mxu0
        %3409 = vrot.lane.b32.xlu0 %v3165, 104
        %v3410 = vpop.permute.xlu0 %3409
        %3411 = vrot.lane.b32.xlu0 %v3188, 104
        %v3412 = vpop.permute.xlu0 %3411
        %3413 = vrot.lane.b32.xlu0 %v3191, 104
        %v3414 = vpop.permute.xlu0 %3413
        %v3415 = vsel %vm1664, %v3410, 0
        %v3417 = vsel %vm1664, %v3412, 0
        %v3419 = vsel %vm1664, %v3414, 0
        %3421 = vmatpush.xpose.msra.mxu0 0.0
        %3422 = vmatpush.xpose.msra.mxu0 0.0
        %3423 = vmatpush.xpose.msra.mxu0 0.0
        %3424 = vmatpush.xpose.msra.mxu0 0.0
        %3425 = vmatpush.xpose.msra.mxu0 0.0
        %3426 = vmatpush.xpose.msra.mxu0 0.0
        %3427 = vmatpush.xpose.msra.mxu0 0.0
        %3428 = vmatpush.xpose.msra.mxu0 0.0
        %3429 = vmatpush.xpose.msra.mxu0 0.0
        %3430 = vmatpush.xpose.msra.mxu0 0.0
        %3431 = vmatpush.xpose.msra.mxu0 0.0
        %3432 = vmatpush.xpose.msra.mxu0 0.0
        %3433 = vmatpush.xpose.msra.mxu0 0.0
        %3434 = vmatpush.xpose.msra.mxu0 0.0
        %3435 = vmatpush.xpose.msra.mxu0 %v3419
        %3436 = vmatpush.xpose.msra.mxu0 %v3417
        %3437 = vmatmul.f32.gmra.mxu0 %v3415
        %v3438 = vpop.f32.mrf.mxu0
        %v3439 = vadd.f32 0.0, %v3438
        %3440 = vdwg.mxu0
        %v3441 = vmul.f32 %v3439, 0.35355338
        %v3442 = vsel %vm2028, %v3441, -inf
        %3443 = vmax.xlane.f32.xlu0 %v3442
        %v3444 = vpop.xlane.xlu0 %3443
        %v3445 = vsub.f32 %v3441, %v3444
        %v3446 = vmul.f32 %v3445, 1.442695
        %v3447 = vpow.pop %v3446
        %v3448 = vsel %vm2028, %v3447, 0.0
        %3449 = vadd.xlane.f32.xlu0 %v3448
        %v3450 = vpop.xlane.xlu0 %3449
        %v3451 = vrcp.pop %v3450
        %v3452 = vmul.f32 %v3447, %v3451
        %3453 = vrot.lane.b32.xlu0 %v3188, 72
        %v3454 = vpop.permute.xlu0 %3453
        %3455 = vrot.lane.b32.xlu0 %v3191, 72
        %v3456 = vpop.permute.xlu0 %3455
        %v3460 = vsel %vm2028, %v3452, 0
        %3462 = vmatpush.msra.mxu0 0.0
        %3463 = vmatpush.msra.mxu0 0.0
        %3464 = vmatpush.msra.mxu0 0.0
        %3465 = vmatpush.msra.mxu0 0.0
        %3466 = vmatpush.msra.mxu0 0.0
        %3467 = vmatpush.msra.mxu0 0.0
        %3468 = vmatpush.msra.mxu0 0.0
        %3469 = vmatpush.msra.mxu0 0.0
        %3470 = vmatpush.msra.mxu0 0.0
        %3471 = vmatpush.msra.mxu0 0.0
        %3472 = vmatpush.msra.mxu0 0.0
        %3473 = vmatpush.msra.mxu0 0.0
        %3474 = vmatpush.msra.mxu0 0.0
        %3475 = vmatpush.msra.mxu0 0.0
        %3476 = vmatpush.msra.mxu0 %v3456
        %3477 = vmatpush.msra.mxu0 %v3454
        %3478 = vmatmul.f32.gmra.mxu0 %v3460
        %v3479 = vpop.f32.mrf.mxu0
        %v3480 = vadd.f32 0.0, %v3479
        %3481 = vdwg.mxu0
        %3483 = vrot.lane.b32.xlu0 %v3334, 8
        %v3484 = vpop.permute.xlu0 %3483
        %3487 = vrot.lane.b32.xlu0 %v3407, 16
        %v3488 = vpop.permute.xlu0 %3487
        %3491 = vrot.lane.b32.xlu0 %v3480, 24
        %v3492 = vpop.permute.xlu0 %3491
        %v3494 = vsel %vm1664, %v3261, %v3484
        %v3495 = vsel %vm2028, %v3494, %v3488
        %v3496 = vsel %vm2030, %v3495, %v3492
        %v3498 = vperm.slane %v3138, 0
        %v3501 = vsel %vm1637, %v3496, 0
        %3503 = vmatpush.msra.mxu0 0.0
        %3504 = vmatpush.msra.mxu0 0.0
        %3505 = vmatpush.msra.mxu0 0.0
        %3506 = vmatpush.msra.mxu0 0.0
        %3507 = vmatpush.msra.mxu0 0.0
        %3508 = vmatpush.msra.mxu0 0.0
        %3509 = vmatpush.msra.mxu0 0.0
        %3510 = vmatpush.msra.mxu0 0.0
        %3511 = vmatpush.msra.mxu0 0.0
        %3512 = vmatpush.msra.mxu0 0.0
        %3513 = vmatpush.msra.mxu0 0.0
        %3514 = vmatpush.msra.mxu0 0.0
        %3515 = vmatpush.msra.mxu0 %v3137
        %3516 = vmatpush.msra.mxu0 %v3136
        %3517 = vmatpush.msra.mxu0 %v3135
        %3518 = vmatpush.msra.mxu0 %v3134
        %3519 = vmatmul.f32.gmra.mxu0 %v3501
        %v3520 = vpop.f32.mrf.mxu0
        %v3521 = vadd.f32 %v3498, %v3520
        %3522 = vdwg.mxu0
        %v3523 = vadd.f32 %v3123, %v3521
        %v3524 = vsel %vm1637, %v3523, 0.0
        %3525 = vadd.xlane.f32.xlu0 %v3524
        %v3526 = vpop.xlane.xlu0 %3525
        %v3527 = vmul.f32 %v3526, %v2068
        %v3528 = vsub.f32 %v3523, %v3527
        %v3529 = vmul.f32 %v3528, %v3528
        %v3530 = vsel %vm1637, %v3529, 0.0
        %3531 = vadd.xlane.f32.xlu0 %v3530
        %v3532 = vpop.xlane.xlu0 %3531
        %v3533 = vmul.f32 %v3532, %v2068
        %v3534 = vadd.f32 %v3533, 1e-05
        %v3535 = vrsqrt.pop %v3534
        %v3536 = vmul.f32 %v3535, %v3534
        %v3537 = vmul.f32 %v3536, %v3535
        %v3538 = vmul.f32 0.5, %v3537
        %v3539 = vsub.f32 1.5, %v3538
        %v3540 = vmul.f32 %v3535, %v3539
        %vm3541 = vweird.f32 %v3534
        %vm3542 = vweird.f32 %v3535
        %vm3543 = vmor %vm3541, %vm3542
        %v3544 = vsel %vm3543, %v3535, %v3540
        %v3545 = vmul.f32 %v3528, %v3544
        %v3547 = vperm.slane %v3139, 0
        %v3549 = vmul.f32 %v3545, %v3547
        %v3551 = vperm.slane %v3140, 0
        %v3553 = vadd.f32 %v3549, %v3551
        %v3554 = vld [vmem:[#allocation12] sm:$0xff]
        %v3555 = vld [vmem:[#allocation12 + $0x8] sm:$0xff]
        %v3556 = vld [vmem:[#allocation12 + $0x10] sm:$0xff]
        %v3557 = vld [vmem:[#allocation12 + $0x18] sm:$0xff]
        %v3558 = vld [vmem:[%s79] sm:$0x1]
        %v3559 = vld [vmem:[#allocation13] sm:$0xff]
        %v3560 = vld [vmem:[#allocation13 + $0x8] sm:$0xff]
        %v3561 = vld [vmem:[#allocation13 + $0x10] sm:$0xff]
        %v3562 = vld [vmem:[#allocation13 + $0x18] sm:$0xff]
        %v3563 = vld [vmem:[%s83] sm:$0x1]
        %v3564 = vld [vmem:[%s85] sm:$0x1]
        %v3565 = vld [vmem:[%s87] sm:$0x1]
        %v3567 = vperm.slane %v3558, 0
        %v3570 = vsel %vm1637, %v3553, 0
        %3572 = vmatpush.msra.mxu0 0.0
        %3573 = vmatpush.msra.mxu0 0.0
        %3574 = vmatpush.msra.mxu0 0.0
        %3575 = vmatpush.msra.mxu0 0.0
        %3576 = vmatpush.msra.mxu0 0.0
        %3577 = vmatpush.msra.mxu0 0.0
        %3578 = vmatpush.msra.mxu0 0.0
        %3579 = vmatpush.msra.mxu0 0.0
        %3580 = vmatpush.msra.mxu0 0.0
        %3581 = vmatpush.msra.mxu0 0.0
        %3582 = vmatpush.msra.mxu0 0.0
        %3583 = vmatpush.msra.mxu0 0.0
        %3584 = vmatpush.msra.mxu0 %v3557
        %3585 = vmatpush.msra.mxu0 %v3556
        %3586 = vmatpush.msra.mxu0 %v3555
        %3587 = vmatpush.msra.mxu0 %v3554
        %3588 = vmatmul.f32.gmra.mxu0 %v3570
        %v3589 = vpop.f32.mrf.mxu0
        %v3590 = vadd.f32 %v3567, %v3589
        %3591 = vdwg.mxu0
        %v3592 = vmul.f32 %v3590, 0.5
        %v3593 = vmul.f32 %v3590, 0.70710677
        %vm3594 = vcmp.lt.f32.partialorder %v3593, 0.0
        %v3595 = vsel %vm3594, -1.0, 1.0
        %v3596 = vand.u32 2147483647, %v3593
        %v3597 = vmul.f32 %v3596, 0.3275911
        %v3598 = vadd.f32 %v3597, 1.0
        %v3599 = vrcp.pop %v3598
        %v3600 = vmul.f32 %v3598, %v3599
        %v3601 = vsub.f32 1.0, %v3600
        %v3602 = vmul.f32 %v3599, %v3601
        %v3603 = vadd.f32 %v3599, %v3602
        %vm3604 = vweird.f32 %v3598
        %vm3605 = vweird.f32 %v3599
        %vm3606 = vmor %vm3604, %vm3605
        %v3607 = vsel %vm3606, %v3599, %v3603
        %v3608 = vand.u32 2147483647, %v3598
        %vm3609 = vcmp.eq.f32.partialorder %v3608, 8.507059e+37
        %v3610 = vand.u32 %v3598, 2147483648
        %v3611 = vor.u32 1.1754944e-38, %v3610
        %v3612 = vsel %vm3609, %v3611, %v3607
        %v3613 = vmul.f32 1.0, %v3612
        %v3614 = vmul.f32 %v3613, 1.0614054
        %v3615 = vadd.f32 %v3614, -1.4531521
        %v3616 = vmul.f32 %v3615, %v3613
        %v3617 = vadd.f32 %v3616, 1.4214138
        %v3618 = vmul.f32 %v3617, %v3613
        %v3619 = vadd.f32 %v3618, -0.28449672
        %v3620 = vmul.f32 %v3619, %v3613
        %v3621 = vadd.f32 %v3620, 0.2548296
        %v3622 = vmul.f32 %v3621, %v3613
        %v3623 = vsub.f32 0.0, %v3596
        %v3624 = vmul.f32 %v3623, %v3596
        %v3625 = vmul.f32 %v3624, 1.442695
        %v3626 = vpow.pop %v3625
        %v3627 = vmul.f32 %v3622, %v3626
        %v3628 = vsub.f32 1.0, %v3627
        %v3629 = vmul.f32 %v3595, %v3628
        %v3630 = vadd.f32 %v3629, 1.0
        %v3631 = vmul.f32 %v3592, %v3630
        %v3633 = vperm.slane %v3563, 0
        %v3636 = vsel %vm1637, %v3631, 0
        %3638 = vmatpush.msra.mxu0 0.0
        %3639 = vmatpush.msra.mxu0 0.0
        %3640 = vmatpush.msra.mxu0 0.0
        %3641 = vmatpush.msra.mxu0 0.0
        %3642 = vmatpush.msra.mxu0 0.0
        %3643 = vmatpush.msra.mxu0 0.0
        %3644 = vmatpush.msra.mxu0 0.0
        %3645 = vmatpush.msra.mxu0 0.0
        %3646 = vmatpush.msra.mxu0 0.0
        %3647 = vmatpush.msra.mxu0 0.0
        %3648 = vmatpush.msra.mxu0 0.0
        %3649 = vmatpush.msra.mxu0 0.0
        %3650 = vmatpush.msra.mxu0 %v3562
        %3651 = vmatpush.msra.mxu0 %v3561
        %3652 = vmatpush.msra.mxu0 %v3560
        %3653 = vmatpush.msra.mxu0 %v3559
        %3654 = vmatmul.f32.gmra.mxu0 %v3636
        %v3655 = vpop.f32.mrf.mxu0
        %v3656 = vadd.f32 %v3633, %v3655
        %3657 = vdwg.mxu0
        %v3658 = vadd.f32 %v3553, %v3656
        %v3659 = vsel %vm1637, %v3658, 0.0
        %3660 = vadd.xlane.f32.xlu0 %v3659
        %v3661 = vpop.xlane.xlu0 %3660
        %v3662 = vmul.f32 %v3661, %v2068
        %v3663 = vsub.f32 %v3658, %v3662
        %v3664 = vmul.f32 %v3663, %v3663
        %v3665 = vsel %vm1637, %v3664, 0.0
        %3666 = vadd.xlane.f32.xlu0 %v3665
        %v3667 = vpop.xlane.xlu0 %3666
        %v3668 = vmul.f32 %v3667, %v2068
        %v3669 = vadd.f32 %v3668, 1e-05
        %v3670 = vrsqrt.pop %v3669
        %v3671 = vmul.f32 %v3670, %v3669
        %v3672 = vmul.f32 %v3671, %v3670
        %v3673 = vmul.f32 0.5, %v3672
        %v3674 = vsub.f32 1.5, %v3673
        %v3675 = vmul.f32 %v3670, %v3674
        %vm3676 = vweird.f32 %v3669
        %vm3677 = vweird.f32 %v3670
        %vm3678 = vmor %vm3676, %vm3677
        %v3679 = vsel %vm3678, %v3670, %v3675
        %v3680 = vmul.f32 %v3663, %v3679
        %v3682 = vperm.slane %v3564, 0
        %v3684 = vmul.f32 %v3680, %v3682
        %v3686 = vperm.slane %v3565, 0
        %v3688 = vadd.f32 %v3684, %v3686
        %v3689 = vld [vmem:[%s89] sm:$0x1]
        %v3690 = vld [vmem:[%s91] sm:$0x1]
        %v3691 = vld [vmem:[%s93] sm:$0xff]
        %v3692 = vld [vmem:[%s93 + $0x8] sm:$0xff]
        %v3693 = vld [vmem:[%s93 + $0x10] sm:$0xff]
        %v3694 = vld [vmem:[%s93 + $0x18] sm:$0xff]
        %v3695 = vld [vmem:[%s95] sm:$0x1]
        %v3696 = vsel %vm1637, %v3688, 0.0
        %3697 = vadd.xlane.f32.xlu0 %v3696
        %v3698 = vpop.xlane.xlu0 %3697
        %v3699 = vmul.f32 %v3698, %v2068
        %v3700 = vsub.f32 %v3688, %v3699
        %v3701 = vmul.f32 %v3700, %v3700
        %v3702 = vsel %vm1637, %v3701, 0.0
        %3703 = vadd.xlane.f32.xlu0 %v3702
        %v3704 = vpop.xlane.xlu0 %3703
        %v3705 = vmul.f32 %v3704, %v2068
        %v3706 = vadd.f32 %v3705, 1e-05
        %v3707 = vrsqrt.pop %v3706
        %v3708 = vmul.f32 %v3707, %v3706
        %v3709 = vmul.f32 %v3708, %v3707
        %v3710 = vmul.f32 0.5, %v3709
        %v3711 = vsub.f32 1.5, %v3710
        %v3712 = vmul.f32 %v3707, %v3711
        %vm3713 = vweird.f32 %v3706
        %vm3714 = vweird.f32 %v3707
        %vm3715 = vmor %vm3713, %vm3714
        %v3716 = vsel %vm3715, %v3707, %v3712
        %v3717 = vmul.f32 %v3700, %v3716
        %v3719 = vperm.slane %v3689, 0
        %v3721 = vmul.f32 %v3717, %v3719
        %v3723 = vperm.slane %v3690, 0
        %v3725 = vadd.f32 %v3721, %v3723
        %v3727 = vperm.slane %v3695, 0
        %v3730 = vsel %vm1637, %v3725, 0
        %3732 = vmatpush.msra.mxu0 0.0
        %3733 = vmatpush.msra.mxu0 0.0
        %3734 = vmatpush.msra.mxu0 0.0
        %3735 = vmatpush.msra.mxu0 0.0
        %3736 = vmatpush.msra.mxu0 0.0
        %3737 = vmatpush.msra.mxu0 0.0
        %3738 = vmatpush.msra.mxu0 0.0
        %3739 = vmatpush.msra.mxu0 0.0
        %3740 = vmatpush.msra.mxu0 0.0
        %3741 = vmatpush.msra.mxu0 0.0
        %3742 = vmatpush.msra.mxu0 0.0
        %3743 = vmatpush.msra.mxu0 0.0
        %3744 = vmatpush.msra.mxu0 %v3694
        %3745 = vmatpush.msra.mxu0 %v3693
        %3746 = vmatpush.msra.mxu0 %v3692
        %3747 = vmatpush.msra.mxu0 %v3691
        %3748 = vmatmul.f32.gmra.mxu0 %v3730
        %v3749 = vpop.f32.mrf.mxu0
        %v3750 = vadd.f32 %v3727, %v3749
        %3751 = vdwg.mxu0
        %vm3752 = vcmask 15360
        %3753 = vst.msk [vmem:[%s1582] sm:$0xff] %vm3752, %v3750
        %p3754 = scmp.lt.s32.totalorder %s113, 1
        %s3755 = scalar_select %p3754, %s113, 1
        %s3756 = smul.addr %s3755, 8
        %s3757 = scalar_lea.vmem %s97, %s3756
        // Predicated region
        $region245: #{informer_decoder_forward.1} parent=211 // pred_check
          %p3758 = pneg %p1149
        $region246: #{informer_decoder_forward.1} parent=211 // pred_check_branch
          %3760 = sbr.rel (%p3758) target = $region248
        $region247: #{informer_decoder_forward.1} parent=211 // pred_region
          _
        $region248: #{informer_decoder_forward.1} parent=211 // pred_fallthru
          _
      $region212: #{informer_decoder_forward.1} parent=5 // pred_fallthru
        _
      %p3761 = scmp.le.s32.totalorder 2, %s108
      // Predicated region
      $region249: #{informer_decoder_forward.1} parent=5 // pred_check
        %p3762 = pneg %p3761
      $region250: #{informer_decoder_forward.1} parent=5 // pred_check_branch
        %3764 = sbr.rel (%p3762) target = $region252
      $region251: #{informer_decoder_forward.1} parent=5 // pred_region
        %s3765 = ssub.s32 %s108, 2
        // Predicated region
        $region253: #{informer_decoder_forward.1} parent=251 // pred_check
          %p3766 = pneg %p1155
        $region254: #{informer_decoder_forward.1} parent=251 // pred_check_branch
          %3768 = sbr.rel (%p3766) target = $region256
        $region255: #{informer_decoder_forward.1} parent=251 // pred_region
          %p3769 = scmp.lt.s32.totalorder %s114, 1
          %s3770 = scalar_select %p3769, %s114, 1
          %s3771 = smul.addr %s3770, 8
          %s3772 = scalar_lea.vmem %s97, %s3771
        $region256: #{informer_decoder_forward.1} parent=251 // pred_fallthru
          _
      $region252: #{informer_decoder_forward.1} parent=5 // pred_fallthru
        _
    $region6: #{informer_decoder_forward.1} parent=1 // loop_footer
      %s112 = sadd.s32 1, %s108
    $region7: #{informer_decoder_forward.1} parent=1 // loop_footer_branch
      %107 = sbr.rel target = $region3
    $region8: #{informer_decoder_forward.1} parent=1 // loop_exit
      _
    %3773 = vsyncpa [#allocation3], 1
    %s3774 = scalar_lea.sflag [#allocation3], 1
    %3775 = vsyncpa %s3774, 1
    %3776 = vsyncpa [#allocation5], 1
    %3777 = vsyncpa [#allocation8], 1
    %3778 = vsyncpa [#allocation11], 1
    %3779 = vsyncpa [#allocation14], 1

</llo_original>
